<compile_context>
chip_gen: v6e
topology: v6e:2x2x1
jax: 0.10.0
libtpu: 0.0.40
codegen_flags: <defaults>
</compile_context>

<pallas_src>
import functools

import jax
import jax.numpy as jnp
from jax.experimental import pallas as pl
from jax.experimental.pallas import tpu as pltpu

LN_EPS = 1e-5


def _layer_norm_f32(x, gamma, beta):
    mu = jnp.mean(x, axis=-1, keepdims=True)
    var = jnp.mean(jnp.square(x - mu), axis=-1, keepdims=True)
    return (x - mu) * jax.lax.rsqrt(var + LN_EPS) * gamma + beta


def _mha(q, k, v, num_heads, mask=None):
    """Head-batched attention. q:(Tq,C), k/v:(S,C) f32 (q already scaled via
    folded weights). Head relayout + matmuls run in bf16 with f32 accumulation;
    softmax stays in f32. Returns (out (Tq,C) f32, probs (H,Tq,S) f32)."""
    Tq, C = q.shape
    S = k.shape[0]
    D = C // num_heads
    # Cast to bf16 BEFORE the head relayout: half the bytes through the XLU/copies.
    qh = jnp.transpose(q.astype(jnp.bfloat16).reshape(Tq, num_heads, D), (1, 0, 2))
    kh = jnp.transpose(k.astype(jnp.bfloat16).reshape(S, num_heads, D), (1, 0, 2))
    vh = jnp.transpose(v.astype(jnp.bfloat16).reshape(S, num_heads, D), (1, 0, 2))

    s = jnp.einsum('htd,hsd->hts', qh, kh, preferred_element_type=jnp.float32)
    if mask is not None:
        s = jnp.where(mask, s, jnp.float32(-1e30))
    s = s - jnp.max(s, axis=-1, keepdims=True)
    e = jnp.exp(s)
    p = e * pl.reciprocal(jnp.sum(e, axis=-1, keepdims=True), approx=True)

    o = jnp.einsum('hts,hsd->htd', p.astype(jnp.bfloat16), vh,
                   preferred_element_type=jnp.float32)
    return jnp.transpose(o, (1, 0, 2)).reshape(Tq, C), p


# --------------------------------------------------------------------------
# Fused decoder-layer kernel: self-attn -> +res -> LN, enc-attn -> +res -> LN,
# FFN -> +res -> LN.  Grid is (B, T_tiles); each step processes one q-row block
# of one batch element while x stays resident in VMEM for the whole layer.
# --------------------------------------------------------------------------
def _fused_decoder_layer_kernel(*refs, num_heads, t_block, t_total,
                                need_attn, causal):
    has_xfull = t_block != t_total
    i = 0
    x_ref = refs[i]; i += 1                      # (1, tq, C) q / residual rows
    xfull_ref = None
    if has_xfull:
        xfull_ref = refs[i]; i += 1              # (1, T, C) self-attn K/V rows
    enc_ref = refs[i]; i += 1                    # (1, S, C)
    (wqkv_s, bqkv_s, wo_s, bo_s, ln1g, ln1b,
     wq_e, bq_e, wkv_e, bkv_e, wo_e, bo_e, ln2g, ln2b,
     w1, b1, w2, b2, ln3g, ln3b) = refs[i:i + 20]
    i += 20
    out_ref = refs[i]; i += 1
    attn_ref = refs[i] if need_attn else None

    x = x_ref[0].astype(jnp.float32)             # (tq, C)
    enc16 = enc_ref[0].astype(jnp.bfloat16)      # (S, C)
    C = x.shape[-1]

    # ----- self-attention block (post-norm) -----
    # q scaling (head_dim**-0.5) is folded into wqkv/bqkv (see make_params).
    x16 = x.astype(jnp.bfloat16)
    if has_xfull:
        xa16 = xfull_ref[0].astype(jnp.bfloat16)
        q = jnp.dot(x16, wqkv_s[:, :C],
                    preferred_element_type=jnp.float32) + bqkv_s[0, :C]
        kv = jnp.dot(xa16, wqkv_s[:, C:],
                     preferred_element_type=jnp.float32) + bqkv_s[0, C:]
        k, v = kv[:, :C], kv[:, C:]
    else:
        qkv = jnp.dot(x16, wqkv_s[...],
                      preferred_element_type=jnp.float32) + bqkv_s[0]
        q, k, v = qkv[:, :C], qkv[:, C:2 * C], qkv[:, 2 * C:]

    mask = None
    if causal:
        t0 = pl.program_id(1) * t_block
        qi = t0 + jax.lax.broadcasted_iota(jnp.int32, (t_block, t_total), 0)
        ki = jax.lax.broadcasted_iota(jnp.int32, (t_block, t_total), 1)
        mask = (ki <= qi)[None]

    sa, _ = _mha(q, k, v, num_heads, mask=mask)
    sa = jnp.dot(sa.astype(jnp.bfloat16), wo_s[...],
                 preferred_element_type=jnp.float32) + bo_s[0]
    # dropout = identity in eval mode; residual add then post-LayerNorm
    x = _layer_norm_f32(sa + x, ln1g[0], ln1b[0])

    # ----- encoder-decoder attention block -----
    x16 = x.astype(jnp.bfloat16)
    qe = jnp.dot(x16, wq_e[...], preferred_element_type=jnp.float32) + bq_e[0]
    kve = jnp.dot(enc16, wkv_e[...],
                  preferred_element_type=jnp.float32) + bkv_e[0]
    ea, p_e = _mha(qe, kve[:, :C], kve[:, C:], num_heads)
    ea = jnp.dot(ea.astype(jnp.bfloat16), wo_e[...],
                 preferred_element_type=jnp.float32) + bo_e[0]
    x = _layer_norm_f32(ea + x, ln2g[0], ln2b[0])
    if need_attn:
        # head-averaged attention weights (fairseq need_head_weights=False)
        attn_ref[0] = jnp.mean(p_e, axis=0).astype(attn_ref.dtype)

    # ----- feed-forward block -----
    x16 = x.astype(jnp.bfloat16)
    h = jnp.dot(x16, w1[...], preferred_element_type=jnp.float32) + b1[0]
    h = jnp.maximum(h, 0.0)                      # relu
    y = jnp.dot(h.astype(jnp.bfloat16), w2[...],
                preferred_element_type=jnp.float32) + b2[0]
    out_ref[0] = _layer_norm_f32(y + x, ln3g[0], ln3b[0]).astype(out_ref.dtype)


# --------------------------------------------------------------------------
# Wrappers
# --------------------------------------------------------------------------
def _const_spec(shape):
    """Grid-invariant (weight) block: constant index_map => no re-DMA; Buffered(1)
    single-buffers it, halving its resident-VMEM footprint."""
    zeros = (0,) * len(shape)
    idx = lambda b, t, _z=zeros: _z
    try:
        return pl.BlockSpec(shape, idx, pipeline_mode=pl.Buffered(1))
    except Exception:  # older API without pipeline_mode: fall back to default
        return pl.BlockSpec(shape, idx)


def _pick_t_block(T, requested=None):
    if requested is not None and T % requested == 0 and (
            requested % 8 == 0 or requested == T):
        return requested
    if T <= 256:
        return T
    for cand in (256, 128, 64, 32, 16, 8):
        if T % cand == 0:
            return cand
    return T


def adv_transformer_decoder_layer_forward(x_btc, enc_bsc, params, num_heads, *,
                                          need_attn=True, causal=False,
                                          t_block=None):
    """Batch-major fused layer. x_btc: (B,T,C), enc_bsc: (B,S,C).
    Returns (x2 (B,T,C) x.dtype, attn (B,T,S) f32 or None)."""
    B, T, C = x_btc.shape
    S = enc_bsc.shape[1]
    assert C % num_heads == 0
    sa, ea, ff = params["self_attn"], params["encoder_attn"], params["ffn"]
    F = ff["w1"].shape[1]

    t_block = _pick_t_block(T, t_block)
    n_t = T // t_block

    weights = (sa["wqkv"], sa["bqkv"], sa["wo"], sa["bo"], sa["ln_g"], sa["ln_b"],
               ea["wq"], ea["bq"], ea["wkv"], ea["bkv"], ea["wo"], ea["bo"],
               ea["ln_g"], ea["ln_b"],
               ff["w1"], ff["b1"], ff["w2"], ff["b2"], ff["ln_g"], ff["ln_b"])

    inputs = [x_btc]
    in_specs = [pl.BlockSpec((1, t_block, C), lambda b, t: (b, t, 0))]
    if n_t > 1:
        # full-T view of x for the self-attention K/V rows (resident per batch el.)
        inputs.append(x_btc)
        in_specs.append(pl.BlockSpec((1, T, C), lambda b, t: (b, 0, 0)))
    inputs.append(enc_bsc)
    in_specs.append(pl.BlockSpec((1, S, C), lambda b, t: (b, 0, 0)))
    inputs.extend(weights)
    in_specs.extend(_const_spec(tuple(w.shape)) for w in weights)

    out_shape = [jax.ShapeDtypeStruct((B, T, C), x_btc.dtype)]
    out_specs = [pl.BlockSpec((1, t_block, C), lambda b, t: (b, t, 0))]
    if need_attn:
        # TODO(synk): for long (non-multiple-of-128) S, pad S for lane-dense stores
        # or set need_attn=False; this f32 slab is pure extra HBM write traffic.
        out_shape.append(jax.ShapeDtypeStruct((B, T, S), jnp.float32))
        out_specs.append(pl.BlockSpec((1, t_block, S), lambda b, t: (b, t, 0)))

    # --- advisory cost estimate for XLA scheduling ---
    w_bytes = sum(int(w.size) * w.dtype.itemsize for w in weights)
    flops = B * (
        2 * T * C * (3 * C)          # fused QKV projection (self)
        + 4 * T * T * C              # self-attn scores + PV
        + 2 * T * C * C              # self-attn output proj
        + 2 * T * C * C              # enc-attn Q proj
        + 2 * S * C * (2 * C) * n_t  # enc-attn fused KV proj (per T tile)
        + 4 * T * S * C              # enc-attn scores + PV
        + 2 * T * C * C              # enc-attn output proj
        + 4 * T * C * F)             # fc1 + fc2
    bytes_accessed = (w_bytes
                      + x_btc.dtype.itemsize * B * T * C * (2 if n_t > 1 else 1)
                      + enc_bsc.dtype.itemsize * B * S * C
                      + x_btc.dtype.itemsize * B * T * C
                      + (4 * B * T * S if need_attn else 0))
    cost = pl.CostEstimate(flops=int(flops),
                           transcendentals=int(B * num_heads * T * (T + S)),
                           bytes_accessed=int(bytes_accessed))

    # --- VMEM budgeting: single-buffered weights + per-generation clamp ---
    in_step = (x_btc.dtype.itemsize * t_block * C
               + (x_btc.dtype.itemsize * T * C if n_t > 1 else 0)
               + enc_bsc.dtype.itemsize * S * C)
    out_step = (x_btc.dtype.itemsize * t_block * C
                + (4 * t_block * S if need_attn else 0))
    temp_bytes = 4 * (8 * t_block * C + 3 * T * C + 3 * S * C
                      + num_heads * t_block * (T + S) + 2 * t_block * F)
    vmem_est = w_bytes + 2 * (in_step + out_step) + temp_bytes
    try:
        vmem_cap = int(pltpu.get_tpu_info().vmem_capacity_bytes)
    except Exception:
        vmem_cap = 64 * 2 ** 20          # conservative (v7x per-TensorCore VMEM)
    cp_kwargs = dict(dimension_semantics=("parallel", "parallel"))
    if vmem_est > 16 * 2 ** 20:
        cp_kwargs["vmem_limit_bytes"] = int(min(vmem_est * 3 // 2,
                                                vmem_cap - 8 * 2 ** 20))

    kernel = functools.partial(_fused_decoder_layer_kernel,
                               num_heads=num_heads, t_block=t_block, t_total=T,
                               need_attn=need_attn, causal=causal)
    res = pl.pallas_call(
        kernel,
        out_shape=tuple(out_shape),
        grid=(B, n_t),
        in_specs=in_specs,
        out_specs=tuple(out_specs),
        compiler_params=pltpu.CompilerParams(**cp_kwargs),
        cost_estimate=cost,
    )(*inputs)

    if need_attn:
        out, attn = res
        return out, attn
    out = res[0] if isinstance(res, (list, tuple)) else res
    return out, None


def adv_transformer_decoder_layer_forward_tbc(x_tbc, enc_sbc, params, num_heads,
                                              **kw):
    """fairseq-layout compatibility wrapper: (T,B,C)/(S,B,C) in, (T,B,C) out.
    Prefer the batch-major entry point — these transposes are extra HBM passes."""
    x, attn = adv_transformer_decoder_layer_forward(
        jnp.transpose(x_tbc, (1, 0, 2)), jnp.transpose(enc_sbc, (1, 0, 2)),
        params, num_heads, **kw)
    return jnp.transpose(x, (1, 0, 2)), attn


# --------------------------------------------------------------------------
# Deterministic parameter construction (xavier-uniform-style, synthetic).
# Matmul weights are stored pre-transposed as (in, out) and in bf16; QKV (and
# enc-dec KV) weights are pre-concatenated for fused projections, and the
# head_dim**-0.5 q scaling is folded into the q slice (exact: fairseq scales
# after the bias, so scaling both W and b is identical).
# --------------------------------------------------------------------------
def _xavier(key, fan_in, fan_out):
    lim = (6.0 / (fan_in + fan_out)) ** 0.5
    return jax.random.uniform(key, (fan_in, fan_out), jnp.float32, -lim, lim)


def make_params(key, embed_dim, ffn_dim, num_heads):
    C, F = embed_dim, ffn_dim
    scale = float(C // num_heads) ** -0.5
    ks = jax.random.split(key, 10)
    bf16 = lambda w: w.astype(jnp.bfloat16)

    wq, wk, wv, wo_s = (_xavier(k, C, C) for k in ks[0:4])
    self_attn = dict(
        wqkv=bf16(jnp.concatenate([wq * scale, wk, wv], axis=1)),   # (C, 3C)
        bqkv=jnp.zeros((1, 3 * C), jnp.float32),                    # q-slice pre-scaled (zero)
        wo=bf16(wo_s), bo=jnp.zeros((1, C), jnp.float32),
        ln_g=jnp.ones((1, C), jnp.float32), ln_b=jnp.zeros((1, C), jnp.float32))

    wq_e, wk_e, wv_e, wo_e = (_xavier(k, C, C) for k in ks[4:8])
    encoder_attn = dict(
        wq=bf16(wq_e * scale), bq=jnp.zeros((1, C), jnp.float32),
        wkv=bf16(jnp.concatenate([wk_e, wv_e], axis=1)),            # (C, 2C)
        bkv=jnp.zeros((1, 2 * C), jnp.float32),
        wo=bf16(wo_e), bo=jnp.zeros((1, C), jnp.float32),
        ln_g=jnp.ones((1, C), jnp.float32), ln_b=jnp.zeros((1, C), jnp.float32))

    ffn = dict(
        w1=bf16(_xavier(ks[8], C, F)), b1=jnp.zeros((1, F), jnp.float32),
        w2=bf16(_xavier(ks[9], F, C)), b2=jnp.zeros((1, C), jnp.float32),
        ln_g=jnp.ones((1, C), jnp.float32), ln_b=jnp.zeros((1, C), jnp.float32))

    return dict(self_attn=self_attn, encoder_attn=encoder_attn, ffn=ffn)


if __name__ == "__main__":
    # Small but lane-dense shapes: batch B=2, tgt T=16, src S=16,
    # embed C=128 (multiple of 128), heads H=4 (head dim 32), FFN=256.
    B, T, S, C, H, FFN = 2, 16, 16, 128, 4, 256

    key = jax.random.PRNGKey(0)
    kx, kenc, kp = jax.random.split(key, 3)
    # bf16 activations at the HBM boundary (halves per-step DMA).
    x = jax.random.normal(kx, (B, T, C), jnp.float32).astype(jnp.bfloat16)
    enc = jax.random.normal(kenc, (B, S, C), jnp.float32).astype(jnp.bfloat16)
    params = make_params(kp, C, FFN, H)

    fwd = jax.jit(functools.partial(adv_transformer_decoder_layer_forward,
                                    num_heads=H))
    x2, attn = fwd(x, enc, params)
    jax.block_until_ready((x2, attn))

    assert x2.shape == (B, T, C) and x2.dtype == x.dtype
    assert attn.shape == (B, T, S) and attn.dtype == jnp.float32
    # sanity: attention rows sum to ~1 (approx reciprocal in softmax)
    assert bool(jnp.all(jnp.abs(jnp.sum(attn, axis=-1) - 1.0) < 1e-2))
    # sanity: finite outputs
    assert bool(jnp.all(jnp.isfinite(x2.astype(jnp.float32))))
    print("KERNEL_OK")
</pallas_src>

<mosaic_0001>
module attributes {stable_mosaic.version = 11 : i64} {
  func.func @_fused_decoder_layer_kernel(%arg0: i32, %arg1: i32, %arg2: memref<1x16x128xbf16, #tpu.memory_space<vmem>>, %arg3: memref<1x16x128xbf16, #tpu.memory_space<vmem>>, %arg4: memref<128x384xbf16, #tpu.memory_space<vmem>>, %arg5: memref<1x384xf32, #tpu.memory_space<vmem>>, %arg6: memref<128x128xbf16, #tpu.memory_space<vmem>>, %arg7: memref<1x128xf32, #tpu.memory_space<vmem>>, %arg8: memref<1x128xf32, #tpu.memory_space<vmem>>, %arg9: memref<1x128xf32, #tpu.memory_space<vmem>>, %arg10: memref<128x128xbf16, #tpu.memory_space<vmem>>, %arg11: memref<1x128xf32, #tpu.memory_space<vmem>>, %arg12: memref<128x256xbf16, #tpu.memory_space<vmem>>, %arg13: memref<1x256xf32, #tpu.memory_space<vmem>>, %arg14: memref<128x128xbf16, #tpu.memory_space<vmem>>, %arg15: memref<1x128xf32, #tpu.memory_space<vmem>>, %arg16: memref<1x128xf32, #tpu.memory_space<vmem>>, %arg17: memref<1x128xf32, #tpu.memory_space<vmem>>, %arg18: memref<128x256xbf16, #tpu.memory_space<vmem>>, %arg19: memref<1x256xf32, #tpu.memory_space<vmem>>, %arg20: memref<256x128xbf16, #tpu.memory_space<vmem>>, %arg21: memref<1x128xf32, #tpu.memory_space<vmem>>, %arg22: memref<1x128xf32, #tpu.memory_space<vmem>>, %arg23: memref<1x128xf32, #tpu.memory_space<vmem>>, %arg24: memref<1x16x128xbf16, #tpu.memory_space<vmem>>, %arg25: memref<1x16x16xf32, #tpu.memory_space<vmem>>) attributes {dimension_semantics = [#tpu.dimension_semantics<parallel>, #tpu.dimension_semantics<parallel>], iteration_bounds = array<i64: 2, 1>, scalar_prefetch = 0 : i64, scratch_operands = 0 : i64, tpu.core_type = #tpu.core_type<tc>, window_params = [{transform_indices = @transform_0, window_bounds = array<i64: 1, 16, 128>}, {transform_indices = @transform_1, window_bounds = array<i64: 1, 16, 128>}, {pipeline_mode = #tpu.pipeline_mode<synchronous>, transform_indices = @transform_2, window_bounds = array<i64: 128, 384>}, {pipeline_mode = #tpu.pipeline_mode<synchronous>, transform_indices = @transform_3, window_bounds = array<i64: 1, 384>}, {pipeline_mode = #tpu.pipeline_mode<synchronous>, transform_indices = @transform_4, window_bounds = array<i64: 128, 128>}, {pipeline_mode = #tpu.pipeline_mode<synchronous>, transform_indices = @transform_5, window_bounds = array<i64: 1, 128>}, {pipeline_mode = #tpu.pipeline_mode<synchronous>, transform_indices = @transform_6, window_bounds = array<i64: 1, 128>}, {pipeline_mode = #tpu.pipeline_mode<synchronous>, transform_indices = @transform_7, window_bounds = array<i64: 1, 128>}, {pipeline_mode = #tpu.pipeline_mode<synchronous>, transform_indices = @transform_8, window_bounds = array<i64: 128, 128>}, {pipeline_mode = #tpu.pipeline_mode<synchronous>, transform_indices = @transform_9, window_bounds = array<i64: 1, 128>}, {pipeline_mode = #tpu.pipeline_mode<synchronous>, transform_indices = @transform_10, window_bounds = array<i64: 128, 256>}, {pipeline_mode = #tpu.pipeline_mode<synchronous>, transform_indices = @transform_11, window_bounds = array<i64: 1, 256>}, {pipeline_mode = #tpu.pipeline_mode<synchronous>, transform_indices = @transform_12, window_bounds = array<i64: 128, 128>}, {pipeline_mode = #tpu.pipeline_mode<synchronous>, transform_indices = @transform_13, window_bounds = array<i64: 1, 128>}, {pipeline_mode = #tpu.pipeline_mode<synchronous>, transform_indices = @transform_14, window_bounds = array<i64: 1, 128>}, {pipeline_mode = #tpu.pipeline_mode<synchronous>, transform_indices = @transform_15, window_bounds = array<i64: 1, 128>}, {pipeline_mode = #tpu.pipeline_mode<synchronous>, transform_indices = @transform_16, window_bounds = array<i64: 128, 256>}, {pipeline_mode = #tpu.pipeline_mode<synchronous>, transform_indices = @transform_17, window_bounds = array<i64: 1, 256>}, {pipeline_mode = #tpu.pipeline_mode<synchronous>, transform_indices = @transform_18, window_bounds = array<i64: 256, 128>}, {pipeline_mode = #tpu.pipeline_mode<synchronous>, transform_indices = @transform_19, window_bounds = array<i64: 1, 128>}, {pipeline_mode = #tpu.pipeline_mode<synchronous>, transform_indices = @transform_20, window_bounds = array<i64: 1, 128>}, {pipeline_mode = #tpu.pipeline_mode<synchronous>, transform_indices = @transform_21, window_bounds = array<i64: 1, 128>}, {transform_indices = @transform_22, window_bounds = array<i64: 1, 16, 128>}, {transform_indices = @transform_23, window_bounds = array<i64: 1, 16, 16>}]} {
    %c0 = arith.constant 0 : index
    %c0_0 = arith.constant 0 : index
    %c0_1 = arith.constant 0 : index
    %0 = vector.load %arg2[%c0, %c0_0, %c0_1] : memref<1x16x128xbf16, #tpu.memory_space<vmem>>, vector<1x16x128xbf16>
    %1 = vector.shape_cast %0 : vector<1x16x128xbf16> to vector<16x128xbf16>
    %2 = arith.extf %1 : vector<16x128xbf16> to vector<16x128xf32>
    %c0_2 = arith.constant 0 : index
    %c0_3 = arith.constant 0 : index
    %c0_4 = arith.constant 0 : index
    %3 = vector.load %arg3[%c0_2, %c0_3, %c0_4] : memref<1x16x128xbf16, #tpu.memory_space<vmem>>, vector<1x16x128xbf16>
    %4 = vector.shape_cast %3 : vector<1x16x128xbf16> to vector<16x128xbf16>
    %5 = arith.truncf %2 : vector<16x128xf32> to vector<16x128xbf16>
    %c0_5 = arith.constant 0 : index
    %c0_6 = arith.constant 0 : index
    %6 = vector.load %arg4[%c0_5, %c0_6] : memref<128x384xbf16, #tpu.memory_space<vmem>>, vector<128x384xbf16>
    %cst = arith.constant dense<0.000000e+00> : vector<16x384xf32>
    %7 = tpu.matmul %5, %6, %cst {dimension_numbers = #tpu.dot_dimension_numbers<[1], [0], [0], [1], [0, 0, 1, 1], [], []>} : vector<16x128xbf16>, vector<128x384xbf16>, vector<16x384xf32> -> vector<16x384xf32>
    %c0_7 = arith.constant 0 : index
    %c0_8 = arith.constant 0 : index
    %8 = vector.load %arg5[%c0_7, %c0_8] : memref<1x384xf32, #tpu.memory_space<vmem>>, vector<1x384xf32>
    %9 = vector.shape_cast %8 : vector<1x384xf32> to vector<384xf32>
    %10 = vector.shape_cast %9 : vector<384xf32> to vector<1x384xf32>
    %11 = vector.broadcast %10 : vector<1x384xf32> to vector<16x384xf32>
    %12 = arith.addf %7, %11 : vector<16x384xf32>
    %13 = vector.extract_strided_slice %12 {offsets = [0, 0], sizes = [16, 128], strides = [1, 1]} : vector<16x384xf32> to vector<16x128xf32>
    %14 = vector.extract_strided_slice %12 {offsets = [0, 128], sizes = [16, 128], strides = [1, 1]} : vector<16x384xf32> to vector<16x128xf32>
    %15 = vector.extract_strided_slice %12 {offsets = [0, 256], sizes = [16, 128], strides = [1, 1]} : vector<16x384xf32> to vector<16x128xf32>
    %16 = arith.truncf %13 : vector<16x128xf32> to vector<16x128xbf16>
    %17 = vector.shape_cast %16 : vector<16x128xbf16> to vector<16x4x32xbf16>
    %18 = tpu.transpose %17, [1, 0, 2] : vector<16x4x32xbf16> -> vector<4x16x32xbf16>
    %19 = arith.truncf %14 : vector<16x128xf32> to vector<16x128xbf16>
    %20 = vector.shape_cast %19 : vector<16x128xbf16> to vector<16x4x32xbf16>
    %21 = tpu.transpose %20, [1, 0, 2] : vector<16x4x32xbf16> -> vector<4x16x32xbf16>
    %22 = arith.truncf %15 : vector<16x128xf32> to vector<16x128xbf16>
    %23 = vector.shape_cast %22 : vector<16x128xbf16> to vector<16x4x32xbf16>
    %24 = tpu.transpose %23, [1, 0, 2] : vector<16x4x32xbf16> -> vector<4x16x32xbf16>
    "tpu.trace_start"() <{level = 10 : i32, message = "htd,hsd->hts"}> : () -> ()
    %cst_9 = arith.constant dense<0.000000e+00> : vector<4x16x16xf32>
    %25 = tpu.matmul %18, %21, %cst_9 {dimension_numbers = #tpu.dot_dimension_numbers<[2], [2], [1], [1], [0, 0, 0, 1, 1, 1], [0], [0]>} : vector<4x16x32xbf16>, vector<4x16x32xbf16>, vector<4x16x16xf32> -> vector<4x16x16xf32>
    "tpu.trace_stop"() : () -> ()
    %cst_10 = arith.constant dense<0xFF800000> : vector<4x16xf32>
    %26 = vector.multi_reduction <maximumf>, %25, %cst_10 [2] : vector<4x16x16xf32> to vector<4x16xf32>
    %27 = vector.shape_cast %26 : vector<4x16xf32> to vector<4x16x1xf32>
    %28 = vector.broadcast %27 : vector<4x16x1xf32> to vector<4x16x16xf32>
    %29 = arith.subf %25, %28 : vector<4x16x16xf32>
    %30 = math.exp %29 : vector<4x16x16xf32>
    %cst_11 = arith.constant dense<0.000000e+00> : vector<4x16xf32>
    %31 = vector.multi_reduction <add>, %30, %cst_11 [2] : vector<4x16x16xf32> to vector<4x16xf32>
    %32 = vector.shape_cast %31 : vector<4x16xf32> to vector<4x16x1xf32>
    %33 = tpu.reciprocal %32 {approx = true} : vector<4x16x1xf32> -> vector<4x16x1xf32>
    %34 = vector.broadcast %33 : vector<4x16x1xf32> to vector<4x16x16xf32>
    %35 = arith.mulf %30, %34 : vector<4x16x16xf32>
    %36 = arith.truncf %35 : vector<4x16x16xf32> to vector<4x16x16xbf16>
    "tpu.trace_start"() <{level = 10 : i32, message = "hts,hsd->htd"}> : () -> ()
    %cst_12 = arith.constant dense<0.000000e+00> : vector<4x16x32xf32>
    %37 = tpu.matmul %36, %24, %cst_12 {dimension_numbers = #tpu.dot_dimension_numbers<[2], [1], [1], [2], [0, 0, 0, 1, 1, 2], [0], [0]>} : vector<4x16x16xbf16>, vector<4x16x32xbf16>, vector<4x16x32xf32> -> vector<4x16x32xf32>
    "tpu.trace_stop"() : () -> ()
    %38 = tpu.transpose %37, [1, 0, 2] : vector<4x16x32xf32> -> vector<16x4x32xf32>
    %39 = vector.shape_cast %38 : vector<16x4x32xf32> to vector<16x128xf32>
    %40 = arith.truncf %39 : vector<16x128xf32> to vector<16x128xbf16>
    %c0_13 = arith.constant 0 : index
    %c0_14 = arith.constant 0 : index
    %41 = vector.load %arg6[%c0_13, %c0_14] : memref<128x128xbf16, #tpu.memory_space<vmem>>, vector<128x128xbf16>
    %cst_15 = arith.constant dense<0.000000e+00> : vector<16x128xf32>
    %42 = tpu.matmul %40, %41, %cst_15 {dimension_numbers = #tpu.dot_dimension_numbers<[1], [0], [0], [1], [0, 0, 1, 1], [], []>} : vector<16x128xbf16>, vector<128x128xbf16>, vector<16x128xf32> -> vector<16x128xf32>
    %c0_16 = arith.constant 0 : index
    %c0_17 = arith.constant 0 : index
    %43 = vector.load %arg7[%c0_16, %c0_17] : memref<1x128xf32, #tpu.memory_space<vmem>>, vector<1x128xf32>
    %44 = vector.shape_cast %43 : vector<1x128xf32> to vector<128xf32>
    %45 = vector.shape_cast %44 : vector<128xf32> to vector<1x128xf32>
    %46 = vector.broadcast %45 : vector<1x128xf32> to vector<16x128xf32>
    %47 = arith.addf %42, %46 : vector<16x128xf32>
    %48 = arith.addf %47, %2 : vector<16x128xf32>
    %c0_18 = arith.constant 0 : index
    %c0_19 = arith.constant 0 : index
    %49 = vector.load %arg8[%c0_18, %c0_19] : memref<1x128xf32, #tpu.memory_space<vmem>>, vector<1x128xf32>
    %50 = vector.shape_cast %49 : vector<1x128xf32> to vector<128xf32>
    %c0_20 = arith.constant 0 : index
    %c0_21 = arith.constant 0 : index
    %51 = vector.load %arg9[%c0_20, %c0_21] : memref<1x128xf32, #tpu.memory_space<vmem>>, vector<1x128xf32>
    %52 = vector.shape_cast %51 : vector<1x128xf32> to vector<128xf32>
    %cst_22 = arith.constant dense<0.000000e+00> : vector<16xf32>
    %53 = vector.multi_reduction <add>, %48, %cst_22 [1] : vector<16x128xf32> to vector<16xf32>
    %54 = vector.shape_cast %53 : vector<16xf32> to vector<16x1xf32>
    %cst_23 = arith.constant 1.280000e+02 : f32
    %55 = vector.broadcast %cst_23 : f32 to vector<16x1xf32>
    %56 = arith.divf %54, %55 : vector<16x1xf32>
    %57 = vector.broadcast %56 : vector<16x1xf32> to vector<16x128xf32>
    %58 = arith.subf %48, %57 : vector<16x128xf32>
    %59 = arith.mulf %58, %58 : vector<16x128xf32>
    %cst_24 = arith.constant dense<0.000000e+00> : vector<16xf32>
    %60 = vector.multi_reduction <add>, %59, %cst_24 [1] : vector<16x128xf32> to vector<16xf32>
    %61 = vector.shape_cast %60 : vector<16xf32> to vector<16x1xf32>
    %cst_25 = arith.constant 1.280000e+02 : f32
    %62 = vector.broadcast %cst_25 : f32 to vector<16x1xf32>
    %63 = arith.divf %61, %62 : vector<16x1xf32>
    %64 = vector.broadcast %56 : vector<16x1xf32> to vector<16x128xf32>
    %65 = arith.subf %48, %64 : vector<16x128xf32>
    %cst_26 = arith.constant 9.99999974E-6 : f32
    %66 = vector.broadcast %cst_26 : f32 to vector<16x1xf32>
    %67 = arith.addf %63, %66 : vector<16x1xf32>
    %68 = math.rsqrt %67 : vector<16x1xf32>
    %69 = vector.broadcast %68 : vector<16x1xf32> to vector<16x128xf32>
    %70 = arith.mulf %65, %69 : vector<16x128xf32>
    %71 = vector.shape_cast %50 : vector<128xf32> to vector<1x128xf32>
    %72 = vector.broadcast %71 : vector<1x128xf32> to vector<16x128xf32>
    %73 = arith.mulf %70, %72 : vector<16x128xf32>
    %74 = vector.shape_cast %52 : vector<128xf32> to vector<1x128xf32>
    %75 = vector.broadcast %74 : vector<1x128xf32> to vector<16x128xf32>
    %76 = arith.addf %73, %75 : vector<16x128xf32>
    %77 = arith.truncf %76 : vector<16x128xf32> to vector<16x128xbf16>
    %c0_27 = arith.constant 0 : index
    %c0_28 = arith.constant 0 : index
    %78 = vector.load %arg10[%c0_27, %c0_28] : memref<128x128xbf16, #tpu.memory_space<vmem>>, vector<128x128xbf16>
    %cst_29 = arith.constant dense<0.000000e+00> : vector<16x128xf32>
    %79 = tpu.matmul %77, %78, %cst_29 {dimension_numbers = #tpu.dot_dimension_numbers<[1], [0], [0], [1], [0, 0, 1, 1], [], []>} : vector<16x128xbf16>, vector<128x128xbf16>, vector<16x128xf32> -> vector<16x128xf32>
    %c0_30 = arith.constant 0 : index
    %c0_31 = arith.constant 0 : index
    %80 = vector.load %arg11[%c0_30, %c0_31] : memref<1x128xf32, #tpu.memory_space<vmem>>, vector<1x128xf32>
    %81 = vector.shape_cast %80 : vector<1x128xf32> to vector<128xf32>
    %82 = vector.shape_cast %81 : vector<128xf32> to vector<1x128xf32>
    %83 = vector.broadcast %82 : vector<1x128xf32> to vector<16x128xf32>
    %84 = arith.addf %79, %83 : vector<16x128xf32>
    %c0_32 = arith.constant 0 : index
    %c0_33 = arith.constant 0 : index
    %85 = vector.load %arg12[%c0_32, %c0_33] : memref<128x256xbf16, #tpu.memory_space<vmem>>, vector<128x256xbf16>
    %cst_34 = arith.constant dense<0.000000e+00> : vector<16x256xf32>
    %86 = tpu.matmul %4, %85, %cst_34 {dimension_numbers = #tpu.dot_dimension_numbers<[1], [0], [0], [1], [0, 0, 1, 1], [], []>} : vector<16x128xbf16>, vector<128x256xbf16>, vector<16x256xf32> -> vector<16x256xf32>
    %c0_35 = arith.constant 0 : index
    %c0_36 = arith.constant 0 : index
    %87 = vector.load %arg13[%c0_35, %c0_36] : memref<1x256xf32, #tpu.memory_space<vmem>>, vector<1x256xf32>
    %88 = vector.shape_cast %87 : vector<1x256xf32> to vector<256xf32>
    %89 = vector.shape_cast %88 : vector<256xf32> to vector<1x256xf32>
    %90 = vector.broadcast %89 : vector<1x256xf32> to vector<16x256xf32>
    %91 = arith.addf %86, %90 : vector<16x256xf32>
    %92 = vector.extract_strided_slice %91 {offsets = [0, 0], sizes = [16, 128], strides = [1, 1]} : vector<16x256xf32> to vector<16x128xf32>
    %93 = vector.extract_strided_slice %91 {offsets = [0, 128], sizes = [16, 128], strides = [1, 1]} : vector<16x256xf32> to vector<16x128xf32>
    %94 = arith.truncf %84 : vector<16x128xf32> to vector<16x128xbf16>
    %95 = vector.shape_cast %94 : vector<16x128xbf16> to vector<16x4x32xbf16>
    %96 = tpu.transpose %95, [1, 0, 2] : vector<16x4x32xbf16> -> vector<4x16x32xbf16>
    %97 = arith.truncf %92 : vector<16x128xf32> to vector<16x128xbf16>
    %98 = vector.shape_cast %97 : vector<16x128xbf16> to vector<16x4x32xbf16>
    %99 = tpu.transpose %98, [1, 0, 2] : vector<16x4x32xbf16> -> vector<4x16x32xbf16>
    %100 = arith.truncf %93 : vector<16x128xf32> to vector<16x128xbf16>
    %101 = vector.shape_cast %100 : vector<16x128xbf16> to vector<16x4x32xbf16>
    %102 = tpu.transpose %101, [1, 0, 2] : vector<16x4x32xbf16> -> vector<4x16x32xbf16>
    "tpu.trace_start"() <{level = 10 : i32, message = "htd,hsd->hts"}> : () -> ()
    %cst_37 = arith.constant dense<0.000000e+00> : vector<4x16x16xf32>
    %103 = tpu.matmul %96, %99, %cst_37 {dimension_numbers = #tpu.dot_dimension_numbers<[2], [2], [1], [1], [0, 0, 0, 1, 1, 1], [0], [0]>} : vector<4x16x32xbf16>, vector<4x16x32xbf16>, vector<4x16x16xf32> -> vector<4x16x16xf32>
    "tpu.trace_stop"() : () -> ()
    %cst_38 = arith.constant dense<0xFF800000> : vector<4x16xf32>
    %104 = vector.multi_reduction <maximumf>, %103, %cst_38 [2] : vector<4x16x16xf32> to vector<4x16xf32>
    %105 = vector.shape_cast %104 : vector<4x16xf32> to vector<4x16x1xf32>
    %106 = vector.broadcast %105 : vector<4x16x1xf32> to vector<4x16x16xf32>
    %107 = arith.subf %103, %106 : vector<4x16x16xf32>
    %108 = math.exp %107 : vector<4x16x16xf32>
    %cst_39 = arith.constant dense<0.000000e+00> : vector<4x16xf32>
    %109 = vector.multi_reduction <add>, %108, %cst_39 [2] : vector<4x16x16xf32> to vector<4x16xf32>
    %110 = vector.shape_cast %109 : vector<4x16xf32> to vector<4x16x1xf32>
    %111 = tpu.reciprocal %110 {approx = true} : vector<4x16x1xf32> -> vector<4x16x1xf32>
    %112 = vector.broadcast %111 : vector<4x16x1xf32> to vector<4x16x16xf32>
    %113 = arith.mulf %108, %112 : vector<4x16x16xf32>
    %114 = arith.truncf %113 : vector<4x16x16xf32> to vector<4x16x16xbf16>
    "tpu.trace_start"() <{level = 10 : i32, message = "hts,hsd->htd"}> : () -> ()
    %cst_40 = arith.constant dense<0.000000e+00> : vector<4x16x32xf32>
    %115 = tpu.matmul %114, %102, %cst_40 {dimension_numbers = #tpu.dot_dimension_numbers<[2], [1], [1], [2], [0, 0, 0, 1, 1, 2], [0], [0]>} : vector<4x16x16xbf16>, vector<4x16x32xbf16>, vector<4x16x32xf32> -> vector<4x16x32xf32>
    "tpu.trace_stop"() : () -> ()
    %116 = tpu.transpose %115, [1, 0, 2] : vector<4x16x32xf32> -> vector<16x4x32xf32>
    %117 = vector.shape_cast %116 : vector<16x4x32xf32> to vector<16x128xf32>
    %118 = arith.truncf %117 : vector<16x128xf32> to vector<16x128xbf16>
    %c0_41 = arith.constant 0 : index
    %c0_42 = arith.constant 0 : index
    %119 = vector.load %arg14[%c0_41, %c0_42] : memref<128x128xbf16, #tpu.memory_space<vmem>>, vector<128x128xbf16>
    %cst_43 = arith.constant dense<0.000000e+00> : vector<16x128xf32>
    %120 = tpu.matmul %118, %119, %cst_43 {dimension_numbers = #tpu.dot_dimension_numbers<[1], [0], [0], [1], [0, 0, 1, 1], [], []>} : vector<16x128xbf16>, vector<128x128xbf16>, vector<16x128xf32> -> vector<16x128xf32>
    %c0_44 = arith.constant 0 : index
    %c0_45 = arith.constant 0 : index
    %121 = vector.load %arg15[%c0_44, %c0_45] : memref<1x128xf32, #tpu.memory_space<vmem>>, vector<1x128xf32>
    %122 = vector.shape_cast %121 : vector<1x128xf32> to vector<128xf32>
    %123 = vector.shape_cast %122 : vector<128xf32> to vector<1x128xf32>
    %124 = vector.broadcast %123 : vector<1x128xf32> to vector<16x128xf32>
    %125 = arith.addf %120, %124 : vector<16x128xf32>
    %126 = arith.addf %125, %76 : vector<16x128xf32>
    %c0_46 = arith.constant 0 : index
    %c0_47 = arith.constant 0 : index
    %127 = vector.load %arg16[%c0_46, %c0_47] : memref<1x128xf32, #tpu.memory_space<vmem>>, vector<1x128xf32>
    %128 = vector.shape_cast %127 : vector<1x128xf32> to vector<128xf32>
    %c0_48 = arith.constant 0 : index
    %c0_49 = arith.constant 0 : index
    %129 = vector.load %arg17[%c0_48, %c0_49] : memref<1x128xf32, #tpu.memory_space<vmem>>, vector<1x128xf32>
    %130 = vector.shape_cast %129 : vector<1x128xf32> to vector<128xf32>
    %cst_50 = arith.constant dense<0.000000e+00> : vector<16xf32>
    %131 = vector.multi_reduction <add>, %126, %cst_50 [1] : vector<16x128xf32> to vector<16xf32>
    %132 = vector.shape_cast %131 : vector<16xf32> to vector<16x1xf32>
    %cst_51 = arith.constant 1.280000e+02 : f32
    %133 = vector.broadcast %cst_51 : f32 to vector<16x1xf32>
    %134 = arith.divf %132, %133 : vector<16x1xf32>
    %135 = vector.broadcast %134 : vector<16x1xf32> to vector<16x128xf32>
    %136 = arith.subf %126, %135 : vector<16x128xf32>
    %137 = arith.mulf %136, %136 : vector<16x128xf32>
    %cst_52 = arith.constant dense<0.000000e+00> : vector<16xf32>
    %138 = vector.multi_reduction <add>, %137, %cst_52 [1] : vector<16x128xf32> to vector<16xf32>
    %139 = vector.shape_cast %138 : vector<16xf32> to vector<16x1xf32>
    %cst_53 = arith.constant 1.280000e+02 : f32
    %140 = vector.broadcast %cst_53 : f32 to vector<16x1xf32>
    %141 = arith.divf %139, %140 : vector<16x1xf32>
    %142 = vector.broadcast %134 : vector<16x1xf32> to vector<16x128xf32>
    %143 = arith.subf %126, %142 : vector<16x128xf32>
    %cst_54 = arith.constant 9.99999974E-6 : f32
    %144 = vector.broadcast %cst_54 : f32 to vector<16x1xf32>
    %145 = arith.addf %141, %144 : vector<16x1xf32>
    %146 = math.rsqrt %145 : vector<16x1xf32>
    %147 = vector.broadcast %146 : vector<16x1xf32> to vector<16x128xf32>
    %148 = arith.mulf %143, %147 : vector<16x128xf32>
    %149 = vector.shape_cast %128 : vector<128xf32> to vector<1x128xf32>
    %150 = vector.broadcast %149 : vector<1x128xf32> to vector<16x128xf32>
    %151 = arith.mulf %148, %150 : vector<16x128xf32>
    %152 = vector.shape_cast %130 : vector<128xf32> to vector<1x128xf32>
    %153 = vector.broadcast %152 : vector<1x128xf32> to vector<16x128xf32>
    %154 = arith.addf %151, %153 : vector<16x128xf32>
    %cst_55 = arith.constant dense<0.000000e+00> : vector<16x16xf32>
    %155 = vector.multi_reduction <add>, %113, %cst_55 [0] : vector<4x16x16xf32> to vector<16x16xf32>
    %cst_56 = arith.constant 4.000000e+00 : f32
    %156 = vector.broadcast %cst_56 : f32 to vector<16x16xf32>
    %157 = arith.divf %155, %156 : vector<16x16xf32>
    %c0_57 = arith.constant 0 : index
    %c0_58 = arith.constant 0 : index
    %c0_59 = arith.constant 0 : index
    %158 = vector.load %arg25[%c0_57, %c0_58, %c0_59] : memref<1x16x16xf32, #tpu.memory_space<vmem>>, vector<1x16x16xf32>
    %159 = vector.shape_cast %158 : vector<1x16x16xf32> to vector<16x16xf32>
    %160 = vector.shape_cast %157 : vector<16x16xf32> to vector<1x16x16xf32>
    tpu.vector_store %arg25[%c0_57, %c0_58, %c0_59], %160 {strides = array<i32>} : memref<1x16x16xf32, #tpu.memory_space<vmem>>, vector<1x16x16xf32>,
    %161 = arith.truncf %154 : vector<16x128xf32> to vector<16x128xbf16>
    %c0_60 = arith.constant 0 : index
    %c0_61 = arith.constant 0 : index
    %162 = vector.load %arg18[%c0_60, %c0_61] : memref<128x256xbf16, #tpu.memory_space<vmem>>, vector<128x256xbf16>
    %cst_62 = arith.constant dense<0.000000e+00> : vector<16x256xf32>
    %163 = tpu.matmul %161, %162, %cst_62 {dimension_numbers = #tpu.dot_dimension_numbers<[1], [0], [0], [1], [0, 0, 1, 1], [], []>} : vector<16x128xbf16>, vector<128x256xbf16>, vector<16x256xf32> -> vector<16x256xf32>
    %c0_63 = arith.constant 0 : index
    %c0_64 = arith.constant 0 : index
    %164 = vector.load %arg19[%c0_63, %c0_64] : memref<1x256xf32, #tpu.memory_space<vmem>>, vector<1x256xf32>
    %165 = vector.shape_cast %164 : vector<1x256xf32> to vector<256xf32>
    %166 = vector.shape_cast %165 : vector<256xf32> to vector<1x256xf32>
    %167 = vector.broadcast %166 : vector<1x256xf32> to vector<16x256xf32>
    %168 = arith.addf %163, %167 : vector<16x256xf32>
    %cst_65 = arith.constant 0.000000e+00 : f32
    %169 = vector.broadcast %cst_65 : f32 to vector<16x256xf32>
    %170 = arith.maximumf %168, %169 : vector<16x256xf32>
    %171 = arith.truncf %170 : vector<16x256xf32> to vector<16x256xbf16>
    %c0_66 = arith.constant 0 : index
    %c0_67 = arith.constant 0 : index
    %172 = vector.load %arg20[%c0_66, %c0_67] : memref<256x128xbf16, #tpu.memory_space<vmem>>, vector<256x128xbf16>
    %cst_68 = arith.constant dense<0.000000e+00> : vector<16x128xf32>
    %173 = tpu.matmul %171, %172, %cst_68 {dimension_numbers = #tpu.dot_dimension_numbers<[1], [0], [0], [1], [0, 0, 1, 1], [], []>} : vector<16x256xbf16>, vector<256x128xbf16>, vector<16x128xf32> -> vector<16x128xf32>
    %c0_69 = arith.constant 0 : index
    %c0_70 = arith.constant 0 : index
    %174 = vector.load %arg21[%c0_69, %c0_70] : memref<1x128xf32, #tpu.memory_space<vmem>>, vector<1x128xf32>
    %175 = vector.shape_cast %174 : vector<1x128xf32> to vector<128xf32>
    %176 = vector.shape_cast %175 : vector<128xf32> to vector<1x128xf32>
    %177 = vector.broadcast %176 : vector<1x128xf32> to vector<16x128xf32>
    %178 = arith.addf %173, %177 : vector<16x128xf32>
    %179 = arith.addf %178, %154 : vector<16x128xf32>
    %c0_71 = arith.constant 0 : index
    %c0_72 = arith.constant 0 : index
    %180 = vector.load %arg22[%c0_71, %c0_72] : memref<1x128xf32, #tpu.memory_space<vmem>>, vector<1x128xf32>
    %181 = vector.shape_cast %180 : vector<1x128xf32> to vector<128xf32>
    %c0_73 = arith.constant 0 : index
    %c0_74 = arith.constant 0 : index
    %182 = vector.load %arg23[%c0_73, %c0_74] : memref<1x128xf32, #tpu.memory_space<vmem>>, vector<1x128xf32>
    %183 = vector.shape_cast %182 : vector<1x128xf32> to vector<128xf32>
    %cst_75 = arith.constant dense<0.000000e+00> : vector<16xf32>
    %184 = vector.multi_reduction <add>, %179, %cst_75 [1] : vector<16x128xf32> to vector<16xf32>
    %185 = vector.shape_cast %184 : vector<16xf32> to vector<16x1xf32>
    %cst_76 = arith.constant 1.280000e+02 : f32
    %186 = vector.broadcast %cst_76 : f32 to vector<16x1xf32>
    %187 = arith.divf %185, %186 : vector<16x1xf32>
    %188 = vector.broadcast %187 : vector<16x1xf32> to vector<16x128xf32>
    %189 = arith.subf %179, %188 : vector<16x128xf32>
    %190 = arith.mulf %189, %189 : vector<16x128xf32>
    %cst_77 = arith.constant dense<0.000000e+00> : vector<16xf32>
    %191 = vector.multi_reduction <add>, %190, %cst_77 [1] : vector<16x128xf32> to vector<16xf32>
    %192 = vector.shape_cast %191 : vector<16xf32> to vector<16x1xf32>
    %cst_78 = arith.constant 1.280000e+02 : f32
    %193 = vector.broadcast %cst_78 : f32 to vector<16x1xf32>
    %194 = arith.divf %192, %193 : vector<16x1xf32>
    %195 = vector.broadcast %187 : vector<16x1xf32> to vector<16x128xf32>
    %196 = arith.subf %179, %195 : vector<16x128xf32>
    %cst_79 = arith.constant 9.99999974E-6 : f32
    %197 = vector.broadcast %cst_79 : f32 to vector<16x1xf32>
    %198 = arith.addf %194, %197 : vector<16x1xf32>
    %199 = math.rsqrt %198 : vector<16x1xf32>
    %200 = vector.broadcast %199 : vector<16x1xf32> to vector<16x128xf32>
    %201 = arith.mulf %196, %200 : vector<16x128xf32>
    %202 = vector.shape_cast %181 : vector<128xf32> to vector<1x128xf32>
    %203 = vector.broadcast %202 : vector<1x128xf32> to vector<16x128xf32>
    %204 = arith.mulf %201, %203 : vector<16x128xf32>
    %205 = vector.shape_cast %183 : vector<128xf32> to vector<1x128xf32>
    %206 = vector.broadcast %205 : vector<1x128xf32> to vector<16x128xf32>
    %207 = arith.addf %204, %206 : vector<16x128xf32>
    %208 = arith.truncf %207 : vector<16x128xf32> to vector<16x128xbf16>
    %c0_80 = arith.constant 0 : index
    %c0_81 = arith.constant 0 : index
    %c0_82 = arith.constant 0 : index
    %209 = vector.load %arg24[%c0_80, %c0_81, %c0_82] : memref<1x16x128xbf16, #tpu.memory_space<vmem>>, vector<1x16x128xbf16>
    %210 = vector.shape_cast %209 : vector<1x16x128xbf16> to vector<16x128xbf16>
    %211 = vector.shape_cast %208 : vector<16x128xbf16> to vector<1x16x128xbf16>
    tpu.vector_store %arg24[%c0_80, %c0_81, %c0_82], %211 {strides = array<i32>} : memref<1x16x128xbf16, #tpu.memory_space<vmem>>, vector<1x16x128xbf16>,
    return
  }
  func.func @transform_0(%arg0: i32, %arg1: i32) -> (i32, i32, i32) {
    %c0_i32 = arith.constant 0 : i32
    %c0_i32_0 = arith.constant 0 : i32
    return %arg0, %arg1, %c0_i32 : i32, i32, i32
  }
  func.func @transform_1(%arg0: i32, %arg1: i32) -> (i32, i32, i32) {
    %c0_i32 = arith.constant 0 : i32
    %c0_i32_0 = arith.constant 0 : i32
    %c0_i32_1 = arith.constant 0 : i32
    return %arg0, %c0_i32, %c0_i32_0 : i32, i32, i32
  }
  func.func @transform_2(%arg0: i32, %arg1: i32) -> (i32, i32) {
    %c0_i32 = arith.constant 0 : i32
    %c0_i32_0 = arith.constant 0 : i32
    %c0_i32_1 = arith.constant 0 : i32
    return %c0_i32, %c0_i32_0 : i32, i32
  }
  func.func @transform_3(%arg0: i32, %arg1: i32) -> (i32, i32) {
    %c0_i32 = arith.constant 0 : i32
    %c0_i32_0 = arith.constant 0 : i32
    %c0_i32_1 = arith.constant 0 : i32
    return %c0_i32, %c0_i32_0 : i32, i32
  }
  func.func @transform_4(%arg0: i32, %arg1: i32) -> (i32, i32) {
    %c0_i32 = arith.constant 0 : i32
    %c0_i32_0 = arith.constant 0 : i32
    %c0_i32_1 = arith.constant 0 : i32
    return %c0_i32, %c0_i32_0 : i32, i32
  }
  func.func @transform_5(%arg0: i32, %arg1: i32) -> (i32, i32) {
    %c0_i32 = arith.constant 0 : i32
    %c0_i32_0 = arith.constant 0 : i32
    %c0_i32_1 = arith.constant 0 : i32
    return %c0_i32, %c0_i32_0 : i32, i32
  }
  func.func @transform_6(%arg0: i32, %arg1: i32) -> (i32, i32) {
    %c0_i32 = arith.constant 0 : i32
    %c0_i32_0 = arith.constant 0 : i32
    %c0_i32_1 = arith.constant 0 : i32
    return %c0_i32, %c0_i32_0 : i32, i32
  }
  func.func @transform_7(%arg0: i32, %arg1: i32) -> (i32, i32) {
    %c0_i32 = arith.constant 0 : i32
    %c0_i32_0 = arith.constant 0 : i32
    %c0_i32_1 = arith.constant 0 : i32
    return %c0_i32, %c0_i32_0 : i32, i32
  }
  func.func @transform_8(%arg0: i32, %arg1: i32) -> (i32, i32) {
    %c0_i32 = arith.constant 0 : i32
    %c0_i32_0 = arith.constant 0 : i32
    %c0_i32_1 = arith.constant 0 : i32
    return %c0_i32, %c0_i32_0 : i32, i32
  }
  func.func @transform_9(%arg0: i32, %arg1: i32) -> (i32, i32) {
    %c0_i32 = arith.constant 0 : i32
    %c0_i32_0 = arith.constant 0 : i32
    %c0_i32_1 = arith.constant 0 : i32
    return %c0_i32, %c0_i32_0 : i32, i32
  }
  func.func @transform_10(%arg0: i32, %arg1: i32) -> (i32, i32) {
    %c0_i32 = arith.constant 0 : i32
    %c0_i32_0 = arith.constant 0 : i32
    %c0_i32_1 = arith.constant 0 : i32
    return %c0_i32, %c0_i32_0 : i32, i32
  }
  func.func @transform_11(%arg0: i32, %arg1: i32) -> (i32, i32) {
    %c0_i32 = arith.constant 0 : i32
    %c0_i32_0 = arith.constant 0 : i32
    %c0_i32_1 = arith.constant 0 : i32
    return %c0_i32, %c0_i32_0 : i32, i32
  }
  func.func @transform_12(%arg0: i32, %arg1: i32) -> (i32, i32) {
    %c0_i32 = arith.constant 0 : i32
    %c0_i32_0 = arith.constant 0 : i32
    %c0_i32_1 = arith.constant 0 : i32
    return %c0_i32, %c0_i32_0 : i32, i32
  }
  func.func @transform_13(%arg0: i32, %arg1: i32) -> (i32, i32) {
    %c0_i32 = arith.constant 0 : i32
    %c0_i32_0 = arith.constant 0 : i32
    %c0_i32_1 = arith.constant 0 : i32
    return %c0_i32, %c0_i32_0 : i32, i32
  }
  func.func @transform_14(%arg0: i32, %arg1: i32) -> (i32, i32) {
    %c0_i32 = arith.constant 0 : i32
    %c0_i32_0 = arith.constant 0 : i32
    %c0_i32_1 = arith.constant 0 : i32
    return %c0_i32, %c0_i32_0 : i32, i32
  }
  func.func @transform_15(%arg0: i32, %arg1: i32) -> (i32, i32) {
    %c0_i32 = arith.constant 0 : i32
    %c0_i32_0 = arith.constant 0 : i32
    %c0_i32_1 = arith.constant 0 : i32
    return %c0_i32, %c0_i32_0 : i32, i32
  }
  func.func @transform_16(%arg0: i32, %arg1: i32) -> (i32, i32) {
    %c0_i32 = arith.constant 0 : i32
    %c0_i32_0 = arith.constant 0 : i32
    %c0_i32_1 = arith.constant 0 : i32
    return %c0_i32, %c0_i32_0 : i32, i32
  }
  func.func @transform_17(%arg0: i32, %arg1: i32) -> (i32, i32) {
    %c0_i32 = arith.constant 0 : i32
    %c0_i32_0 = arith.constant 0 : i32
    %c0_i32_1 = arith.constant 0 : i32
    return %c0_i32, %c0_i32_0 : i32, i32
  }
  func.func @transform_18(%arg0: i32, %arg1: i32) -> (i32, i32) {
    %c0_i32 = arith.constant 0 : i32
    %c0_i32_0 = arith.constant 0 : i32
    %c0_i32_1 = arith.constant 0 : i32
    return %c0_i32, %c0_i32_0 : i32, i32
  }
  func.func @transform_19(%arg0: i32, %arg1: i32) -> (i32, i32) {
    %c0_i32 = arith.constant 0 : i32
    %c0_i32_0 = arith.constant 0 : i32
    %c0_i32_1 = arith.constant 0 : i32
    return %c0_i32, %c0_i32_0 : i32, i32
  }
  func.func @transform_20(%arg0: i32, %arg1: i32) -> (i32, i32) {
    %c0_i32 = arith.constant 0 : i32
    %c0_i32_0 = arith.constant 0 : i32
    %c0_i32_1 = arith.constant 0 : i32
    return %c0_i32, %c0_i32_0 : i32, i32
  }
  func.func @transform_21(%arg0: i32, %arg1: i32) -> (i32, i32) {
    %c0_i32 = arith.constant 0 : i32
    %c0_i32_0 = arith.constant 0 : i32
    %c0_i32_1 = arith.constant 0 : i32
    return %c0_i32, %c0_i32_0 : i32, i32
  }
  func.func @transform_22(%arg0: i32, %arg1: i32) -> (i32, i32, i32) {
    %c0_i32 = arith.constant 0 : i32
    %c0_i32_0 = arith.constant 0 : i32
    return %arg0, %arg1, %c0_i32 : i32, i32, i32
  }
  func.func @transform_23(%arg0: i32, %arg1: i32) -> (i32, i32, i32) {
    %c0_i32 = arith.constant 0 : i32
    %c0_i32_0 = arith.constant 0 : i32
    return %arg0, %arg1, %c0_i32 : i32, i32, i32
  }
}

</mosaic_0001>

<llo_original>
// kernel: adv_transformer_decoder_layer_forward.1
$region0: #{adv_transformer_decoder_layer_forward.1}
  #allocation0 [shape = 'u32[]', space=smem, size = 0x4, offset = 0x4, fixed_abs, tag = 'smem constant byte address 0x4 - core index']
  #allocation1 [shape = 'u32[144,128]{1,0:T(1,128)}', space=vmem, size = 0x12000, scoped, tag = 'internal scratch']
  %s0 = inlined_call_operand.hbm [shape: bf16[2,16,128], index: 0, kind: input, shape index: {}]
  %s1 = inlined_call_operand.hbm [shape: bf16[2,16,128], index: 1, kind: input, shape index: {}]
  %s2 = inlined_call_operand.hbm [shape: bf16[128,384], index: 2, kind: input, shape index: {}]
  %s3 = inlined_call_operand.vmem [shape: f32[1,384], index: 3, kind: input, shape index: {}]
  %s4 = inlined_call_operand.hbm [shape: bf16[128,128], index: 4, kind: input, shape index: {}]
  %s5 = inlined_call_operand.vmem [shape: f32[1,128], index: 5, kind: input, shape index: {}]
  %s6 = inlined_call_operand.vmem [shape: f32[1,128], index: 6, kind: input, shape index: {}]
  %s7 = inlined_call_operand.vmem [shape: f32[1,128], index: 7, kind: input, shape index: {}]
  %s8 = inlined_call_operand.hbm [shape: bf16[128,128], index: 8, kind: input, shape index: {}]
  %s9 = inlined_call_operand.hbm [shape: f32[1,128], index: 9, kind: input, shape index: {}]
  %s10 = inlined_call_operand.hbm [shape: bf16[128,256], index: 10, kind: input, shape index: {}]
  %s11 = inlined_call_operand.vmem [shape: f32[1,256], index: 11, kind: input, shape index: {}]
  %s12 = inlined_call_operand.hbm [shape: bf16[128,128], index: 12, kind: input, shape index: {}]
  %s13 = inlined_call_operand.hbm [shape: f32[1,128], index: 13, kind: input, shape index: {}]
  %s14 = inlined_call_operand.hbm [shape: f32[1,128], index: 14, kind: input, shape index: {}]
  %s15 = inlined_call_operand.hbm [shape: f32[1,128], index: 15, kind: input, shape index: {}]
  %s16 = inlined_call_operand.hbm [shape: bf16[128,256], index: 16, kind: input, shape index: {}]
  %s17 = inlined_call_operand.vmem [shape: f32[1,256], index: 17, kind: input, shape index: {}]
  %s18 = inlined_call_operand.hbm [shape: bf16[256,128], index: 18, kind: input, shape index: {}]
  %s19 = inlined_call_operand.vmem [shape: f32[1,128], index: 19, kind: input, shape index: {}]
  %s20 = inlined_call_operand.vmem [shape: f32[1,128], index: 20, kind: input, shape index: {}]
  %s21 = inlined_call_operand.vmem [shape: f32[1,128], index: 21, kind: input, shape index: {}]
  %s22 = inlined_call_operand.hbm [shape: bf16[2,16,128], index: 22, kind: output, shape index: {0}]
  %s23 = inlined_call_operand.hbm [shape: f32[2,16,16], index: 23, kind: output, shape index: {1}]
  %24 = xla_tuple %s22, %s23
  %s25 = sld [smem:[#allocation0]]
  $region181: #{adv_transformer_decoder_layer_forward.1} parent=0
    _
  %s27 = ssub.s32 1, %s25
  %s28 = scalar_select 0, %s27, %s25
  $region1: #{adv_transformer_decoder_layer_forward.1} parent=0
    #allocation2 [shape = 'u8[8192]{0}', space=vmem, size = 0x2000, scoped, tag = 'input window, operand 0']
    #allocation3 [shape = 's32[2]{0}', space=sflag, size = 0x8, scoped, tag = 'scoped memory for adv_transformer_decoder_layer_forward.1']
    #allocation4 [shape = 's32[2]{0}', space=sflag, size = 0x8, scoped, tag = 'scoped memory for adv_transformer_decoder_layer_forward.1']
    #allocation5 [shape = 'u8[8192]{0}', space=vmem, size = 0x2000, scoped, tag = 'input window, operand 1']
    #allocation6 [shape = 's32[2]{0}', space=sflag, size = 0x8, scoped, tag = 'scoped memory for adv_transformer_decoder_layer_forward.1']
    #allocation7 [shape = 'u8[98304]{0}', space=vmem, size = 0x18000, scoped, tag = 'input window, operand 2, single buffered']
    #allocation8 [shape = 'u8[32768]{0}', space=vmem, size = 0x8000, scoped, tag = 'input window, operand 4, single buffered']
    #allocation9 [shape = 's32[1]{0}', space=sflag, size = 0x4, scoped, tag = 'scoped memory for adv_transformer_decoder_layer_forward.1']
    #allocation10 [shape = 'u8[32768]{0}', space=vmem, size = 0x8000, scoped, tag = 'input window, operand 8, single buffered']
    #allocation11 [shape = 'u8[512]{0}', space=vmem, size = 0x400, scoped, tag = 'input window, operand 9, single buffered']
    #allocation12 [shape = 's32[1]{0}', space=sflag, size = 0x4, scoped, tag = 'scoped memory for adv_transformer_decoder_layer_forward.1']
    #allocation13 [shape = 'u8[65536]{0}', space=vmem, size = 0x10000, scoped, tag = 'input window, operand 10, single buffered']
    #allocation14 [shape = 'u8[32768]{0}', space=vmem, size = 0x8000, scoped, tag = 'input window, operand 12, single buffered']
    #allocation15 [shape = 's32[1]{0}', space=sflag, size = 0x4, scoped, tag = 'scoped memory for adv_transformer_decoder_layer_forward.1']
    #allocation16 [shape = 'u8[512]{0}', space=vmem, size = 0x400, scoped, tag = 'input window, operand 13, single buffered']
    #allocation17 [shape = 'u8[512]{0}', space=vmem, size = 0x400, scoped, tag = 'input window, operand 14, single buffered']
    #allocation18 [shape = 's32[1]{0}', space=sflag, size = 0x4, scoped, tag = 'scoped memory for adv_transformer_decoder_layer_forward.1']
    #allocation19 [shape = 'u8[512]{0}', space=vmem, size = 0x400, scoped, tag = 'input window, operand 15, single buffered']
    #allocation20 [shape = 'u8[65536]{0}', space=vmem, size = 0x10000, scoped, tag = 'input window, operand 16, single buffered']
    #allocation21 [shape = 's32[1]{0}', space=sflag, size = 0x4, scoped, tag = 'scoped memory for adv_transformer_decoder_layer_forward.1']
    #allocation22 [shape = 'u8[65536]{0}', space=vmem, size = 0x10000, scoped, tag = 'input window, operand 18, single buffered']
    #allocation23 [shape = 'u8[8192]{0}', space=vmem, size = 0x2000, scoped, tag = 'output window, operand 0']
    #allocation24 [shape = 'u8[16384]{0}', space=vmem, size = 0x4000, scoped, tag = 'output window, operand 1']
    #allocation25 [shape = 's32[2]{0}', space=sflag, size = 0x8, scoped, tag = 'scoped memory for adv_transformer_decoder_layer_forward.1']
    %29 = vsyncpa [#allocation3], 0
    %s30 = scalar_lea.sflag [#allocation3], 1
    %31 = vsyncpa %s30, 0
    %32 = vsyncpa [#allocation6], 0
    %s33 = scalar_lea.sflag [#allocation6], 1
    %34 = vsyncpa %s33, 0
    %35 = vsyncpa [#allocation9], 0
    %36 = vsyncpa [#allocation12], 0
    %37 = vsyncpa [#allocation15], 0
    %38 = vsyncpa [#allocation18], 0
    %39 = vsyncpa [#allocation21], 0
    %40 = vsyncpa [#allocation4], 0
    %s41 = scalar_lea.sflag [#allocation4], 1
    %42 = vsyncpa %s41, 0
    %43 = vsyncpa [#allocation25], 0
    %s44 = scalar_lea.sflag [#allocation25], 1
    %45 = vsyncpa %s44, 0
    loop: start=0, step=1, limit=4
    $region2: #{adv_transformer_decoder_layer_forward.1} parent=1 // loop_pre_header
      _
    $region3: #{adv_transformer_decoder_layer_forward.1} parent=1 // loop_header
      %s47 = sphi 0, %s51
      %p48 = scmp.ge.s32.totalorder %s47, 4
      %s54 = sphi 0, %s66
      %s55 = sphi 0, %s62
      %s56 = sphi 0, %s54
      %s57 = sphi 0, %s55
      %s58 = sphi 0, %s56
      %s59 = sphi 0, %s57
      %s71 = sphi 0, %s73
      %s74 = sphi 0, %s71
      %s75 = sphi 0, %s74
      %s91 = sphi 0, %s75
      %s97 = sphi 0, %s99
      %s100 = sphi 0, %s97
      %s101 = sphi 0, %s100
      %s117 = sphi 0, %s101
      %s121 = sphi 0, %s121
      %s123 = sphi 0, %s121
      %s124 = sphi 0, %s123
      %s138 = sphi 0, %s124
      %s142 = sphi 0, %s142
      %s144 = sphi 0, %s142
      %s145 = sphi 0, %s144
      %s159 = sphi 0, %s145
      %s163 = sphi 0, %s163
      %s165 = sphi 0, %s163
      %s166 = sphi 0, %s165
      %s180 = sphi 0, %s166
      %s184 = sphi 0, %s184
      %s186 = sphi 0, %s184
      %s187 = sphi 0, %s186
      %s201 = sphi 0, %s187
      %s205 = sphi 0, %s205
      %s207 = sphi 0, %s205
      %s208 = sphi 0, %s207
      %s222 = sphi 0, %s208
      %s226 = sphi 0, %s226
      %s228 = sphi 0, %s226
      %s229 = sphi 0, %s228
      %s243 = sphi 0, %s229
      %s247 = sphi 0, %s247
      %s249 = sphi 0, %s247
      %s250 = sphi 0, %s249
      %s264 = sphi 0, %s250
      %s268 = sphi 0, %s268
      %s270 = sphi 0, %s268
      %s271 = sphi 0, %s270
      %s285 = sphi 0, %s271
      %s289 = sphi 0, %s289
      %s291 = sphi 0, %s289
      %s292 = sphi 0, %s291
      %s306 = sphi 0, %s292
      %s310 = sphi 0, %s310
      %s312 = sphi 0, %s310
      %s313 = sphi 0, %s312
      %s327 = sphi 0, %s313
      %s331 = sphi 0, %s331
      %s333 = sphi 0, %s331
      %s334 = sphi 0, %s333
      %s348 = sphi 0, %s334
      %s352 = sphi 0, %s352
      %s354 = sphi 0, %s352
      %s355 = sphi 0, %s354
      %s369 = sphi 0, %s355
      %s373 = sphi 0, %s373
      %s375 = sphi 0, %s373
      %s376 = sphi 0, %s375
      %s390 = sphi 0, %s376
      %s394 = sphi 0, %s394
      %s396 = sphi 0, %s394
      %s397 = sphi 0, %s396
      %s411 = sphi 0, %s397
      %s415 = sphi 0, %s415
      %s417 = sphi 0, %s415
      %s418 = sphi 0, %s417
      %s432 = sphi 0, %s418
      %s436 = sphi 0, %s436
      %s438 = sphi 0, %s436
      %s439 = sphi 0, %s438
      %s453 = sphi 0, %s439
      %s457 = sphi 0, %s457
      %s459 = sphi 0, %s457
      %s460 = sphi 0, %s459
      %s474 = sphi 0, %s460
      %s478 = sphi 0, %s478
      %s480 = sphi 0, %s478
      %s481 = sphi 0, %s480
      %s495 = sphi 0, %s481
      %s499 = sphi 0, %s499
      %s501 = sphi 0, %s499
      %s502 = sphi 0, %s501
      %s516 = sphi 0, %s502
      %s520 = sphi 0, %s520
      %s522 = sphi 0, %s520
      %s523 = sphi 0, %s522
      %s537 = sphi 0, %s523
      %s545 = sphi 0, %s547
      %s548 = sphi 0, %s545
      %s549 = sphi 0, %s548
      %s565 = sphi 0, %s549
      %s573 = sphi 0, %s575
      %s576 = sphi 0, %s573
      %s577 = sphi 0, %s576
      %s593 = sphi 0, %s577
    $region4: #{adv_transformer_decoder_layer_forward.1} parent=1 // loop_header_branch
      %50 = sbr.rel (%p48) target = $region8
    $region5: #{adv_transformer_decoder_layer_forward.1} parent=1 // loop_body
      %s52 = ssub.s32 %s47, 1
      %s53 = ssub.s32 %s47, 2
      %s60 = sadd.s32 1, %s55
      %p61 = scmp.ge.s32.totalorder %s60, 1
      %s62 = scalar_select %p61, 0, %s60
      %s63 = sadd.s32 1, %s54
      %s64 = scalar_select %p61, %s63, %s54
      %p65 = scmp.ge.s32.totalorder %s64, 2
      %s66 = scalar_select %p65, 0, %s64
      %s67 = ssub.s32 %s54, %s66
      %s68 = ssub.s32 %s55, %s62
      %s69 = sor.u32 %s67, %s68
      %p70 = scmp.eq.s32.totalorder %s69, 0
      %s72 = sadd.s32 %s71, 1
      %s73 = scalar_select %p70, %s71, %s72
      %p76 = pneg %p70
      %p77 = scmp.eq.s32.totalorder %s47, 1
      %p78 = por %p76, %p77
      %p79 = scmp.ne.s32.totalorder %s71, %s74
      %p80 = scmp.eq.s32.totalorder %s47, 0
      %p81 = por %p79, %p80
      %p82 = scmp.ne.s32.totalorder %s71, %s74
      %p83 = scmp.eq.s32.totalorder %s52, 1
      %p84 = por %p82, %p83
      %p85 = scmp.ne.s32.totalorder %s74, %s75
      %p86 = scmp.eq.s32.totalorder %s52, 0
      %p87 = por %p85, %p86
      %p88 = scmp.ne.s32.totalorder %s74, %s75
      %p89 = scmp.eq.s32.totalorder %s53, 1
      %p90 = por %p88, %p89
      %p92 = scmp.ne.s32.totalorder %s75, %s91
      %p93 = scmp.eq.s32.totalorder %s53, 0
      %p94 = por %p92, %p93
      %s95 = ssub.s32 %s54, %s66
      %p96 = scmp.eq.s32.totalorder %s95, 0
      %s98 = sadd.s32 %s97, 1
      %s99 = scalar_select %p96, %s97, %s98
      %p102 = pneg %p96
      %p103 = scmp.eq.s32.totalorder %s47, 1
      %p104 = por %p102, %p103
      %p105 = scmp.ne.s32.totalorder %s97, %s100
      %p106 = scmp.eq.s32.totalorder %s47, 0
      %p107 = por %p105, %p106
      %p108 = scmp.ne.s32.totalorder %s97, %s100
      %p109 = scmp.eq.s32.totalorder %s52, 1
      %p110 = por %p108, %p109
      %p111 = scmp.ne.s32.totalorder %s100, %s101
      %p112 = scmp.eq.s32.totalorder %s52, 0
      %p113 = por %p111, %p112
      %p114 = scmp.ne.s32.totalorder %s100, %s101
      %p115 = scmp.eq.s32.totalorder %s53, 1
      %p116 = por %p114, %p115
      %p118 = scmp.ne.s32.totalorder %s101, %s117
      %p119 = scmp.eq.s32.totalorder %s53, 0
      %p120 = por %p118, %p119
      %s122 = sadd.s32 %s121, 1
      %p125 = scmp.eq.s32.totalorder %s47, 1
      %p126 = scmp.ne.s32.totalorder %s121, %s123
      %p127 = scmp.eq.s32.totalorder %s47, 0
      %p128 = por %p126, %p127
      %p129 = scmp.ne.s32.totalorder %s121, %s123
      %p130 = scmp.eq.s32.totalorder %s52, 1
      %p131 = por %p129, %p130
      %p132 = scmp.ne.s32.totalorder %s123, %s124
      %p133 = scmp.eq.s32.totalorder %s52, 0
      %p134 = por %p132, %p133
      %p135 = scmp.ne.s32.totalorder %s123, %s124
      %p136 = scmp.eq.s32.totalorder %s53, 1
      %p137 = por %p135, %p136
      %p139 = scmp.ne.s32.totalorder %s124, %s138
      %p140 = scmp.eq.s32.totalorder %s53, 0
      %p141 = por %p139, %p140
      %s143 = sadd.s32 %s142, 1
      %p146 = scmp.eq.s32.totalorder %s47, 1
      %p147 = scmp.ne.s32.totalorder %s142, %s144
      %p148 = scmp.eq.s32.totalorder %s47, 0
      %p149 = por %p147, %p148
      %p150 = scmp.ne.s32.totalorder %s142, %s144
      %p151 = scmp.eq.s32.totalorder %s52, 1
      %p152 = por %p150, %p151
      %p153 = scmp.ne.s32.totalorder %s144, %s145
      %p154 = scmp.eq.s32.totalorder %s52, 0
      %p155 = por %p153, %p154
      %p156 = scmp.ne.s32.totalorder %s144, %s145
      %p157 = scmp.eq.s32.totalorder %s53, 1
      %p158 = por %p156, %p157
      %p160 = scmp.ne.s32.totalorder %s145, %s159
      %p161 = scmp.eq.s32.totalorder %s53, 0
      %p162 = por %p160, %p161
      %s164 = sadd.s32 %s163, 1
      %p167 = scmp.eq.s32.totalorder %s47, 1
      %p168 = scmp.ne.s32.totalorder %s163, %s165
      %p169 = scmp.eq.s32.totalorder %s47, 0
      %p170 = por %p168, %p169
      %p171 = scmp.ne.s32.totalorder %s163, %s165
      %p172 = scmp.eq.s32.totalorder %s52, 1
      %p173 = por %p171, %p172
      %p174 = scmp.ne.s32.totalorder %s165, %s166
      %p175 = scmp.eq.s32.totalorder %s52, 0
      %p176 = por %p174, %p175
      %p177 = scmp.ne.s32.totalorder %s165, %s166
      %p178 = scmp.eq.s32.totalorder %s53, 1
      %p179 = por %p177, %p178
      %p181 = scmp.ne.s32.totalorder %s166, %s180
      %p182 = scmp.eq.s32.totalorder %s53, 0
      %p183 = por %p181, %p182
      %s185 = sadd.s32 %s184, 1
      %p188 = scmp.eq.s32.totalorder %s47, 1
      %p189 = scmp.ne.s32.totalorder %s184, %s186
      %p190 = scmp.eq.s32.totalorder %s47, 0
      %p191 = por %p189, %p190
      %p192 = scmp.ne.s32.totalorder %s184, %s186
      %p193 = scmp.eq.s32.totalorder %s52, 1
      %p194 = por %p192, %p193
      %p195 = scmp.ne.s32.totalorder %s186, %s187
      %p196 = scmp.eq.s32.totalorder %s52, 0
      %p197 = por %p195, %p196
      %p198 = scmp.ne.s32.totalorder %s186, %s187
      %p199 = scmp.eq.s32.totalorder %s53, 1
      %p200 = por %p198, %p199
      %p202 = scmp.ne.s32.totalorder %s187, %s201
      %p203 = scmp.eq.s32.totalorder %s53, 0
      %p204 = por %p202, %p203
      %s206 = sadd.s32 %s205, 1
      %p209 = scmp.eq.s32.totalorder %s47, 1
      %p210 = scmp.ne.s32.totalorder %s205, %s207
      %p211 = scmp.eq.s32.totalorder %s47, 0
      %p212 = por %p210, %p211
      %p213 = scmp.ne.s32.totalorder %s205, %s207
      %p214 = scmp.eq.s32.totalorder %s52, 1
      %p215 = por %p213, %p214
      %p216 = scmp.ne.s32.totalorder %s207, %s208
      %p217 = scmp.eq.s32.totalorder %s52, 0
      %p218 = por %p216, %p217
      %p219 = scmp.ne.s32.totalorder %s207, %s208
      %p220 = scmp.eq.s32.totalorder %s53, 1
      %p221 = por %p219, %p220
      %p223 = scmp.ne.s32.totalorder %s208, %s222
      %p224 = scmp.eq.s32.totalorder %s53, 0
      %p225 = por %p223, %p224
      %s227 = sadd.s32 %s226, 1
      %p230 = scmp.eq.s32.totalorder %s47, 1
      %p231 = scmp.ne.s32.totalorder %s226, %s228
      %p232 = scmp.eq.s32.totalorder %s47, 0
      %p233 = por %p231, %p232
      %p234 = scmp.ne.s32.totalorder %s226, %s228
      %p235 = scmp.eq.s32.totalorder %s52, 1
      %p236 = por %p234, %p235
      %p237 = scmp.ne.s32.totalorder %s228, %s229
      %p238 = scmp.eq.s32.totalorder %s52, 0
      %p239 = por %p237, %p238
      %p240 = scmp.ne.s32.totalorder %s228, %s229
      %p241 = scmp.eq.s32.totalorder %s53, 1
      %p242 = por %p240, %p241
      %p244 = scmp.ne.s32.totalorder %s229, %s243
      %p245 = scmp.eq.s32.totalorder %s53, 0
      %p246 = por %p244, %p245
      %s248 = sadd.s32 %s247, 1
      %p251 = scmp.eq.s32.totalorder %s47, 1
      %p252 = scmp.ne.s32.totalorder %s247, %s249
      %p253 = scmp.eq.s32.totalorder %s47, 0
      %p254 = por %p252, %p253
      %p255 = scmp.ne.s32.totalorder %s247, %s249
      %p256 = scmp.eq.s32.totalorder %s52, 1
      %p257 = por %p255, %p256
      %p258 = scmp.ne.s32.totalorder %s249, %s250
      %p259 = scmp.eq.s32.totalorder %s52, 0
      %p260 = por %p258, %p259
      %p261 = scmp.ne.s32.totalorder %s249, %s250
      %p262 = scmp.eq.s32.totalorder %s53, 1
      %p263 = por %p261, %p262
      %p265 = scmp.ne.s32.totalorder %s250, %s264
      %p266 = scmp.eq.s32.totalorder %s53, 0
      %p267 = por %p265, %p266
      %s269 = sadd.s32 %s268, 1
      %p272 = scmp.eq.s32.totalorder %s47, 1
      %p273 = scmp.ne.s32.totalorder %s268, %s270
      %p274 = scmp.eq.s32.totalorder %s47, 0
      %p275 = por %p273, %p274
      %p276 = scmp.ne.s32.totalorder %s268, %s270
      %p277 = scmp.eq.s32.totalorder %s52, 1
      %p278 = por %p276, %p277
      %p279 = scmp.ne.s32.totalorder %s270, %s271
      %p280 = scmp.eq.s32.totalorder %s52, 0
      %p281 = por %p279, %p280
      %p282 = scmp.ne.s32.totalorder %s270, %s271
      %p283 = scmp.eq.s32.totalorder %s53, 1
      %p284 = por %p282, %p283
      %p286 = scmp.ne.s32.totalorder %s271, %s285
      %p287 = scmp.eq.s32.totalorder %s53, 0
      %p288 = por %p286, %p287
      %s290 = sadd.s32 %s289, 1
      %p293 = scmp.eq.s32.totalorder %s47, 1
      %p294 = scmp.ne.s32.totalorder %s289, %s291
      %p295 = scmp.eq.s32.totalorder %s47, 0
      %p296 = por %p294, %p295
      %p297 = scmp.ne.s32.totalorder %s289, %s291
      %p298 = scmp.eq.s32.totalorder %s52, 1
      %p299 = por %p297, %p298
      %p300 = scmp.ne.s32.totalorder %s291, %s292
      %p301 = scmp.eq.s32.totalorder %s52, 0
      %p302 = por %p300, %p301
      %p303 = scmp.ne.s32.totalorder %s291, %s292
      %p304 = scmp.eq.s32.totalorder %s53, 1
      %p305 = por %p303, %p304
      %p307 = scmp.ne.s32.totalorder %s292, %s306
      %p308 = scmp.eq.s32.totalorder %s53, 0
      %p309 = por %p307, %p308
      %s311 = sadd.s32 %s310, 1
      %p314 = scmp.eq.s32.totalorder %s47, 1
      %p315 = scmp.ne.s32.totalorder %s310, %s312
      %p316 = scmp.eq.s32.totalorder %s47, 0
      %p317 = por %p315, %p316
      %p318 = scmp.ne.s32.totalorder %s310, %s312
      %p319 = scmp.eq.s32.totalorder %s52, 1
      %p320 = por %p318, %p319
      %p321 = scmp.ne.s32.totalorder %s312, %s313
      %p322 = scmp.eq.s32.totalorder %s52, 0
      %p323 = por %p321, %p322
      %p324 = scmp.ne.s32.totalorder %s312, %s313
      %p325 = scmp.eq.s32.totalorder %s53, 1
      %p326 = por %p324, %p325
      %p328 = scmp.ne.s32.totalorder %s313, %s327
      %p329 = scmp.eq.s32.totalorder %s53, 0
      %p330 = por %p328, %p329
      %s332 = sadd.s32 %s331, 1
      %p335 = scmp.eq.s32.totalorder %s47, 1
      %p336 = scmp.ne.s32.totalorder %s331, %s333
      %p337 = scmp.eq.s32.totalorder %s47, 0
      %p338 = por %p336, %p337
      %p339 = scmp.ne.s32.totalorder %s331, %s333
      %p340 = scmp.eq.s32.totalorder %s52, 1
      %p341 = por %p339, %p340
      %p342 = scmp.ne.s32.totalorder %s333, %s334
      %p343 = scmp.eq.s32.totalorder %s52, 0
      %p344 = por %p342, %p343
      %p345 = scmp.ne.s32.totalorder %s333, %s334
      %p346 = scmp.eq.s32.totalorder %s53, 1
      %p347 = por %p345, %p346
      %p349 = scmp.ne.s32.totalorder %s334, %s348
      %p350 = scmp.eq.s32.totalorder %s53, 0
      %p351 = por %p349, %p350
      %s353 = sadd.s32 %s352, 1
      %p356 = scmp.eq.s32.totalorder %s47, 1
      %p357 = scmp.ne.s32.totalorder %s352, %s354
      %p358 = scmp.eq.s32.totalorder %s47, 0
      %p359 = por %p357, %p358
      %p360 = scmp.ne.s32.totalorder %s352, %s354
      %p361 = scmp.eq.s32.totalorder %s52, 1
      %p362 = por %p360, %p361
      %p363 = scmp.ne.s32.totalorder %s354, %s355
      %p364 = scmp.eq.s32.totalorder %s52, 0
      %p365 = por %p363, %p364
      %p366 = scmp.ne.s32.totalorder %s354, %s355
      %p367 = scmp.eq.s32.totalorder %s53, 1
      %p368 = por %p366, %p367
      %p370 = scmp.ne.s32.totalorder %s355, %s369
      %p371 = scmp.eq.s32.totalorder %s53, 0
      %p372 = por %p370, %p371
      %s374 = sadd.s32 %s373, 1
      %p377 = scmp.eq.s32.totalorder %s47, 1
      %p378 = scmp.ne.s32.totalorder %s373, %s375
      %p379 = scmp.eq.s32.totalorder %s47, 0
      %p380 = por %p378, %p379
      %p381 = scmp.ne.s32.totalorder %s373, %s375
      %p382 = scmp.eq.s32.totalorder %s52, 1
      %p383 = por %p381, %p382
      %p384 = scmp.ne.s32.totalorder %s375, %s376
      %p385 = scmp.eq.s32.totalorder %s52, 0
      %p386 = por %p384, %p385
      %p387 = scmp.ne.s32.totalorder %s375, %s376
      %p388 = scmp.eq.s32.totalorder %s53, 1
      %p389 = por %p387, %p388
      %p391 = scmp.ne.s32.totalorder %s376, %s390
      %p392 = scmp.eq.s32.totalorder %s53, 0
      %p393 = por %p391, %p392
      %s395 = sadd.s32 %s394, 1
      %p398 = scmp.eq.s32.totalorder %s47, 1
      %p399 = scmp.ne.s32.totalorder %s394, %s396
      %p400 = scmp.eq.s32.totalorder %s47, 0
      %p401 = por %p399, %p400
      %p402 = scmp.ne.s32.totalorder %s394, %s396
      %p403 = scmp.eq.s32.totalorder %s52, 1
      %p404 = por %p402, %p403
      %p405 = scmp.ne.s32.totalorder %s396, %s397
      %p406 = scmp.eq.s32.totalorder %s52, 0
      %p407 = por %p405, %p406
      %p408 = scmp.ne.s32.totalorder %s396, %s397
      %p409 = scmp.eq.s32.totalorder %s53, 1
      %p410 = por %p408, %p409
      %p412 = scmp.ne.s32.totalorder %s397, %s411
      %p413 = scmp.eq.s32.totalorder %s53, 0
      %p414 = por %p412, %p413
      %s416 = sadd.s32 %s415, 1
      %p419 = scmp.eq.s32.totalorder %s47, 1
      %p420 = scmp.ne.s32.totalorder %s415, %s417
      %p421 = scmp.eq.s32.totalorder %s47, 0
      %p422 = por %p420, %p421
      %p423 = scmp.ne.s32.totalorder %s415, %s417
      %p424 = scmp.eq.s32.totalorder %s52, 1
      %p425 = por %p423, %p424
      %p426 = scmp.ne.s32.totalorder %s417, %s418
      %p427 = scmp.eq.s32.totalorder %s52, 0
      %p428 = por %p426, %p427
      %p429 = scmp.ne.s32.totalorder %s417, %s418
      %p430 = scmp.eq.s32.totalorder %s53, 1
      %p431 = por %p429, %p430
      %p433 = scmp.ne.s32.totalorder %s418, %s432
      %p434 = scmp.eq.s32.totalorder %s53, 0
      %p435 = por %p433, %p434
      %s437 = sadd.s32 %s436, 1
      %p440 = scmp.eq.s32.totalorder %s47, 1
      %p441 = scmp.ne.s32.totalorder %s436, %s438
      %p442 = scmp.eq.s32.totalorder %s47, 0
      %p443 = por %p441, %p442
      %p444 = scmp.ne.s32.totalorder %s436, %s438
      %p445 = scmp.eq.s32.totalorder %s52, 1
      %p446 = por %p444, %p445
      %p447 = scmp.ne.s32.totalorder %s438, %s439
      %p448 = scmp.eq.s32.totalorder %s52, 0
      %p449 = por %p447, %p448
      %p450 = scmp.ne.s32.totalorder %s438, %s439
      %p451 = scmp.eq.s32.totalorder %s53, 1
      %p452 = por %p450, %p451
      %p454 = scmp.ne.s32.totalorder %s439, %s453
      %p455 = scmp.eq.s32.totalorder %s53, 0
      %p456 = por %p454, %p455
      %s458 = sadd.s32 %s457, 1
      %p461 = scmp.eq.s32.totalorder %s47, 1
      %p462 = scmp.ne.s32.totalorder %s457, %s459
      %p463 = scmp.eq.s32.totalorder %s47, 0
      %p464 = por %p462, %p463
      %p465 = scmp.ne.s32.totalorder %s457, %s459
      %p466 = scmp.eq.s32.totalorder %s52, 1
      %p467 = por %p465, %p466
      %p468 = scmp.ne.s32.totalorder %s459, %s460
      %p469 = scmp.eq.s32.totalorder %s52, 0
      %p470 = por %p468, %p469
      %p471 = scmp.ne.s32.totalorder %s459, %s460
      %p472 = scmp.eq.s32.totalorder %s53, 1
      %p473 = por %p471, %p472
      %p475 = scmp.ne.s32.totalorder %s460, %s474
      %p476 = scmp.eq.s32.totalorder %s53, 0
      %p477 = por %p475, %p476
      %s479 = sadd.s32 %s478, 1
      %p482 = scmp.eq.s32.totalorder %s47, 1
      %p483 = scmp.ne.s32.totalorder %s478, %s480
      %p484 = scmp.eq.s32.totalorder %s47, 0
      %p485 = por %p483, %p484
      %p486 = scmp.ne.s32.totalorder %s478, %s480
      %p487 = scmp.eq.s32.totalorder %s52, 1
      %p488 = por %p486, %p487
      %p489 = scmp.ne.s32.totalorder %s480, %s481
      %p490 = scmp.eq.s32.totalorder %s52, 0
      %p491 = por %p489, %p490
      %p492 = scmp.ne.s32.totalorder %s480, %s481
      %p493 = scmp.eq.s32.totalorder %s53, 1
      %p494 = por %p492, %p493
      %p496 = scmp.ne.s32.totalorder %s481, %s495
      %p497 = scmp.eq.s32.totalorder %s53, 0
      %p498 = por %p496, %p497
      %s500 = sadd.s32 %s499, 1
      %p503 = scmp.eq.s32.totalorder %s47, 1
      %p504 = scmp.ne.s32.totalorder %s499, %s501
      %p505 = scmp.eq.s32.totalorder %s47, 0
      %p506 = por %p504, %p505
      %p507 = scmp.ne.s32.totalorder %s499, %s501
      %p508 = scmp.eq.s32.totalorder %s52, 1
      %p509 = por %p507, %p508
      %p510 = scmp.ne.s32.totalorder %s501, %s502
      %p511 = scmp.eq.s32.totalorder %s52, 0
      %p512 = por %p510, %p511
      %p513 = scmp.ne.s32.totalorder %s501, %s502
      %p514 = scmp.eq.s32.totalorder %s53, 1
      %p515 = por %p513, %p514
      %p517 = scmp.ne.s32.totalorder %s502, %s516
      %p518 = scmp.eq.s32.totalorder %s53, 0
      %p519 = por %p517, %p518
      %s521 = sadd.s32 %s520, 1
      %p524 = scmp.eq.s32.totalorder %s47, 1
      %p525 = scmp.ne.s32.totalorder %s520, %s522
      %p526 = scmp.eq.s32.totalorder %s47, 0
      %p527 = por %p525, %p526
      %p528 = scmp.ne.s32.totalorder %s520, %s522
      %p529 = scmp.eq.s32.totalorder %s52, 1
      %p530 = por %p528, %p529
      %p531 = scmp.ne.s32.totalorder %s522, %s523
      %p532 = scmp.eq.s32.totalorder %s52, 0
      %p533 = por %p531, %p532
      %p534 = scmp.ne.s32.totalorder %s522, %s523
      %p535 = scmp.eq.s32.totalorder %s53, 1
      %p536 = por %p534, %p535
      %p538 = scmp.ne.s32.totalorder %s523, %s537
      %p539 = scmp.eq.s32.totalorder %s53, 0
      %p540 = por %p538, %p539
      %s541 = ssub.s32 %s54, %s66
      %s542 = ssub.s32 %s55, %s62
      %s543 = sor.u32 %s541, %s542
      %p544 = scmp.eq.s32.totalorder %s543, 0
      %s546 = sadd.s32 %s545, 1
      %s547 = scalar_select %p544, %s545, %s546
      %p550 = pneg %p544
      %p551 = scmp.eq.s32.totalorder %s47, 1
      %p552 = por %p550, %p551
      %p553 = scmp.ne.s32.totalorder %s545, %s548
      %p554 = scmp.eq.s32.totalorder %s47, 0
      %p555 = por %p553, %p554
      %p556 = scmp.ne.s32.totalorder %s545, %s548
      %p557 = scmp.eq.s32.totalorder %s52, 1
      %p558 = por %p556, %p557
      %p559 = scmp.ne.s32.totalorder %s548, %s549
      %p560 = scmp.eq.s32.totalorder %s52, 0
      %p561 = por %p559, %p560
      %p562 = scmp.ne.s32.totalorder %s548, %s549
      %p563 = scmp.eq.s32.totalorder %s53, 1
      %p564 = por %p562, %p563
      %p566 = scmp.ne.s32.totalorder %s549, %s565
      %p567 = scmp.eq.s32.totalorder %s53, 0
      %p568 = por %p566, %p567
      %s569 = ssub.s32 %s54, %s66
      %s570 = ssub.s32 %s55, %s62
      %s571 = sor.u32 %s569, %s570
      %p572 = scmp.eq.s32.totalorder %s571, 0
      %s574 = sadd.s32 %s573, 1
      %s575 = scalar_select %p572, %s573, %s574
      %p578 = pneg %p572
      %p579 = scmp.eq.s32.totalorder %s47, 1
      %p580 = por %p578, %p579
      %p581 = scmp.ne.s32.totalorder %s573, %s576
      %p582 = scmp.eq.s32.totalorder %s47, 0
      %p583 = por %p581, %p582
      %p584 = scmp.ne.s32.totalorder %s573, %s576
      %p585 = scmp.eq.s32.totalorder %s52, 1
      %p586 = por %p584, %p585
      %p587 = scmp.ne.s32.totalorder %s576, %s577
      %p588 = scmp.eq.s32.totalorder %s52, 0
      %p589 = por %p587, %p588
      %p590 = scmp.ne.s32.totalorder %s576, %s577
      %p591 = scmp.eq.s32.totalorder %s53, 1
      %p592 = por %p590, %p591
      %p594 = scmp.ne.s32.totalorder %s577, %s593
      %p595 = scmp.eq.s32.totalorder %s53, 0
      %p596 = por %p594, %p595
      %p597 = scmp.le.s32.totalorder 1, %s47
      %p598 = scmp.lt.s32.totalorder %s47, 3
      %p599 = pnand %p597, %p598
      %p600 = pneg %p599
      // Predicated region
      $region9: #{adv_transformer_decoder_layer_forward.1} parent=5 // pred_check
        _
      $region10: #{adv_transformer_decoder_layer_forward.1} parent=5 // pred_check_branch
        %602 = sbr.rel (%p599) target = $region12
      $region11: #{adv_transformer_decoder_layer_forward.1} parent=5 // pred_region
        %s603 = ssub.s32 %s47, 1
        // Predicated region
        $region13: #{adv_transformer_decoder_layer_forward.1} parent=11 // pred_check
          %p604 = pneg %p134
        $region14: #{adv_transformer_decoder_layer_forward.1} parent=11 // pred_check_branch
          %606 = sbr.rel (%p604) target = $region16
        $region15: #{adv_transformer_decoder_layer_forward.1} parent=11 // pred_region
          %s608 = ssub.s32 3072, 3072
          %609 = vsyncadd [#allocation6], %s608
          %s610 = sshll.u32 [#allocation7], 4
          %s611 = int_to_ptr.vmem [resolvable:$true] %s610
          %616 = dma.hbm_to_vmem [thread:$0]  %s2, 3072, %s611, [#allocation6], 192, 192, 12
        $region16: #{adv_transformer_decoder_layer_forward.1} parent=11 // pred_fallthru
          _
        // Predicated region
        $region17: #{adv_transformer_decoder_layer_forward.1} parent=11 // pred_check
          %p617 = pneg %p155
        $region18: #{adv_transformer_decoder_layer_forward.1} parent=11 // pred_check_branch
          %619 = sbr.rel (%p617) target = $region20
        $region19: #{adv_transformer_decoder_layer_forward.1} parent=11 // pred_region
          _
        $region20: #{adv_transformer_decoder_layer_forward.1} parent=11 // pred_fallthru
          _
        // Predicated region
        $region21: #{adv_transformer_decoder_layer_forward.1} parent=11 // pred_check
          %p620 = pneg %p176
        $region22: #{adv_transformer_decoder_layer_forward.1} parent=11 // pred_check_branch
          %622 = sbr.rel (%p620) target = $region24
        $region23: #{adv_transformer_decoder_layer_forward.1} parent=11 // pred_region
          %s624 = ssub.s32 1024, 1024
          %625 = vsyncadd [#allocation9], %s624
          %s626 = sshll.u32 [#allocation8], 4
          %s627 = int_to_ptr.vmem [resolvable:$true] %s626
          %632 = dma.hbm_to_vmem [thread:$0]  %s4, 1024, %s627, [#allocation9], 64, 64, 4
        $region24: #{adv_transformer_decoder_layer_forward.1} parent=11 // pred_fallthru
          _
        // Predicated region
        $region25: #{adv_transformer_decoder_layer_forward.1} parent=11 // pred_check
          %p633 = pneg %p197
        $region26: #{adv_transformer_decoder_layer_forward.1} parent=11 // pred_check_branch
          %635 = sbr.rel (%p633) target = $region28
        $region27: #{adv_transformer_decoder_layer_forward.1} parent=11 // pred_region
          _
        $region28: #{adv_transformer_decoder_layer_forward.1} parent=11 // pred_fallthru
          _
        // Predicated region
        $region29: #{adv_transformer_decoder_layer_forward.1} parent=11 // pred_check
          %p636 = pneg %p218
        $region30: #{adv_transformer_decoder_layer_forward.1} parent=11 // pred_check_branch
          %638 = sbr.rel (%p636) target = $region32
        $region31: #{adv_transformer_decoder_layer_forward.1} parent=11 // pred_region
          _
        $region32: #{adv_transformer_decoder_layer_forward.1} parent=11 // pred_fallthru
          _
        // Predicated region
        $region33: #{adv_transformer_decoder_layer_forward.1} parent=11 // pred_check
          %p639 = pneg %p239
        $region34: #{adv_transformer_decoder_layer_forward.1} parent=11 // pred_check_branch
          %641 = sbr.rel (%p639) target = $region36
        $region35: #{adv_transformer_decoder_layer_forward.1} parent=11 // pred_region
          _
        $region36: #{adv_transformer_decoder_layer_forward.1} parent=11 // pred_fallthru
          _
        // Predicated region
        $region37: #{adv_transformer_decoder_layer_forward.1} parent=11 // pred_check
          %p642 = pneg %p260
        $region38: #{adv_transformer_decoder_layer_forward.1} parent=11 // pred_check_branch
          %644 = sbr.rel (%p642) target = $region40
        $region39: #{adv_transformer_decoder_layer_forward.1} parent=11 // pred_region
          %s646 = ssub.s32 1024, 1024
          %647 = vsyncadd [#allocation9], %s646
          %s648 = sshll.u32 [#allocation10], 4
          %s649 = int_to_ptr.vmem [resolvable:$true] %s648
          %654 = dma.hbm_to_vmem [thread:$0]  %s8, 1024, %s649, [#allocation9], 64, 64, 4
        $region40: #{adv_transformer_decoder_layer_forward.1} parent=11 // pred_fallthru
          _
        // Predicated region
        $region41: #{adv_transformer_decoder_layer_forward.1} parent=11 // pred_check
          %p655 = pneg %p281
        $region42: #{adv_transformer_decoder_layer_forward.1} parent=11 // pred_check_branch
          %657 = sbr.rel (%p655) target = $region44
        $region43: #{adv_transformer_decoder_layer_forward.1} parent=11 // pred_region
          %s659 = ssub.s32 16, 16
          %660 = vsyncadd [#allocation12], %s659
          %s662 = sshll.u32 [#allocation11], 4
          %s663 = int_to_ptr.vmem [resolvable:$true] %s662
          %665 = dma.hbm_to_vmem [thread:$0]  %s9, 16, %s663, [#allocation12]
        $region44: #{adv_transformer_decoder_layer_forward.1} parent=11 // pred_fallthru
          _
        // Predicated region
        $region45: #{adv_transformer_decoder_layer_forward.1} parent=11 // pred_check
          %p666 = pneg %p302
        $region46: #{adv_transformer_decoder_layer_forward.1} parent=11 // pred_check_branch
          %668 = sbr.rel (%p666) target = $region48
        $region47: #{adv_transformer_decoder_layer_forward.1} parent=11 // pred_region
          %s670 = ssub.s32 2048, 2048
          %671 = vsyncadd [#allocation12], %s670
          %s672 = sshll.u32 [#allocation13], 4
          %s673 = int_to_ptr.vmem [resolvable:$true] %s672
          %678 = dma.hbm_to_vmem [thread:$0]  %s10, 2048, %s673, [#allocation12], 128, 128, 8
        $region48: #{adv_transformer_decoder_layer_forward.1} parent=11 // pred_fallthru
          _
        // Predicated region
        $region49: #{adv_transformer_decoder_layer_forward.1} parent=11 // pred_check
          %p679 = pneg %p323
        $region50: #{adv_transformer_decoder_layer_forward.1} parent=11 // pred_check_branch
          %681 = sbr.rel (%p679) target = $region52
        $region51: #{adv_transformer_decoder_layer_forward.1} parent=11 // pred_region
          _
        $region52: #{adv_transformer_decoder_layer_forward.1} parent=11 // pred_fallthru
          _
        // Predicated region
        $region53: #{adv_transformer_decoder_layer_forward.1} parent=11 // pred_check
          %p682 = pneg %p344
        $region54: #{adv_transformer_decoder_layer_forward.1} parent=11 // pred_check_branch
          %684 = sbr.rel (%p682) target = $region56
        $region55: #{adv_transformer_decoder_layer_forward.1} parent=11 // pred_region
          %s686 = ssub.s32 1024, 1024
          %687 = vsyncadd [#allocation15], %s686
          %s688 = sshll.u32 [#allocation14], 4
          %s689 = int_to_ptr.vmem [resolvable:$true] %s688
          %694 = dma.hbm_to_vmem [thread:$0]  %s12, 1024, %s689, [#allocation15], 64, 64, 4
        $region56: #{adv_transformer_decoder_layer_forward.1} parent=11 // pred_fallthru
          _
        // Predicated region
        $region57: #{adv_transformer_decoder_layer_forward.1} parent=11 // pred_check
          %p695 = pneg %p365
        $region58: #{adv_transformer_decoder_layer_forward.1} parent=11 // pred_check_branch
          %697 = sbr.rel (%p695) target = $region60
        $region59: #{adv_transformer_decoder_layer_forward.1} parent=11 // pred_region
          %s699 = ssub.s32 16, 16
          %700 = vsyncadd [#allocation15], %s699
          %s702 = sshll.u32 [#allocation16], 4
          %s703 = int_to_ptr.vmem [resolvable:$true] %s702
          %705 = dma.hbm_to_vmem [thread:$0]  %s13, 16, %s703, [#allocation15]
        $region60: #{adv_transformer_decoder_layer_forward.1} parent=11 // pred_fallthru
          _
        // Predicated region
        $region61: #{adv_transformer_decoder_layer_forward.1} parent=11 // pred_check
          %p706 = pneg %p386
        $region62: #{adv_transformer_decoder_layer_forward.1} parent=11 // pred_check_branch
          %708 = sbr.rel (%p706) target = $region64
        $region63: #{adv_transformer_decoder_layer_forward.1} parent=11 // pred_region
          %s710 = ssub.s32 16, 16
          %711 = vsyncadd [#allocation18], %s710
          %s713 = sshll.u32 [#allocation17], 4
          %s714 = int_to_ptr.vmem [resolvable:$true] %s713
          %716 = dma.hbm_to_vmem [thread:$0]  %s14, 16, %s714, [#allocation18]
        $region64: #{adv_transformer_decoder_layer_forward.1} parent=11 // pred_fallthru
          _
        // Predicated region
        $region65: #{adv_transformer_decoder_layer_forward.1} parent=11 // pred_check
          %p717 = pneg %p407
        $region66: #{adv_transformer_decoder_layer_forward.1} parent=11 // pred_check_branch
          %719 = sbr.rel (%p717) target = $region68
        $region67: #{adv_transformer_decoder_layer_forward.1} parent=11 // pred_region
          %s721 = ssub.s32 16, 16
          %722 = vsyncadd [#allocation18], %s721
          %s724 = sshll.u32 [#allocation19], 4
          %s725 = int_to_ptr.vmem [resolvable:$true] %s724
          %727 = dma.hbm_to_vmem [thread:$0]  %s15, 16, %s725, [#allocation18]
        $region68: #{adv_transformer_decoder_layer_forward.1} parent=11 // pred_fallthru
          _
        // Predicated region
        $region69: #{adv_transformer_decoder_layer_forward.1} parent=11 // pred_check
          %p728 = pneg %p428
        $region70: #{adv_transformer_decoder_layer_forward.1} parent=11 // pred_check_branch
          %730 = sbr.rel (%p728) target = $region72
        $region71: #{adv_transformer_decoder_layer_forward.1} parent=11 // pred_region
          %s732 = ssub.s32 2048, 2048
          %733 = vsyncadd [#allocation21], %s732
          %s734 = sshll.u32 [#allocation20], 4
          %s735 = int_to_ptr.vmem [resolvable:$true] %s734
          %740 = dma.hbm_to_vmem [thread:$0]  %s16, 2048, %s735, [#allocation21], 128, 128, 8
        $region72: #{adv_transformer_decoder_layer_forward.1} parent=11 // pred_fallthru
          _
        // Predicated region
        $region73: #{adv_transformer_decoder_layer_forward.1} parent=11 // pred_check
          %p741 = pneg %p449
        $region74: #{adv_transformer_decoder_layer_forward.1} parent=11 // pred_check_branch
          %743 = sbr.rel (%p741) target = $region76
        $region75: #{adv_transformer_decoder_layer_forward.1} parent=11 // pred_region
          _
        $region76: #{adv_transformer_decoder_layer_forward.1} parent=11 // pred_fallthru
          _
        // Predicated region
        $region77: #{adv_transformer_decoder_layer_forward.1} parent=11 // pred_check
          %p744 = pneg %p470
        $region78: #{adv_transformer_decoder_layer_forward.1} parent=11 // pred_check_branch
          %746 = sbr.rel (%p744) target = $region80
        $region79: #{adv_transformer_decoder_layer_forward.1} parent=11 // pred_region
          %s748 = ssub.s32 2048, 2048
          %749 = vsyncadd [#allocation21], %s748
          %s750 = sshll.u32 [#allocation22], 4
          %s751 = int_to_ptr.vmem [resolvable:$true] %s750
          %756 = dma.hbm_to_vmem [thread:$0]  %s18, 2048, %s751, [#allocation21], 64, 64, 4
        $region80: #{adv_transformer_decoder_layer_forward.1} parent=11 // pred_fallthru
          _
        // Predicated region
        $region81: #{adv_transformer_decoder_layer_forward.1} parent=11 // pred_check
          %p757 = pneg %p491
        $region82: #{adv_transformer_decoder_layer_forward.1} parent=11 // pred_check_branch
          %759 = sbr.rel (%p757) target = $region84
        $region83: #{adv_transformer_decoder_layer_forward.1} parent=11 // pred_region
          _
        $region84: #{adv_transformer_decoder_layer_forward.1} parent=11 // pred_fallthru
          _
        // Predicated region
        $region85: #{adv_transformer_decoder_layer_forward.1} parent=11 // pred_check
          %p760 = pneg %p512
        $region86: #{adv_transformer_decoder_layer_forward.1} parent=11 // pred_check_branch
          %762 = sbr.rel (%p760) target = $region88
        $region87: #{adv_transformer_decoder_layer_forward.1} parent=11 // pred_region
          _
        $region88: #{adv_transformer_decoder_layer_forward.1} parent=11 // pred_fallthru
          _
        // Predicated region
        $region89: #{adv_transformer_decoder_layer_forward.1} parent=11 // pred_check
          %p763 = pneg %p533
        $region90: #{adv_transformer_decoder_layer_forward.1} parent=11 // pred_check_branch
          %765 = sbr.rel (%p763) target = $region92
        $region91: #{adv_transformer_decoder_layer_forward.1} parent=11 // pred_region
          _
        $region92: #{adv_transformer_decoder_layer_forward.1} parent=11 // pred_fallthru
          _
      $region12: #{adv_transformer_decoder_layer_forward.1} parent=5 // pred_fallthru
        _
      %p766 = scmp.lt.s32.totalorder %s47, 2
      // Predicated region
      $region93: #{adv_transformer_decoder_layer_forward.1} parent=5 // pred_check
        %p767 = pneg %p766
      $region94: #{adv_transformer_decoder_layer_forward.1} parent=5 // pred_check_branch
        %769 = sbr.rel (%p767) target = $region96
      $region95: #{adv_transformer_decoder_layer_forward.1} parent=5 // pred_region
        // Predicated region
        $region97: #{adv_transformer_decoder_layer_forward.1} parent=95 // pred_check
          %p770 = pneg %p81
        $region98: #{adv_transformer_decoder_layer_forward.1} parent=95 // pred_check_branch
          %772 = sbr.rel (%p770) target = $region100
        $region99: #{adv_transformer_decoder_layer_forward.1} parent=95 // pred_region
          %s773 = sand.u32 %s71, 1
          %s774 = scalar_lea.sflag [#allocation3], %s773
          %s775 = sand.u32 %s71, 1
          %s776 = smul.addr %s775, 8
          %s777 = scalar_lea.vmem [#allocation2], %s776
          %s778 = smul.u32 2, %s55
          %s780 = ssub.s32 128, 128
          %781 = vsyncadd %s774, %s780
          %s782 = smul.addr %s54, 2
          %s783 = sadd.s32 %s778, %s782
          %s784 = smul.addr %s783, 64
          %s785 = scalar_lea.hbm %s0, %s784
          %s786 = sshll.u32 %s777, 4
          %s787 = int_to_ptr.vmem [resolvable:$true] %s786
          %792 = dma.hbm_to_vmem [thread:$0]  %s785, 128, %s787, %s774, 64, 64, 4
        $region100: #{adv_transformer_decoder_layer_forward.1} parent=95 // pred_fallthru
          _
        // Predicated region
        $region101: #{adv_transformer_decoder_layer_forward.1} parent=95 // pred_check
          %p793 = pneg %p107
        $region102: #{adv_transformer_decoder_layer_forward.1} parent=95 // pred_check_branch
          %795 = sbr.rel (%p793) target = $region104
        $region103: #{adv_transformer_decoder_layer_forward.1} parent=95 // pred_region
          %s796 = sand.u32 %s47, 1
          %s797 = scalar_lea.sflag [#allocation6], %s796
          %s798 = sand.u32 %s97, 1
          %s799 = smul.addr %s798, 8
          %s800 = scalar_lea.vmem [#allocation5], %s799
          %s802 = ssub.s32 128, 128
          %803 = vsyncadd %s797, %s802
          %s804 = smul.addr %s54, 2
          %s805 = smul.addr %s804, 64
          %s806 = scalar_lea.hbm %s1, %s805
          %s807 = sshll.u32 %s800, 4
          %s808 = int_to_ptr.vmem [resolvable:$true] %s807
          %813 = dma.hbm_to_vmem [thread:$0]  %s806, 128, %s808, %s797, 64, 64, 4
        $region104: #{adv_transformer_decoder_layer_forward.1} parent=95 // pred_fallthru
          _
      $region96: #{adv_transformer_decoder_layer_forward.1} parent=5 // pred_fallthru
        _
      %p814 = scmp.le.s32.totalorder 1, %s47
      %p815 = scmp.lt.s32.totalorder %s47, 3
      %p816 = pnand %p814, %p815
      %p817 = pneg %p816
      // Predicated region
      $region105: #{adv_transformer_decoder_layer_forward.1} parent=5 // pred_check
        _
      $region106: #{adv_transformer_decoder_layer_forward.1} parent=5 // pred_check_branch
        %819 = sbr.rel (%p816) target = $region108
      $region107: #{adv_transformer_decoder_layer_forward.1} parent=5 // pred_region
        %s820 = ssub.s32 %s47, 1
        %s821 = sand.u32 %s74, 1
        %s822 = scalar_lea.sflag [#allocation3], %s821
        %s823 = sand.u32 %s74, 1
        %s824 = smul.addr %s823, 8
        %s825 = scalar_lea.vmem [#allocation2], %s824
        // Predicated region
        $region109: #{adv_transformer_decoder_layer_forward.1} parent=107 // pred_check
          %p826 = pneg %p87
        $region110: #{adv_transformer_decoder_layer_forward.1} parent=107 // pred_check_branch
          %828 = sbr.rel (%p826) target = $region112
        $region111: #{adv_transformer_decoder_layer_forward.1} parent=107 // pred_region
          %829 = dma.done %s822, 128
        $region112: #{adv_transformer_decoder_layer_forward.1} parent=107 // pred_fallthru
          _
        %s830 = sand.u32 %s52, 1
        %s831 = scalar_lea.sflag [#allocation6], %s830
        %s832 = sand.u32 %s100, 1
        %s833 = smul.addr %s832, 8
        %s834 = scalar_lea.vmem [#allocation5], %s833
        // Predicated region
        $region113: #{adv_transformer_decoder_layer_forward.1} parent=107 // pred_check
          %p835 = pneg %p113
        $region114: #{adv_transformer_decoder_layer_forward.1} parent=107 // pred_check_branch
          %837 = sbr.rel (%p835) target = $region116
        $region115: #{adv_transformer_decoder_layer_forward.1} parent=107 // pred_region
          %838 = dma.done %s831, 128
        $region116: #{adv_transformer_decoder_layer_forward.1} parent=107 // pred_fallthru
          _
        // Predicated region
        $region117: #{adv_transformer_decoder_layer_forward.1} parent=107 // pred_check
          %p839 = pneg %p134
        $region118: #{adv_transformer_decoder_layer_forward.1} parent=107 // pred_check_branch
          %841 = sbr.rel (%p839) target = $region120
        $region119: #{adv_transformer_decoder_layer_forward.1} parent=107 // pred_region
          %842 = dma.done [#allocation6], 3072
        $region120: #{adv_transformer_decoder_layer_forward.1} parent=107 // pred_fallthru
          _
        // Predicated region
        $region121: #{adv_transformer_decoder_layer_forward.1} parent=107 // pred_check
          %p843 = pneg %p176
        $region122: #{adv_transformer_decoder_layer_forward.1} parent=107 // pred_check_branch
          %845 = sbr.rel (%p843) target = $region124
        $region123: #{adv_transformer_decoder_layer_forward.1} parent=107 // pred_region
          %846 = dma.done [#allocation9], 1024
        $region124: #{adv_transformer_decoder_layer_forward.1} parent=107 // pred_fallthru
          _
        // Predicated region
        $region125: #{adv_transformer_decoder_layer_forward.1} parent=107 // pred_check
          %p847 = pneg %p260
        $region126: #{adv_transformer_decoder_layer_forward.1} parent=107 // pred_check_branch
          %849 = sbr.rel (%p847) target = $region128
        $region127: #{adv_transformer_decoder_layer_forward.1} parent=107 // pred_region
          %850 = dma.done [#allocation9], 1024
        $region128: #{adv_transformer_decoder_layer_forward.1} parent=107 // pred_fallthru
          _
        // Predicated region
        $region129: #{adv_transformer_decoder_layer_forward.1} parent=107 // pred_check
          %p851 = pneg %p281
        $region130: #{adv_transformer_decoder_layer_forward.1} parent=107 // pred_check_branch
          %853 = sbr.rel (%p851) target = $region132
        $region131: #{adv_transformer_decoder_layer_forward.1} parent=107 // pred_region
          %854 = dma.done [#allocation12], 16
        $region132: #{adv_transformer_decoder_layer_forward.1} parent=107 // pred_fallthru
          _
        // Predicated region
        $region133: #{adv_transformer_decoder_layer_forward.1} parent=107 // pred_check
          %p855 = pneg %p302
        $region134: #{adv_transformer_decoder_layer_forward.1} parent=107 // pred_check_branch
          %857 = sbr.rel (%p855) target = $region136
        $region135: #{adv_transformer_decoder_layer_forward.1} parent=107 // pred_region
          %858 = dma.done [#allocation12], 2048
        $region136: #{adv_transformer_decoder_layer_forward.1} parent=107 // pred_fallthru
          _
        // Predicated region
        $region137: #{adv_transformer_decoder_layer_forward.1} parent=107 // pred_check
          %p859 = pneg %p344
        $region138: #{adv_transformer_decoder_layer_forward.1} parent=107 // pred_check_branch
          %861 = sbr.rel (%p859) target = $region140
        $region139: #{adv_transformer_decoder_layer_forward.1} parent=107 // pred_region
          %862 = dma.done [#allocation15], 1024
        $region140: #{adv_transformer_decoder_layer_forward.1} parent=107 // pred_fallthru
          _
        // Predicated region
        $region141: #{adv_transformer_decoder_layer_forward.1} parent=107 // pred_check
          %p863 = pneg %p365
        $region142: #{adv_transformer_decoder_layer_forward.1} parent=107 // pred_check_branch
          %865 = sbr.rel (%p863) target = $region144
        $region143: #{adv_transformer_decoder_layer_forward.1} parent=107 // pred_region
          %866 = dma.done [#allocation15], 16
        $region144: #{adv_transformer_decoder_layer_forward.1} parent=107 // pred_fallthru
          _
        // Predicated region
        $region145: #{adv_transformer_decoder_layer_forward.1} parent=107 // pred_check
          %p867 = pneg %p386
        $region146: #{adv_transformer_decoder_layer_forward.1} parent=107 // pred_check_branch
          %869 = sbr.rel (%p867) target = $region148
        $region147: #{adv_transformer_decoder_layer_forward.1} parent=107 // pred_region
          %870 = dma.done [#allocation18], 16
        $region148: #{adv_transformer_decoder_layer_forward.1} parent=107 // pred_fallthru
          _
        // Predicated region
        $region149: #{adv_transformer_decoder_layer_forward.1} parent=107 // pred_check
          %p871 = pneg %p407
        $region150: #{adv_transformer_decoder_layer_forward.1} parent=107 // pred_check_branch
          %873 = sbr.rel (%p871) target = $region152
        $region151: #{adv_transformer_decoder_layer_forward.1} parent=107 // pred_region
          %874 = dma.done [#allocation18], 16
        $region152: #{adv_transformer_decoder_layer_forward.1} parent=107 // pred_fallthru
          _
        // Predicated region
        $region153: #{adv_transformer_decoder_layer_forward.1} parent=107 // pred_check
          %p875 = pneg %p428
        $region154: #{adv_transformer_decoder_layer_forward.1} parent=107 // pred_check_branch
          %877 = sbr.rel (%p875) target = $region156
        $region155: #{adv_transformer_decoder_layer_forward.1} parent=107 // pred_region
          %878 = dma.done [#allocation21], 2048
        $region156: #{adv_transformer_decoder_layer_forward.1} parent=107 // pred_fallthru
          _
        // Predicated region
        $region157: #{adv_transformer_decoder_layer_forward.1} parent=107 // pred_check
          %p879 = pneg %p470
        $region158: #{adv_transformer_decoder_layer_forward.1} parent=107 // pred_check_branch
          %881 = sbr.rel (%p879) target = $region160
        $region159: #{adv_transformer_decoder_layer_forward.1} parent=107 // pred_region
          %882 = dma.done [#allocation21], 2048
        $region160: #{adv_transformer_decoder_layer_forward.1} parent=107 // pred_fallthru
          _
        %s883 = sand.u32 %s74, 1
        %s884 = scalar_lea.sflag [#allocation3], %s883
        %s885 = sand.u32 %s74, 1
        %s886 = smul.addr %s885, 8
        %s887 = scalar_lea.vmem [#allocation2], %s886
        %p888 = pneg %p87
        %p889 = pneg %p84
        %s890 = sand.u32 %s52, 1
        %s891 = scalar_lea.sflag [#allocation6], %s890
        %s892 = sand.u32 %s100, 1
        %s893 = smul.addr %s892, 8
        %s894 = scalar_lea.vmem [#allocation5], %s893
        %p895 = pneg %p113
        %p896 = pneg %p110
        %p897 = pneg %p134
        %p898 = pneg %p131
        %p899 = pneg %p155
        %p900 = pneg %p152
        %p901 = pneg %p176
        %p902 = pneg %p173
        %p903 = pneg %p197
        %p904 = pneg %p194
        %p905 = pneg %p218
        %p906 = pneg %p215
        %p907 = pneg %p239
        %p908 = pneg %p236
        %p909 = pneg %p260
        %p910 = pneg %p257
        %p911 = pneg %p281
        %p912 = pneg %p278
        %p913 = pneg %p302
        %p914 = pneg %p299
        %p915 = pneg %p323
        %p916 = pneg %p320
        %p917 = pneg %p344
        %p918 = pneg %p341
        %p919 = pneg %p365
        %p920 = pneg %p362
        %p921 = pneg %p386
        %p922 = pneg %p383
        %p923 = pneg %p407
        %p924 = pneg %p404
        %p925 = pneg %p428
        %p926 = pneg %p425
        %p927 = pneg %p449
        %p928 = pneg %p446
        %p929 = pneg %p470
        %p930 = pneg %p467
        %p931 = pneg %p491
        %p932 = pneg %p488
        %p933 = pneg %p512
        %p934 = pneg %p509
        %p935 = pneg %p533
        %p936 = pneg %p530
        %p937 = pneg %p561
        %p938 = pneg %p558
        %s939 = sand.u32 %s548, 1
        %s940 = scalar_lea.sflag [#allocation4], %s939
        %s941 = sand.u32 %s548, 1
        %s942 = smul.addr %s941, 8
        %s943 = scalar_lea.vmem [#allocation23], %s942
        %p944 = pneg %p589
        %p945 = pneg %p586
        %s946 = sand.u32 %s576, 1
        %s947 = scalar_lea.sflag [#allocation25], %s946
        %s948 = sand.u32 %s576, 1
        %s949 = smul.addr %s948, 16
        %s950 = scalar_lea.vmem [#allocation24], %s949
        %s951 = smul.u32 2, %s57
        %s952 = smul.u32 2, %s57
        %s953 = smul.u32 2, %s57
        %v955 = vld [vmem:[%s825] sm:$0xf]
        %v956 = vld [vmem:[%s825 + $0x4] sm:$0xf]
        %v957 = vunpack.c.l.bf16 %v955
        %v958 = vunpack.c.l.bf16 %v956
        %v959 = vld [vmem:[%s834] sm:$0xf]
        %v960 = vld [vmem:[%s834 + $0x4] sm:$0xf]
        %v961 = vld [vmem:[#allocation7] sm:$0xff]
        %v962 = vld [vmem:[#allocation7 + $0x8] sm:$0xf]
        %v963 = vld [vmem:[#allocation7 + $0xc] sm:$0xff]
        %v964 = vld [vmem:[#allocation7 + $0x14] sm:$0xf]
        %v965 = vld [vmem:[#allocation7 + $0x18] sm:$0xff]
        %v966 = vld [vmem:[#allocation7 + $0x20] sm:$0xf]
        %v967 = vld [vmem:[#allocation7 + $0x24] sm:$0xff]
        %v968 = vld [vmem:[#allocation7 + $0x2c] sm:$0xf]
        %v969 = vld [vmem:[#allocation7 + $0x30] sm:$0xff]
        %v970 = vld [vmem:[#allocation7 + $0x38] sm:$0xf]
        %v971 = vld [vmem:[#allocation7 + $0x3c] sm:$0xff]
        %v972 = vld [vmem:[#allocation7 + $0x44] sm:$0xf]
        %v973 = vld [vmem:[#allocation7 + $0x48] sm:$0xff]
        %v974 = vld [vmem:[#allocation7 + $0x50] sm:$0xf]
        %v975 = vld [vmem:[#allocation7 + $0x54] sm:$0xff]
        %v976 = vld [vmem:[#allocation7 + $0x5c] sm:$0xf]
        %v977 = vld [vmem:[#allocation7 + $0x60] sm:$0xff]
        %v978 = vld [vmem:[#allocation7 + $0x68] sm:$0xf]
        %v979 = vld [vmem:[#allocation7 + $0x6c] sm:$0xff]
        %v980 = vld [vmem:[#allocation7 + $0x74] sm:$0xf]
        %v981 = vld [vmem:[#allocation7 + $0x78] sm:$0xff]
        %v982 = vld [vmem:[#allocation7 + $0x80] sm:$0xf]
        %v983 = vld [vmem:[#allocation7 + $0x84] sm:$0xff]
        %v984 = vld [vmem:[#allocation7 + $0x8c] sm:$0xf]
        %v985 = vld [vmem:[#allocation7 + $0x90] sm:$0xff]
        %v986 = vld [vmem:[#allocation7 + $0x98] sm:$0xf]
        %v987 = vld [vmem:[#allocation7 + $0x9c] sm:$0xff]
        %v988 = vld [vmem:[#allocation7 + $0xa4] sm:$0xf]
        %v989 = vld [vmem:[#allocation7 + $0xa8] sm:$0xff]
        %v990 = vld [vmem:[#allocation7 + $0xb0] sm:$0xf]
        %v991 = vld [vmem:[#allocation7 + $0xb4] sm:$0xff]
        %v992 = vld [vmem:[#allocation7 + $0xbc] sm:$0xf]
        %v993 = vld [vmem:[%s3] sm:$0x7]
        %v995 = vlaneseq
        %v996 = vshrl.u32 %v995, 7
        %v997 = vsub.s32 0, %v996
        %v998 = vrot.slane %v993, %v997
        %v999 = vlaneseq
        %v1000 = vshrl.u32 %v999, 7
        %v1001 = vsub.s32 1, %v1000
        %v1002 = vrot.slane %v993, %v1001
        %v1003 = vlaneseq
        %v1004 = vshrl.u32 %v1003, 7
        %v1005 = vsub.s32 2, %v1004
        %v1006 = vrot.slane %v993, %v1005
        %v1012 = vunpack.c.l.b16 %v955
        %v1013 = vunpack.c.l.b16 %v956
        %v1014 = vpack.c.b16 %v1013, %v1012
        %v1048 = vunpack.c.l.b16 %v961
        %v1049 = vunpack.c.h.b16 %v961
        %v1050 = vunpack.c.l.b16 %v962
        %v1051 = vunpack.c.l.b16 %v963
        %v1052 = vunpack.c.h.b16 %v963
        %v1053 = vunpack.c.l.b16 %v964
        %v1054 = vunpack.c.l.b16 %v965
        %v1055 = vunpack.c.h.b16 %v965
        %v1056 = vunpack.c.l.b16 %v966
        %v1057 = vunpack.c.l.b16 %v967
        %v1058 = vunpack.c.h.b16 %v967
        %v1059 = vunpack.c.l.b16 %v968
        %v1060 = vunpack.c.l.b16 %v969
        %v1061 = vunpack.c.h.b16 %v969
        %v1062 = vunpack.c.l.b16 %v970
        %v1063 = vunpack.c.l.b16 %v971
        %v1064 = vunpack.c.h.b16 %v971
        %v1065 = vunpack.c.l.b16 %v972
        %v1066 = vunpack.c.l.b16 %v973
        %v1067 = vunpack.c.h.b16 %v973
        %v1068 = vunpack.c.l.b16 %v974
        %v1069 = vunpack.c.l.b16 %v975
        %v1070 = vunpack.c.h.b16 %v975
        %v1071 = vunpack.c.l.b16 %v976
        %v1072 = vunpack.c.l.b16 %v977
        %v1073 = vunpack.c.h.b16 %v977
        %v1074 = vunpack.c.l.b16 %v978
        %v1075 = vunpack.c.l.b16 %v979
        %v1076 = vunpack.c.h.b16 %v979
        %v1077 = vunpack.c.l.b16 %v980
        %v1078 = vunpack.c.l.b16 %v981
        %v1079 = vunpack.c.h.b16 %v981
        %v1080 = vunpack.c.l.b16 %v982
        %v1081 = vunpack.c.l.b16 %v983
        %v1082 = vunpack.c.h.b16 %v983
        %v1083 = vunpack.c.l.b16 %v984
        %v1084 = vunpack.c.l.b16 %v985
        %v1085 = vunpack.c.h.b16 %v985
        %v1086 = vunpack.c.l.b16 %v986
        %v1087 = vunpack.c.l.b16 %v987
        %v1088 = vunpack.c.h.b16 %v987
        %v1089 = vunpack.c.l.b16 %v988
        %v1090 = vunpack.c.l.b16 %v989
        %v1091 = vunpack.c.h.b16 %v989
        %v1092 = vunpack.c.l.b16 %v990
        %v1093 = vunpack.c.l.b16 %v991
        %v1094 = vunpack.c.h.b16 %v991
        %v1095 = vunpack.c.l.b16 %v992
        %v1096 = vpack.c.b16 %v1051, %v1048
        %v1097 = vpack.c.b16 %v1052, %v1049
        %v1098 = vpack.c.b16 %v1053, %v1050
        %v1099 = vpack.c.b16 %v1057, %v1054
        %v1100 = vpack.c.b16 %v1058, %v1055
        %v1101 = vpack.c.b16 %v1059, %v1056
        %v1102 = vpack.c.b16 %v1063, %v1060
        %v1103 = vpack.c.b16 %v1064, %v1061
        %v1104 = vpack.c.b16 %v1065, %v1062
        %v1105 = vpack.c.b16 %v1069, %v1066
        %v1106 = vpack.c.b16 %v1070, %v1067
        %v1107 = vpack.c.b16 %v1071, %v1068
        %v1108 = vpack.c.b16 %v1075, %v1072
        %v1109 = vpack.c.b16 %v1076, %v1073
        %v1110 = vpack.c.b16 %v1077, %v1074
        %v1111 = vpack.c.b16 %v1081, %v1078
        %v1112 = vpack.c.b16 %v1082, %v1079
        %v1113 = vpack.c.b16 %v1083, %v1080
        %v1114 = vpack.c.b16 %v1087, %v1084
        %v1115 = vpack.c.b16 %v1088, %v1085
        %v1116 = vpack.c.b16 %v1089, %v1086
        %v1117 = vpack.c.b16 %v1093, %v1090
        %v1118 = vpack.c.b16 %v1094, %v1091
        %v1119 = vpack.c.b16 %v1095, %v1092
        %1144 = vmatprep.subr.bf16.mxu0 %v1118
        %1145 = vmatpush1.bf16.msra.mxu0 %v1117
        %1146 = vmatprep.subr.bf16.mxu0 %v1115
        %1147 = vmatpush1.bf16.msra.mxu0 %v1114
        %1148 = vmatprep.subr.bf16.mxu0 %v1112
        %1149 = vmatpush1.bf16.msra.mxu0 %v1111
        %1150 = vmatprep.subr.bf16.mxu0 %v1109
        %1151 = vmatpush1.bf16.msra.mxu0 %v1108
        %1152 = vmatprep.subr.bf16.mxu0 %v1106
        %1153 = vmatpush1.bf16.msra.mxu0 %v1105
        %1154 = vmatprep.subr.bf16.mxu0 %v1103
        %1155 = vmatpush1.bf16.msra.mxu0 %v1102
        %1156 = vmatprep.subr.bf16.mxu0 %v1100
        %1157 = vmatpush1.bf16.msra.mxu0 %v1099
        %1158 = vmatprep.subr.bf16.mxu0 %v1097
        %1159 = vmatpush1.bf16.msra.mxu0 %v1096
        %1160 = vmatprep.subr.bf16.mxu0 0
        %1161 = vmatpush2.bf16.msra.mxu0 0
        %1162 = vmatprep.subr.bf16.mxu0 0
        %1163 = vmatpush2.bf16.msra.mxu0 0
        %1164 = vmatprep.subr.bf16.mxu0 0
        %1165 = vmatpush2.bf16.msra.mxu0 0
        %1166 = vmatprep.subr.bf16.mxu0 0
        %1167 = vmatpush2.bf16.msra.mxu0 0
        %1168 = vmatprep.subr.bf16.mxu0 0
        %1169 = vmatpush2.bf16.msra.mxu0 0
        %1170 = vmatprep.subr.bf16.mxu0 0
        %1171 = vmatpush2.bf16.msra.mxu0 0
        %1172 = vmatprep.subr.bf16.mxu0 0
        %1173 = vmatpush2.bf16.msra.mxu0 0
        %1174 = vmatprep.subr.bf16.mxu0 0
        %1175 = vmatpush2.bf16.msra.mxu0 0
        %1176 = vmatprep.mubr.bf16.mxu0 0
        %1177 = vmatmul.mubr.bf16.gmra.mxu0 %v1014
        %v1178 = vpop.f32.mrf.mxu0
        %v1179 = vadd.f32 %v998, %v1178
        %v1180 = vpop.f32.mrf.mxu0
        %v1181 = vadd.f32 %v1002, %v1180
        %v1182 = vpop.f32.mrf.mxu0
        %v1183 = vadd.f32 %v998, %v1182
        %v1184 = vpop.f32.mrf.mxu0
        %v1185 = vadd.f32 %v1002, %v1184
        %1186 = vdwg.mxu0
        %1187 = vmatprep.subr.bf16.mxu0 0
        %1188 = vmatpush1.bf16.msra.mxu0 %v1119
        %1189 = vmatprep.subr.bf16.mxu0 0
        %1190 = vmatpush1.bf16.msra.mxu0 %v1116
        %1191 = vmatprep.subr.bf16.mxu0 0
        %1192 = vmatpush1.bf16.msra.mxu0 %v1113
        %1193 = vmatprep.subr.bf16.mxu0 0
        %1194 = vmatpush1.bf16.msra.mxu0 %v1110
        %1195 = vmatprep.subr.bf16.mxu0 0
        %1196 = vmatpush1.bf16.msra.mxu0 %v1107
        %1197 = vmatprep.subr.bf16.mxu0 0
        %1198 = vmatpush1.bf16.msra.mxu0 %v1104
        %1199 = vmatprep.subr.bf16.mxu0 0
        %1200 = vmatpush1.bf16.msra.mxu0 %v1101
        %1201 = vmatprep.subr.bf16.mxu0 0
        %1202 = vmatpush1.bf16.msra.mxu0 %v1098
        %1203 = vmatprep.subr.bf16.mxu0 0
        %1204 = vmatpush2.bf16.msra.mxu0 0
        %1205 = vmatprep.subr.bf16.mxu0 0
        %1206 = vmatpush2.bf16.msra.mxu0 0
        %1207 = vmatprep.subr.bf16.mxu0 0
        %1208 = vmatpush2.bf16.msra.mxu0 0
        %1209 = vmatprep.subr.bf16.mxu0 0
        %1210 = vmatpush2.bf16.msra.mxu0 0
        %1211 = vmatprep.subr.bf16.mxu0 0
        %1212 = vmatpush2.bf16.msra.mxu0 0
        %1213 = vmatprep.subr.bf16.mxu0 0
        %1214 = vmatpush2.bf16.msra.mxu0 0
        %1215 = vmatprep.subr.bf16.mxu0 0
        %1216 = vmatpush2.bf16.msra.mxu0 0
        %1217 = vmatprep.subr.bf16.mxu0 0
        %1218 = vmatpush2.bf16.msra.mxu0 0
        %1219 = vmatprep.mubr.bf16.mxu0 0
        %1220 = vmatmul.mubr.bf16.gmra.mxu0 %v1014
        %v1221 = vpop.f32.mrf.mxu0
        %v1222 = vadd.f32 %v1006, %v1221
        %v1223 = vpop.f32.mrf.mxu0
        %v1224 = vpop.f32.mrf.mxu0
        %v1225 = vadd.f32 %v1006, %v1224
        %v1226 = vpop.f32.mrf.mxu0
        %1227 = vdwg.mxu0
        %v1228 = vpack.c.bf16 %v1183, %v1179
        %1230 = vrot.lane.b32.xlu0 %v1228, 96
        %v1231 = vpop.permute.xlu0 %1230
        %1232 = vrot.lane.b32.xlu0 %v1228, 64
        %v1233 = vpop.permute.xlu0 %1232
        %1234 = vrot.lane.b32.xlu0 %v1228, 32
        %v1235 = vpop.permute.xlu0 %1234
        %v1238 = vpack.i.b16 %v1231, %v1228
        %v1240 = vshrl.u32 %v1228, 16
        %v1241 = vshrl.u32 %v1231, 16
        %v1242 = vpack.i.b16 %v1241, %v1240
        %v1246 = vpack.i.b16 %v1235, %v1233
        %v1248 = vshrl.u32 %v1233, 16
        %v1249 = vshrl.u32 %v1235, 16
        %v1250 = vpack.i.b16 %v1249, %v1248
        %v1253 = vpack.i.b16 0, 0
        %v1255 = vshrl.u32 0, 16
        %v1256 = vpack.i.b16 %v1255, %v1255
        %v1258 = vcombine.high %v1238, %v1253
        %v1260 = vunpack.c.l.s4 1983009808
        %v1261 = vunpack.c.0.s8 %v1260
        %v1262 = vlaneseq
        %v1263 = vshrl.u32 %v1262, 7
        %v1264 = vsub.s32 %v1261, %v1263
        %v1265 = vrot.slane %v1238, %v1264
        %v1267 = vunpack.c.l.s4 1983009808
        %v1268 = vunpack.c.0.s8 %v1267
        %v1269 = vlaneseq
        %v1270 = vshrl.u32 %v1269, 7
        %v1271 = vsub.s32 %v1268, %v1270
        %v1272 = vrot.slane %v1258, %v1271
        %v1273 = vcombine.high %v1246, %v1253
        %v1275 = vunpack.c.l.s4 1983009808
        %v1276 = vunpack.c.0.s8 %v1275
        %v1277 = vlaneseq
        %v1278 = vshrl.u32 %v1277, 7
        %v1279 = vsub.s32 %v1276, %v1278
        %v1280 = vrot.slane %v1246, %v1279
        %v1282 = vunpack.c.l.s4 1983009808
        %v1283 = vunpack.c.0.s8 %v1282
        %v1284 = vlaneseq
        %v1285 = vshrl.u32 %v1284, 7
        %v1286 = vsub.s32 %v1283, %v1285
        %v1287 = vrot.slane %v1273, %v1286
        %v1288 = vcombine.low %v1265, %v1280
        %v1289 = vcombine.high %v1265, %v1280
        %v1291 = vunpack.c.l.s4 1934713408
        %v1292 = vunpack.c.0.s8 %v1291
        %v1293 = vlaneseq
        %v1294 = vshrl.u32 %v1293, 7
        %v1295 = vsub.s32 %v1292, %v1294
        %v1296 = vrot.slane %v1288, %v1295
        %v1298 = vunpack.c.l.s4 1934713408
        %v1299 = vunpack.c.0.s8 %v1298
        %v1300 = vlaneseq
        %v1301 = vshrl.u32 %v1300, 7
        %v1302 = vsub.s32 %v1299, %v1301
        %v1303 = vrot.slane %v1289, %v1302
        %v1304 = vcombine.low %v1272, %v1287
        %v1305 = vcombine.high %v1272, %v1287
        %v1307 = vunpack.c.l.s4 1934713408
        %v1308 = vunpack.c.0.s8 %v1307
        %v1309 = vlaneseq
        %v1310 = vshrl.u32 %v1309, 7
        %v1311 = vsub.s32 %v1308, %v1310
        %v1312 = vrot.slane %v1304, %v1311
        %v1314 = vunpack.c.l.s4 1934713408
        %v1315 = vunpack.c.0.s8 %v1314
        %v1316 = vlaneseq
        %v1317 = vshrl.u32 %v1316, 7
        %v1318 = vsub.s32 %v1315, %v1317
        %v1319 = vrot.slane %v1305, %v1318
        %v1320 = vcombine.high %v1296, 0
        %v1321 = vcombine.high %v1303, 0
        %v1322 = vcombine.high %v1312, 0
        %v1323 = vcombine.high %v1319, 0
        %v1324 = vcombine.high %v1242, %v1256
        %v1326 = vunpack.c.l.s4 1983009808
        %v1327 = vunpack.c.0.s8 %v1326
        %v1328 = vlaneseq
        %v1329 = vshrl.u32 %v1328, 7
        %v1330 = vsub.s32 %v1327, %v1329
        %v1331 = vrot.slane %v1242, %v1330
        %v1333 = vunpack.c.l.s4 1983009808
        %v1334 = vunpack.c.0.s8 %v1333
        %v1335 = vlaneseq
        %v1336 = vshrl.u32 %v1335, 7
        %v1337 = vsub.s32 %v1334, %v1336
        %v1338 = vrot.slane %v1324, %v1337
        %v1339 = vcombine.high %v1250, %v1256
        %v1341 = vunpack.c.l.s4 1983009808
        %v1342 = vunpack.c.0.s8 %v1341
        %v1343 = vlaneseq
        %v1344 = vshrl.u32 %v1343, 7
        %v1345 = vsub.s32 %v1342, %v1344
        %v1346 = vrot.slane %v1250, %v1345
        %v1348 = vunpack.c.l.s4 1983009808
        %v1349 = vunpack.c.0.s8 %v1348
        %v1350 = vlaneseq
        %v1351 = vshrl.u32 %v1350, 7
        %v1352 = vsub.s32 %v1349, %v1351
        %v1353 = vrot.slane %v1339, %v1352
        %v1354 = vcombine.low %v1331, %v1346
        %v1355 = vcombine.high %v1331, %v1346
        %v1357 = vunpack.c.l.s4 1934713408
        %v1358 = vunpack.c.0.s8 %v1357
        %v1359 = vlaneseq
        %v1360 = vshrl.u32 %v1359, 7
        %v1361 = vsub.s32 %v1358, %v1360
        %v1362 = vrot.slane %v1354, %v1361
        %v1364 = vunpack.c.l.s4 1934713408
        %v1365 = vunpack.c.0.s8 %v1364
        %v1366 = vlaneseq
        %v1367 = vshrl.u32 %v1366, 7
        %v1368 = vsub.s32 %v1365, %v1367
        %v1369 = vrot.slane %v1355, %v1368
        %v1370 = vcombine.low %v1338, %v1353
        %v1371 = vcombine.high %v1338, %v1353
        %v1373 = vunpack.c.l.s4 1934713408
        %v1374 = vunpack.c.0.s8 %v1373
        %v1375 = vlaneseq
        %v1376 = vshrl.u32 %v1375, 7
        %v1377 = vsub.s32 %v1374, %v1376
        %v1378 = vrot.slane %v1370, %v1377
        %v1380 = vunpack.c.l.s4 1934713408
        %v1381 = vunpack.c.0.s8 %v1380
        %v1382 = vlaneseq
        %v1383 = vshrl.u32 %v1382, 7
        %v1384 = vsub.s32 %v1381, %v1383
        %v1385 = vrot.slane %v1371, %v1384
        %v1386 = vcombine.high %v1362, 0
        %v1387 = vcombine.high %v1369, 0
        %v1388 = vcombine.high %v1378, 0
        %v1389 = vcombine.high %v1385, 0
        %v1390 = vcombine.low %v1296, %v1303
        %v1392 = vunpack.c.l.s4 1983009808
        %v1393 = vunpack.c.0.s8 %v1392
        %v1394 = vlaneseq
        %v1395 = vshrl.u32 %v1394, 7
        %v1396 = vsub.s32 %v1393, %v1395
        %v1397 = vrot.slane %v1390, %v1396
        %v1398 = vcombine.low %v1320, %v1321
        %v1400 = vunpack.c.l.s4 1983009808
        %v1401 = vunpack.c.0.s8 %v1400
        %v1402 = vlaneseq
        %v1403 = vshrl.u32 %v1402, 7
        %v1404 = vsub.s32 %v1401, %v1403
        %v1405 = vrot.slane %v1398, %v1404
        %v1406 = vcombine.low %v1312, %v1319
        %v1408 = vunpack.c.l.s4 1983009808
        %v1409 = vunpack.c.0.s8 %v1408
        %v1410 = vlaneseq
        %v1411 = vshrl.u32 %v1410, 7
        %v1412 = vsub.s32 %v1409, %v1411
        %v1413 = vrot.slane %v1406, %v1412
        %v1414 = vcombine.low %v1322, %v1323
        %v1416 = vunpack.c.l.s4 1983009808
        %v1417 = vunpack.c.0.s8 %v1416
        %v1418 = vlaneseq
        %v1419 = vshrl.u32 %v1418, 7
        %v1420 = vsub.s32 %v1417, %v1419
        %v1421 = vrot.slane %v1414, %v1420
        %v1422 = vcombine.low %v1397, %v1405
        %v1424 = vunpack.c.l.s4 1934713408
        %v1425 = vunpack.c.0.s8 %v1424
        %v1426 = vlaneseq
        %v1427 = vshrl.u32 %v1426, 7
        %v1428 = vsub.s32 %v1425, %v1427
        %v1429 = vrot.slane %v1422, %v1428
        %v1430 = vcombine.low %v1413, %v1421
        %v1432 = vunpack.c.l.s4 1934713408
        %v1433 = vunpack.c.0.s8 %v1432
        %v1434 = vlaneseq
        %v1435 = vshrl.u32 %v1434, 7
        %v1436 = vsub.s32 %v1433, %v1435
        %v1437 = vrot.slane %v1430, %v1436
        %v1438 = vcombine.low %v1429, %v1437
        %v1439 = vcombine.high %v1429, %v1437
        %v1440 = vcombine.low %v1362, %v1369
        %v1442 = vunpack.c.l.s4 1983009808
        %v1443 = vunpack.c.0.s8 %v1442
        %v1444 = vlaneseq
        %v1445 = vshrl.u32 %v1444, 7
        %v1446 = vsub.s32 %v1443, %v1445
        %v1447 = vrot.slane %v1440, %v1446
        %v1448 = vcombine.low %v1386, %v1387
        %v1450 = vunpack.c.l.s4 1983009808
        %v1451 = vunpack.c.0.s8 %v1450
        %v1452 = vlaneseq
        %v1453 = vshrl.u32 %v1452, 7
        %v1454 = vsub.s32 %v1451, %v1453
        %v1455 = vrot.slane %v1448, %v1454
        %v1456 = vcombine.low %v1378, %v1385
        %v1458 = vunpack.c.l.s4 1983009808
        %v1459 = vunpack.c.0.s8 %v1458
        %v1460 = vlaneseq
        %v1461 = vshrl.u32 %v1460, 7
        %v1462 = vsub.s32 %v1459, %v1461
        %v1463 = vrot.slane %v1456, %v1462
        %v1464 = vcombine.low %v1388, %v1389
        %v1466 = vunpack.c.l.s4 1983009808
        %v1467 = vunpack.c.0.s8 %v1466
        %v1468 = vlaneseq
        %v1469 = vshrl.u32 %v1468, 7
        %v1470 = vsub.s32 %v1467, %v1469
        %v1471 = vrot.slane %v1464, %v1470
        %v1472 = vcombine.low %v1447, %v1455
        %v1474 = vunpack.c.l.s4 1934713408
        %v1475 = vunpack.c.0.s8 %v1474
        %v1476 = vlaneseq
        %v1477 = vshrl.u32 %v1476, 7
        %v1478 = vsub.s32 %v1475, %v1477
        %v1479 = vrot.slane %v1472, %v1478
        %v1480 = vcombine.low %v1463, %v1471
        %v1482 = vunpack.c.l.s4 1934713408
        %v1483 = vunpack.c.0.s8 %v1482
        %v1484 = vlaneseq
        %v1485 = vshrl.u32 %v1484, 7
        %v1486 = vsub.s32 %v1483, %v1485
        %v1487 = vrot.slane %v1480, %v1486
        %v1488 = vcombine.low %v1479, %v1487
        %v1489 = vcombine.high %v1479, %v1487
        %v1492 = vpack.i.b16 %v1488, %v1438
        %v1493 = vshrl.u32 %v1438, 16
        %v1494 = vshrl.u32 %v1488, 16
        %v1495 = vpack.i.b16 %v1494, %v1493
        %v1498 = vpack.i.b16 %v1489, %v1439
        %v1499 = vshrl.u32 %v1439, 16
        %v1500 = vshrl.u32 %v1489, 16
        %v1501 = vpack.i.b16 %v1500, %v1499
        %v1502 = vpack.c.bf16 %v1185, %v1181
        %1504 = vrot.lane.b32.xlu0 %v1502, 96
        %v1505 = vpop.permute.xlu0 %1504
        %1506 = vrot.lane.b32.xlu0 %v1502, 64
        %v1507 = vpop.permute.xlu0 %1506
        %1508 = vrot.lane.b32.xlu0 %v1502, 32
        %v1509 = vpop.permute.xlu0 %1508
        %v1512 = vpack.i.b16 %v1505, %v1502
        %v1514 = vshrl.u32 %v1502, 16
        %v1515 = vshrl.u32 %v1505, 16
        %v1516 = vpack.i.b16 %v1515, %v1514
        %v1520 = vpack.i.b16 %v1509, %v1507
        %v1522 = vshrl.u32 %v1507, 16
        %v1523 = vshrl.u32 %v1509, 16
        %v1524 = vpack.i.b16 %v1523, %v1522
        %v1526 = vcombine.high %v1512, %v1253
        %v1528 = vunpack.c.l.s4 1983009808
        %v1529 = vunpack.c.0.s8 %v1528
        %v1530 = vlaneseq
        %v1531 = vshrl.u32 %v1530, 7
        %v1532 = vsub.s32 %v1529, %v1531
        %v1533 = vrot.slane %v1512, %v1532
        %v1535 = vunpack.c.l.s4 1983009808
        %v1536 = vunpack.c.0.s8 %v1535
        %v1537 = vlaneseq
        %v1538 = vshrl.u32 %v1537, 7
        %v1539 = vsub.s32 %v1536, %v1538
        %v1540 = vrot.slane %v1526, %v1539
        %v1541 = vcombine.high %v1520, %v1253
        %v1543 = vunpack.c.l.s4 1983009808
        %v1544 = vunpack.c.0.s8 %v1543
        %v1545 = vlaneseq
        %v1546 = vshrl.u32 %v1545, 7
        %v1547 = vsub.s32 %v1544, %v1546
        %v1548 = vrot.slane %v1520, %v1547
        %v1550 = vunpack.c.l.s4 1983009808
        %v1551 = vunpack.c.0.s8 %v1550
        %v1552 = vlaneseq
        %v1553 = vshrl.u32 %v1552, 7
        %v1554 = vsub.s32 %v1551, %v1553
        %v1555 = vrot.slane %v1541, %v1554
        %v1556 = vcombine.low %v1533, %v1548
        %v1557 = vcombine.high %v1533, %v1548
        %v1559 = vunpack.c.l.s4 1934713408
        %v1560 = vunpack.c.0.s8 %v1559
        %v1561 = vlaneseq
        %v1562 = vshrl.u32 %v1561, 7
        %v1563 = vsub.s32 %v1560, %v1562
        %v1564 = vrot.slane %v1556, %v1563
        %v1566 = vunpack.c.l.s4 1934713408
        %v1567 = vunpack.c.0.s8 %v1566
        %v1568 = vlaneseq
        %v1569 = vshrl.u32 %v1568, 7
        %v1570 = vsub.s32 %v1567, %v1569
        %v1571 = vrot.slane %v1557, %v1570
        %v1572 = vcombine.low %v1540, %v1555
        %v1573 = vcombine.high %v1540, %v1555
        %v1575 = vunpack.c.l.s4 1934713408
        %v1576 = vunpack.c.0.s8 %v1575
        %v1577 = vlaneseq
        %v1578 = vshrl.u32 %v1577, 7
        %v1579 = vsub.s32 %v1576, %v1578
        %v1580 = vrot.slane %v1572, %v1579
        %v1582 = vunpack.c.l.s4 1934713408
        %v1583 = vunpack.c.0.s8 %v1582
        %v1584 = vlaneseq
        %v1585 = vshrl.u32 %v1584, 7
        %v1586 = vsub.s32 %v1583, %v1585
        %v1587 = vrot.slane %v1573, %v1586
        %v1588 = vcombine.high %v1564, 0
        %v1589 = vcombine.high %v1571, 0
        %v1590 = vcombine.high %v1580, 0
        %v1591 = vcombine.high %v1587, 0
        %v1592 = vcombine.high %v1516, %v1256
        %v1594 = vunpack.c.l.s4 1983009808
        %v1595 = vunpack.c.0.s8 %v1594
        %v1596 = vlaneseq
        %v1597 = vshrl.u32 %v1596, 7
        %v1598 = vsub.s32 %v1595, %v1597
        %v1599 = vrot.slane %v1516, %v1598
        %v1601 = vunpack.c.l.s4 1983009808
        %v1602 = vunpack.c.0.s8 %v1601
        %v1603 = vlaneseq
        %v1604 = vshrl.u32 %v1603, 7
        %v1605 = vsub.s32 %v1602, %v1604
        %v1606 = vrot.slane %v1592, %v1605
        %v1607 = vcombine.high %v1524, %v1256
        %v1609 = vunpack.c.l.s4 1983009808
        %v1610 = vunpack.c.0.s8 %v1609
        %v1611 = vlaneseq
        %v1612 = vshrl.u32 %v1611, 7
        %v1613 = vsub.s32 %v1610, %v1612
        %v1614 = vrot.slane %v1524, %v1613
        %v1616 = vunpack.c.l.s4 1983009808
        %v1617 = vunpack.c.0.s8 %v1616
        %v1618 = vlaneseq
        %v1619 = vshrl.u32 %v1618, 7
        %v1620 = vsub.s32 %v1617, %v1619
        %v1621 = vrot.slane %v1607, %v1620
        %v1622 = vcombine.low %v1599, %v1614
        %v1623 = vcombine.high %v1599, %v1614
        %v1625 = vunpack.c.l.s4 1934713408
        %v1626 = vunpack.c.0.s8 %v1625
        %v1627 = vlaneseq
        %v1628 = vshrl.u32 %v1627, 7
        %v1629 = vsub.s32 %v1626, %v1628
        %v1630 = vrot.slane %v1622, %v1629
        %v1632 = vunpack.c.l.s4 1934713408
        %v1633 = vunpack.c.0.s8 %v1632
        %v1634 = vlaneseq
        %v1635 = vshrl.u32 %v1634, 7
        %v1636 = vsub.s32 %v1633, %v1635
        %v1637 = vrot.slane %v1623, %v1636
        %v1638 = vcombine.low %v1606, %v1621
        %v1639 = vcombine.high %v1606, %v1621
        %v1641 = vunpack.c.l.s4 1934713408
        %v1642 = vunpack.c.0.s8 %v1641
        %v1643 = vlaneseq
        %v1644 = vshrl.u32 %v1643, 7
        %v1645 = vsub.s32 %v1642, %v1644
        %v1646 = vrot.slane %v1638, %v1645
        %v1648 = vunpack.c.l.s4 1934713408
        %v1649 = vunpack.c.0.s8 %v1648
        %v1650 = vlaneseq
        %v1651 = vshrl.u32 %v1650, 7
        %v1652 = vsub.s32 %v1649, %v1651
        %v1653 = vrot.slane %v1639, %v1652
        %v1654 = vcombine.high %v1630, 0
        %v1655 = vcombine.high %v1637, 0
        %v1656 = vcombine.high %v1646, 0
        %v1657 = vcombine.high %v1653, 0
        %v1658 = vcombine.low %v1564, %v1571
        %v1660 = vunpack.c.l.s4 1983009808
        %v1661 = vunpack.c.0.s8 %v1660
        %v1662 = vlaneseq
        %v1663 = vshrl.u32 %v1662, 7
        %v1664 = vsub.s32 %v1661, %v1663
        %v1665 = vrot.slane %v1658, %v1664
        %v1666 = vcombine.low %v1588, %v1589
        %v1668 = vunpack.c.l.s4 1983009808
        %v1669 = vunpack.c.0.s8 %v1668
        %v1670 = vlaneseq
        %v1671 = vshrl.u32 %v1670, 7
        %v1672 = vsub.s32 %v1669, %v1671
        %v1673 = vrot.slane %v1666, %v1672
        %v1674 = vcombine.low %v1580, %v1587
        %v1676 = vunpack.c.l.s4 1983009808
        %v1677 = vunpack.c.0.s8 %v1676
        %v1678 = vlaneseq
        %v1679 = vshrl.u32 %v1678, 7
        %v1680 = vsub.s32 %v1677, %v1679
        %v1681 = vrot.slane %v1674, %v1680
        %v1682 = vcombine.low %v1590, %v1591
        %v1684 = vunpack.c.l.s4 1983009808
        %v1685 = vunpack.c.0.s8 %v1684
        %v1686 = vlaneseq
        %v1687 = vshrl.u32 %v1686, 7
        %v1688 = vsub.s32 %v1685, %v1687
        %v1689 = vrot.slane %v1682, %v1688
        %v1690 = vcombine.low %v1665, %v1673
        %v1692 = vunpack.c.l.s4 1934713408
        %v1693 = vunpack.c.0.s8 %v1692
        %v1694 = vlaneseq
        %v1695 = vshrl.u32 %v1694, 7
        %v1696 = vsub.s32 %v1693, %v1695
        %v1697 = vrot.slane %v1690, %v1696
        %v1698 = vcombine.low %v1681, %v1689
        %v1700 = vunpack.c.l.s4 1934713408
        %v1701 = vunpack.c.0.s8 %v1700
        %v1702 = vlaneseq
        %v1703 = vshrl.u32 %v1702, 7
        %v1704 = vsub.s32 %v1701, %v1703
        %v1705 = vrot.slane %v1698, %v1704
        %v1706 = vcombine.low %v1697, %v1705
        %v1707 = vcombine.high %v1697, %v1705
        %v1708 = vcombine.low %v1630, %v1637
        %v1710 = vunpack.c.l.s4 1983009808
        %v1711 = vunpack.c.0.s8 %v1710
        %v1712 = vlaneseq
        %v1713 = vshrl.u32 %v1712, 7
        %v1714 = vsub.s32 %v1711, %v1713
        %v1715 = vrot.slane %v1708, %v1714
        %v1716 = vcombine.low %v1654, %v1655
        %v1718 = vunpack.c.l.s4 1983009808
        %v1719 = vunpack.c.0.s8 %v1718
        %v1720 = vlaneseq
        %v1721 = vshrl.u32 %v1720, 7
        %v1722 = vsub.s32 %v1719, %v1721
        %v1723 = vrot.slane %v1716, %v1722
        %v1724 = vcombine.low %v1646, %v1653
        %v1726 = vunpack.c.l.s4 1983009808
        %v1727 = vunpack.c.0.s8 %v1726
        %v1728 = vlaneseq
        %v1729 = vshrl.u32 %v1728, 7
        %v1730 = vsub.s32 %v1727, %v1729
        %v1731 = vrot.slane %v1724, %v1730
        %v1732 = vcombine.low %v1656, %v1657
        %v1734 = vunpack.c.l.s4 1983009808
        %v1735 = vunpack.c.0.s8 %v1734
        %v1736 = vlaneseq
        %v1737 = vshrl.u32 %v1736, 7
        %v1738 = vsub.s32 %v1735, %v1737
        %v1739 = vrot.slane %v1732, %v1738
        %v1740 = vcombine.low %v1715, %v1723
        %v1742 = vunpack.c.l.s4 1934713408
        %v1743 = vunpack.c.0.s8 %v1742
        %v1744 = vlaneseq
        %v1745 = vshrl.u32 %v1744, 7
        %v1746 = vsub.s32 %v1743, %v1745
        %v1747 = vrot.slane %v1740, %v1746
        %v1748 = vcombine.low %v1731, %v1739
        %v1750 = vunpack.c.l.s4 1934713408
        %v1751 = vunpack.c.0.s8 %v1750
        %v1752 = vlaneseq
        %v1753 = vshrl.u32 %v1752, 7
        %v1754 = vsub.s32 %v1751, %v1753
        %v1755 = vrot.slane %v1748, %v1754
        %v1756 = vcombine.low %v1747, %v1755
        %v1757 = vcombine.high %v1747, %v1755
        %v1760 = vpack.i.b16 %v1756, %v1706
        %v1761 = vshrl.u32 %v1706, 16
        %v1762 = vshrl.u32 %v1756, 16
        %v1763 = vpack.i.b16 %v1762, %v1761
        %v1766 = vpack.i.b16 %v1757, %v1707
        %v1767 = vshrl.u32 %v1707, 16
        %v1768 = vshrl.u32 %v1757, 16
        %v1769 = vpack.i.b16 %v1768, %v1767
        %v1770 = vpack.c.bf16 %v1225, %v1222
        %1772 = vrot.lane.b32.xlu0 %v1770, 96
        %v1773 = vpop.permute.xlu0 %1772
        %1774 = vrot.lane.b32.xlu0 %v1770, 64
        %v1775 = vpop.permute.xlu0 %1774
        %1776 = vrot.lane.b32.xlu0 %v1770, 32
        %v1777 = vpop.permute.xlu0 %1776
        %v1780 = vpack.i.b16 %v1773, %v1770
        %v1782 = vshrl.u32 %v1770, 16
        %v1783 = vshrl.u32 %v1773, 16
        %v1784 = vpack.i.b16 %v1783, %v1782
        %v1788 = vpack.i.b16 %v1777, %v1775
        %v1790 = vshrl.u32 %v1775, 16
        %v1791 = vshrl.u32 %v1777, 16
        %v1792 = vpack.i.b16 %v1791, %v1790
        %v1794 = vcombine.high %v1780, %v1253
        %v1796 = vunpack.c.l.s4 1983009808
        %v1797 = vunpack.c.0.s8 %v1796
        %v1798 = vlaneseq
        %v1799 = vshrl.u32 %v1798, 7
        %v1800 = vsub.s32 %v1797, %v1799
        %v1801 = vrot.slane %v1780, %v1800
        %v1803 = vunpack.c.l.s4 1983009808
        %v1804 = vunpack.c.0.s8 %v1803
        %v1805 = vlaneseq
        %v1806 = vshrl.u32 %v1805, 7
        %v1807 = vsub.s32 %v1804, %v1806
        %v1808 = vrot.slane %v1794, %v1807
        %v1809 = vcombine.high %v1788, %v1253
        %v1811 = vunpack.c.l.s4 1983009808
        %v1812 = vunpack.c.0.s8 %v1811
        %v1813 = vlaneseq
        %v1814 = vshrl.u32 %v1813, 7
        %v1815 = vsub.s32 %v1812, %v1814
        %v1816 = vrot.slane %v1788, %v1815
        %v1818 = vunpack.c.l.s4 1983009808
        %v1819 = vunpack.c.0.s8 %v1818
        %v1820 = vlaneseq
        %v1821 = vshrl.u32 %v1820, 7
        %v1822 = vsub.s32 %v1819, %v1821
        %v1823 = vrot.slane %v1809, %v1822
        %v1824 = vcombine.low %v1801, %v1816
        %v1825 = vcombine.high %v1801, %v1816
        %v1827 = vunpack.c.l.s4 1934713408
        %v1828 = vunpack.c.0.s8 %v1827
        %v1829 = vlaneseq
        %v1830 = vshrl.u32 %v1829, 7
        %v1831 = vsub.s32 %v1828, %v1830
        %v1832 = vrot.slane %v1824, %v1831
        %v1834 = vunpack.c.l.s4 1934713408
        %v1835 = vunpack.c.0.s8 %v1834
        %v1836 = vlaneseq
        %v1837 = vshrl.u32 %v1836, 7
        %v1838 = vsub.s32 %v1835, %v1837
        %v1839 = vrot.slane %v1825, %v1838
        %v1840 = vcombine.low %v1808, %v1823
        %v1841 = vcombine.high %v1808, %v1823
        %v1843 = vunpack.c.l.s4 1934713408
        %v1844 = vunpack.c.0.s8 %v1843
        %v1845 = vlaneseq
        %v1846 = vshrl.u32 %v1845, 7
        %v1847 = vsub.s32 %v1844, %v1846
        %v1848 = vrot.slane %v1840, %v1847
        %v1850 = vunpack.c.l.s4 1934713408
        %v1851 = vunpack.c.0.s8 %v1850
        %v1852 = vlaneseq
        %v1853 = vshrl.u32 %v1852, 7
        %v1854 = vsub.s32 %v1851, %v1853
        %v1855 = vrot.slane %v1841, %v1854
        %v1856 = vcombine.high %v1832, 0
        %v1857 = vcombine.high %v1839, 0
        %v1858 = vcombine.high %v1848, 0
        %v1859 = vcombine.high %v1855, 0
        %v1860 = vcombine.high %v1784, %v1256
        %v1862 = vunpack.c.l.s4 1983009808
        %v1863 = vunpack.c.0.s8 %v1862
        %v1864 = vlaneseq
        %v1865 = vshrl.u32 %v1864, 7
        %v1866 = vsub.s32 %v1863, %v1865
        %v1867 = vrot.slane %v1784, %v1866
        %v1869 = vunpack.c.l.s4 1983009808
        %v1870 = vunpack.c.0.s8 %v1869
        %v1871 = vlaneseq
        %v1872 = vshrl.u32 %v1871, 7
        %v1873 = vsub.s32 %v1870, %v1872
        %v1874 = vrot.slane %v1860, %v1873
        %v1875 = vcombine.high %v1792, %v1256
        %v1877 = vunpack.c.l.s4 1983009808
        %v1878 = vunpack.c.0.s8 %v1877
        %v1879 = vlaneseq
        %v1880 = vshrl.u32 %v1879, 7
        %v1881 = vsub.s32 %v1878, %v1880
        %v1882 = vrot.slane %v1792, %v1881
        %v1884 = vunpack.c.l.s4 1983009808
        %v1885 = vunpack.c.0.s8 %v1884
        %v1886 = vlaneseq
        %v1887 = vshrl.u32 %v1886, 7
        %v1888 = vsub.s32 %v1885, %v1887
        %v1889 = vrot.slane %v1875, %v1888
        %v1890 = vcombine.low %v1867, %v1882
        %v1891 = vcombine.high %v1867, %v1882
        %v1893 = vunpack.c.l.s4 1934713408
        %v1894 = vunpack.c.0.s8 %v1893
        %v1895 = vlaneseq
        %v1896 = vshrl.u32 %v1895, 7
        %v1897 = vsub.s32 %v1894, %v1896
        %v1898 = vrot.slane %v1890, %v1897
        %v1900 = vunpack.c.l.s4 1934713408
        %v1901 = vunpack.c.0.s8 %v1900
        %v1902 = vlaneseq
        %v1903 = vshrl.u32 %v1902, 7
        %v1904 = vsub.s32 %v1901, %v1903
        %v1905 = vrot.slane %v1891, %v1904
        %v1906 = vcombine.low %v1874, %v1889
        %v1907 = vcombine.high %v1874, %v1889
        %v1909 = vunpack.c.l.s4 1934713408
        %v1910 = vunpack.c.0.s8 %v1909
        %v1911 = vlaneseq
        %v1912 = vshrl.u32 %v1911, 7
        %v1913 = vsub.s32 %v1910, %v1912
        %v1914 = vrot.slane %v1906, %v1913
        %v1916 = vunpack.c.l.s4 1934713408
        %v1917 = vunpack.c.0.s8 %v1916
        %v1918 = vlaneseq
        %v1919 = vshrl.u32 %v1918, 7
        %v1920 = vsub.s32 %v1917, %v1919
        %v1921 = vrot.slane %v1907, %v1920
        %v1922 = vcombine.high %v1898, 0
        %v1923 = vcombine.high %v1905, 0
        %v1924 = vcombine.high %v1914, 0
        %v1925 = vcombine.high %v1921, 0
        %v1926 = vcombine.low %v1832, %v1839
        %v1928 = vunpack.c.l.s4 1983009808
        %v1929 = vunpack.c.0.s8 %v1928
        %v1930 = vlaneseq
        %v1931 = vshrl.u32 %v1930, 7
        %v1932 = vsub.s32 %v1929, %v1931
        %v1933 = vrot.slane %v1926, %v1932
        %v1934 = vcombine.low %v1856, %v1857
        %v1936 = vunpack.c.l.s4 1983009808
        %v1937 = vunpack.c.0.s8 %v1936
        %v1938 = vlaneseq
        %v1939 = vshrl.u32 %v1938, 7
        %v1940 = vsub.s32 %v1937, %v1939
        %v1941 = vrot.slane %v1934, %v1940
        %v1942 = vcombine.low %v1848, %v1855
        %v1944 = vunpack.c.l.s4 1983009808
        %v1945 = vunpack.c.0.s8 %v1944
        %v1946 = vlaneseq
        %v1947 = vshrl.u32 %v1946, 7
        %v1948 = vsub.s32 %v1945, %v1947
        %v1949 = vrot.slane %v1942, %v1948
        %v1950 = vcombine.low %v1858, %v1859
        %v1952 = vunpack.c.l.s4 1983009808
        %v1953 = vunpack.c.0.s8 %v1952
        %v1954 = vlaneseq
        %v1955 = vshrl.u32 %v1954, 7
        %v1956 = vsub.s32 %v1953, %v1955
        %v1957 = vrot.slane %v1950, %v1956
        %v1958 = vcombine.low %v1933, %v1941
        %v1960 = vunpack.c.l.s4 1934713408
        %v1961 = vunpack.c.0.s8 %v1960
        %v1962 = vlaneseq
        %v1963 = vshrl.u32 %v1962, 7
        %v1964 = vsub.s32 %v1961, %v1963
        %v1965 = vrot.slane %v1958, %v1964
        %v1966 = vcombine.low %v1949, %v1957
        %v1968 = vunpack.c.l.s4 1934713408
        %v1969 = vunpack.c.0.s8 %v1968
        %v1970 = vlaneseq
        %v1971 = vshrl.u32 %v1970, 7
        %v1972 = vsub.s32 %v1969, %v1971
        %v1973 = vrot.slane %v1966, %v1972
        %v1974 = vcombine.low %v1965, %v1973
        %v1975 = vcombine.high %v1965, %v1973
        %v1976 = vcombine.low %v1898, %v1905
        %v1978 = vunpack.c.l.s4 1983009808
        %v1979 = vunpack.c.0.s8 %v1978
        %v1980 = vlaneseq
        %v1981 = vshrl.u32 %v1980, 7
        %v1982 = vsub.s32 %v1979, %v1981
        %v1983 = vrot.slane %v1976, %v1982
        %v1984 = vcombine.low %v1922, %v1923
        %v1986 = vunpack.c.l.s4 1983009808
        %v1987 = vunpack.c.0.s8 %v1986
        %v1988 = vlaneseq
        %v1989 = vshrl.u32 %v1988, 7
        %v1990 = vsub.s32 %v1987, %v1989
        %v1991 = vrot.slane %v1984, %v1990
        %v1992 = vcombine.low %v1914, %v1921
        %v1994 = vunpack.c.l.s4 1983009808
        %v1995 = vunpack.c.0.s8 %v1994
        %v1996 = vlaneseq
        %v1997 = vshrl.u32 %v1996, 7
        %v1998 = vsub.s32 %v1995, %v1997
        %v1999 = vrot.slane %v1992, %v1998
        %v2000 = vcombine.low %v1924, %v1925
        %v2002 = vunpack.c.l.s4 1983009808
        %v2003 = vunpack.c.0.s8 %v2002
        %v2004 = vlaneseq
        %v2005 = vshrl.u32 %v2004, 7
        %v2006 = vsub.s32 %v2003, %v2005
        %v2007 = vrot.slane %v2000, %v2006
        %v2008 = vcombine.low %v1983, %v1991
        %v2010 = vunpack.c.l.s4 1934713408
        %v2011 = vunpack.c.0.s8 %v2010
        %v2012 = vlaneseq
        %v2013 = vshrl.u32 %v2012, 7
        %v2014 = vsub.s32 %v2011, %v2013
        %v2015 = vrot.slane %v2008, %v2014
        %v2016 = vcombine.low %v1999, %v2007
        %v2018 = vunpack.c.l.s4 1934713408
        %v2019 = vunpack.c.0.s8 %v2018
        %v2020 = vlaneseq
        %v2021 = vshrl.u32 %v2020, 7
        %v2022 = vsub.s32 %v2019, %v2021
        %v2023 = vrot.slane %v2016, %v2022
        %v2024 = vcombine.low %v2015, %v2023
        %v2025 = vcombine.high %v2015, %v2023
        %v2028 = vpack.i.b16 %v2024, %v1974
        %v2030 = vshrl.u32 %v1974, 16
        %v2031 = vshrl.u32 %v2024, 16
        %v2032 = vpack.i.b16 %v2031, %v2030
        %v2036 = vpack.i.b16 %v2025, %v1975
        %v2038 = vshrl.u32 %v1975, 16
        %v2039 = vshrl.u32 %v2025, 16
        %v2040 = vpack.i.b16 %v2039, %v2038
        %vm2042 = vcmask 261120
        %v2044 = vsel %vm2042, %v1492, 0
        %v2047 = vsel %vm2042, %v1760, 0
        %2049 = vmatprep.subr.bf16.mxu0 0
        %2050 = vmatpush1.bf16.xpose.msra.mxu0 0
        %2051 = vmatprep.subr.bf16.mxu0 0
        %2052 = vmatpush1.bf16.xpose.msra.mxu0 0
        %2053 = vmatprep.subr.bf16.mxu0 0
        %2054 = vmatpush1.bf16.xpose.msra.mxu0 0
        %2055 = vmatprep.subr.bf16.mxu0 0
        %2056 = vmatpush1.bf16.xpose.msra.mxu0 0
        %2057 = vmatprep.subr.bf16.mxu0 0
        %2058 = vmatpush1.bf16.xpose.msra.mxu0 0
        %2059 = vmatprep.subr.bf16.mxu0 0
        %2060 = vmatpush1.bf16.xpose.msra.mxu0 0
        %2061 = vmatprep.subr.bf16.mxu0 0
        %2062 = vmatpush1.bf16.xpose.msra.mxu0 0
        %2063 = vmatprep.subr.bf16.mxu0 0
        %2064 = vmatpush1.bf16.xpose.msra.mxu0 %v2047
        %2065 = vmatprep.subr.bf16.mxu0 0
        %2066 = vmatpush2.bf16.xpose.msra.mxu0 0
        %2067 = vmatprep.subr.bf16.mxu0 0
        %2068 = vmatpush2.bf16.xpose.msra.mxu0 0
        %2069 = vmatprep.subr.bf16.mxu0 0
        %2070 = vmatpush2.bf16.xpose.msra.mxu0 0
        %2071 = vmatprep.subr.bf16.mxu0 0
        %2072 = vmatpush2.bf16.xpose.msra.mxu0 0
        %2073 = vmatprep.subr.bf16.mxu0 0
        %2074 = vmatpush2.bf16.xpose.msra.mxu0 0
        %2075 = vmatprep.subr.bf16.mxu0 0
        %2076 = vmatpush2.bf16.xpose.msra.mxu0 0
        %2077 = vmatprep.subr.bf16.mxu0 0
        %2078 = vmatpush2.bf16.xpose.msra.mxu0 0
        %2079 = vmatprep.subr.bf16.mxu0 0
        %2080 = vmatpush2.bf16.xpose.msra.mxu0 0
        %2081 = vmatprep.mubr.bf16.mxu0 0
        %2082 = vmatmul.mubr.bf16.gmra.mxu0 %v2044
        %v2083 = vpop.f32.mrf.mxu0
        %v2084 = vadd.f32 0.0, %v2083
        %v2085 = vpop.f32.mrf.mxu0
        %v2086 = vpop.f32.mrf.mxu0
        %v2087 = vadd.f32 0.0, %v2086
        %v2088 = vpop.f32.mrf.mxu0
        %2089 = vdwg.mxu0
        %v2091 = vsel %vm2042, %v1495, 0
        %v2094 = vsel %vm2042, %v1763, 0
        %2096 = vmatprep.subr.bf16.mxu0 0
        %2097 = vmatpush1.bf16.xpose.msra.mxu0 0
        %2098 = vmatprep.subr.bf16.mxu0 0
        %2099 = vmatpush1.bf16.xpose.msra.mxu0 0
        %2100 = vmatprep.subr.bf16.mxu0 0
        %2101 = vmatpush1.bf16.xpose.msra.mxu0 0
        %2102 = vmatprep.subr.bf16.mxu0 0
        %2103 = vmatpush1.bf16.xpose.msra.mxu0 0
        %2104 = vmatprep.subr.bf16.mxu0 0
        %2105 = vmatpush1.bf16.xpose.msra.mxu0 0
        %2106 = vmatprep.subr.bf16.mxu0 0
        %2107 = vmatpush1.bf16.xpose.msra.mxu0 0
        %2108 = vmatprep.subr.bf16.mxu0 0
        %2109 = vmatpush1.bf16.xpose.msra.mxu0 0
        %2110 = vmatprep.subr.bf16.mxu0 0
        %2111 = vmatpush1.bf16.xpose.msra.mxu0 %v2094
        %2112 = vmatprep.subr.bf16.mxu0 0
        %2113 = vmatpush2.bf16.xpose.msra.mxu0 0
        %2114 = vmatprep.subr.bf16.mxu0 0
        %2115 = vmatpush2.bf16.xpose.msra.mxu0 0
        %2116 = vmatprep.subr.bf16.mxu0 0
        %2117 = vmatpush2.bf16.xpose.msra.mxu0 0
        %2118 = vmatprep.subr.bf16.mxu0 0
        %2119 = vmatpush2.bf16.xpose.msra.mxu0 0
        %2120 = vmatprep.subr.bf16.mxu0 0
        %2121 = vmatpush2.bf16.xpose.msra.mxu0 0
        %2122 = vmatprep.subr.bf16.mxu0 0
        %2123 = vmatpush2.bf16.xpose.msra.mxu0 0
        %2124 = vmatprep.subr.bf16.mxu0 0
        %2125 = vmatpush2.bf16.xpose.msra.mxu0 0
        %2126 = vmatprep.subr.bf16.mxu0 0
        %2127 = vmatpush2.bf16.xpose.msra.mxu0 0
        %2128 = vmatprep.mubr.bf16.mxu0 0
        %2129 = vmatmul.mubr.bf16.gmra.mxu0 %v2091
        %v2130 = vpop.f32.mrf.mxu0
        %v2131 = vadd.f32 0.0, %v2130
        %v2132 = vpop.f32.mrf.mxu0
        %v2133 = vpop.f32.mrf.mxu0
        %v2134 = vadd.f32 0.0, %v2133
        %v2135 = vpop.f32.mrf.mxu0
        %2136 = vdwg.mxu0
        %v2138 = vsel %vm2042, %v1498, 0
        %v2141 = vsel %vm2042, %v1766, 0
        %2143 = vmatprep.subr.bf16.mxu0 0
        %2144 = vmatpush1.bf16.xpose.msra.mxu0 0
        %2145 = vmatprep.subr.bf16.mxu0 0
        %2146 = vmatpush1.bf16.xpose.msra.mxu0 0
        %2147 = vmatprep.subr.bf16.mxu0 0
        %2148 = vmatpush1.bf16.xpose.msra.mxu0 0
        %2149 = vmatprep.subr.bf16.mxu0 0
        %2150 = vmatpush1.bf16.xpose.msra.mxu0 0
        %2151 = vmatprep.subr.bf16.mxu0 0
        %2152 = vmatpush1.bf16.xpose.msra.mxu0 0
        %2153 = vmatprep.subr.bf16.mxu0 0
        %2154 = vmatpush1.bf16.xpose.msra.mxu0 0
        %2155 = vmatprep.subr.bf16.mxu0 0
        %2156 = vmatpush1.bf16.xpose.msra.mxu0 0
        %2157 = vmatprep.subr.bf16.mxu0 0
        %2158 = vmatpush1.bf16.xpose.msra.mxu0 %v2141
        %2159 = vmatprep.subr.bf16.mxu0 0
        %2160 = vmatpush2.bf16.xpose.msra.mxu0 0
        %2161 = vmatprep.subr.bf16.mxu0 0
        %2162 = vmatpush2.bf16.xpose.msra.mxu0 0
        %2163 = vmatprep.subr.bf16.mxu0 0
        %2164 = vmatpush2.bf16.xpose.msra.mxu0 0
        %2165 = vmatprep.subr.bf16.mxu0 0
        %2166 = vmatpush2.bf16.xpose.msra.mxu0 0
        %2167 = vmatprep.subr.bf16.mxu0 0
        %2168 = vmatpush2.bf16.xpose.msra.mxu0 0
        %2169 = vmatprep.subr.bf16.mxu0 0
        %2170 = vmatpush2.bf16.xpose.msra.mxu0 0
        %2171 = vmatprep.subr.bf16.mxu0 0
        %2172 = vmatpush2.bf16.xpose.msra.mxu0 0
        %2173 = vmatprep.subr.bf16.mxu0 0
        %2174 = vmatpush2.bf16.xpose.msra.mxu0 0
        %2175 = vmatprep.mubr.bf16.mxu0 0
        %2176 = vmatmul.mubr.bf16.gmra.mxu0 %v2138
        %v2177 = vpop.f32.mrf.mxu0
        %v2178 = vadd.f32 0.0, %v2177
        %v2179 = vpop.f32.mrf.mxu0
        %v2180 = vpop.f32.mrf.mxu0
        %v2181 = vadd.f32 0.0, %v2180
        %v2182 = vpop.f32.mrf.mxu0
        %2183 = vdwg.mxu0
        %v2185 = vsel %vm2042, %v1501, 0
        %v2188 = vsel %vm2042, %v1769, 0
        %2190 = vmatprep.subr.bf16.mxu0 0
        %2191 = vmatpush1.bf16.xpose.msra.mxu0 0
        %2192 = vmatprep.subr.bf16.mxu0 0
        %2193 = vmatpush1.bf16.xpose.msra.mxu0 0
        %2194 = vmatprep.subr.bf16.mxu0 0
        %2195 = vmatpush1.bf16.xpose.msra.mxu0 0
        %2196 = vmatprep.subr.bf16.mxu0 0
        %2197 = vmatpush1.bf16.xpose.msra.mxu0 0
        %2198 = vmatprep.subr.bf16.mxu0 0
        %2199 = vmatpush1.bf16.xpose.msra.mxu0 0
        %2200 = vmatprep.subr.bf16.mxu0 0
        %2201 = vmatpush1.bf16.xpose.msra.mxu0 0
        %2202 = vmatprep.subr.bf16.mxu0 0
        %2203 = vmatpush1.bf16.xpose.msra.mxu0 0
        %2204 = vmatprep.subr.bf16.mxu0 0
        %2205 = vmatpush1.bf16.xpose.msra.mxu0 %v2188
        %2206 = vmatprep.subr.bf16.mxu0 0
        %2207 = vmatpush2.bf16.xpose.msra.mxu0 0
        %2208 = vmatprep.subr.bf16.mxu0 0
        %2209 = vmatpush2.bf16.xpose.msra.mxu0 0
        %2210 = vmatprep.subr.bf16.mxu0 0
        %2211 = vmatpush2.bf16.xpose.msra.mxu0 0
        %2212 = vmatprep.subr.bf16.mxu0 0
        %2213 = vmatpush2.bf16.xpose.msra.mxu0 0
        %2214 = vmatprep.subr.bf16.mxu0 0
        %2215 = vmatpush2.bf16.xpose.msra.mxu0 0
        %2216 = vmatprep.subr.bf16.mxu0 0
        %2217 = vmatpush2.bf16.xpose.msra.mxu0 0
        %2218 = vmatprep.subr.bf16.mxu0 0
        %2219 = vmatpush2.bf16.xpose.msra.mxu0 0
        %2220 = vmatprep.subr.bf16.mxu0 0
        %2221 = vmatpush2.bf16.xpose.msra.mxu0 0
        %2222 = vmatprep.mubr.bf16.mxu0 0
        %2223 = vmatmul.mubr.bf16.gmra.mxu0 %v2185
        %v2224 = vpop.f32.mrf.mxu0
        %v2225 = vadd.f32 0.0, %v2224
        %v2226 = vpop.f32.mrf.mxu0
        %v2227 = vpop.f32.mrf.mxu0
        %v2228 = vadd.f32 0.0, %v2227
        %v2229 = vpop.f32.mrf.mxu0
        %2230 = vdwg.mxu0
        %vm2231 = vcmask 130048
        %v2232 = vsel %vm2231, %v2084, -inf
        %2233 = vmax.xlane.f32.xlu0 %v2232
        %v2234 = vpop.xlane.xlu0 %2233
        %v2235 = vsel %vm2231, %v2087, -inf
        %2236 = vmax.xlane.f32.xlu0 %v2235
        %v2237 = vpop.xlane.xlu0 %2236
        %v2238 = vsel %vm2231, %v2131, -inf
        %2239 = vmax.xlane.f32.xlu0 %v2238
        %v2240 = vpop.xlane.xlu0 %2239
        %v2241 = vsel %vm2231, %v2134, -inf
        %2242 = vmax.xlane.f32.xlu0 %v2241
        %v2243 = vpop.xlane.xlu0 %2242
        %v2244 = vsel %vm2231, %v2178, -inf
        %2245 = vmax.xlane.f32.xlu0 %v2244
        %v2246 = vpop.xlane.xlu0 %2245
        %v2247 = vsel %vm2231, %v2181, -inf
        %2248 = vmax.xlane.f32.xlu0 %v2247
        %v2249 = vpop.xlane.xlu0 %2248
        %v2250 = vsel %vm2231, %v2225, -inf
        %2251 = vmax.xlane.f32.xlu0 %v2250
        %v2252 = vpop.xlane.xlu0 %2251
        %v2253 = vsel %vm2231, %v2228, -inf
        %2254 = vmax.xlane.f32.xlu0 %v2253
        %v2255 = vpop.xlane.xlu0 %2254
        %v2256 = vsub.f32 %v2084, %v2234
        %v2257 = vsub.f32 %v2087, %v2237
        %v2258 = vsub.f32 %v2131, %v2240
        %v2259 = vsub.f32 %v2134, %v2243
        %v2260 = vsub.f32 %v2178, %v2246
        %v2261 = vsub.f32 %v2181, %v2249
        %v2262 = vsub.f32 %v2225, %v2252
        %v2263 = vsub.f32 %v2228, %v2255
        %v2264 = vmul.f32 %v2256, 1.442695
        %v2265 = vpow.pop %v2264
        %v2266 = vmul.f32 %v2257, 1.442695
        %v2267 = vpow.pop %v2266
        %v2268 = vmul.f32 %v2258, 1.442695
        %v2269 = vpow.pop %v2268
        %v2270 = vmul.f32 %v2259, 1.442695
        %v2271 = vpow.pop %v2270
        %v2272 = vmul.f32 %v2260, 1.442695
        %v2273 = vpow.pop %v2272
        %v2274 = vmul.f32 %v2261, 1.442695
        %v2275 = vpow.pop %v2274
        %v2276 = vmul.f32 %v2262, 1.442695
        %v2277 = vpow.pop %v2276
        %v2278 = vmul.f32 %v2263, 1.442695
        %v2279 = vpow.pop %v2278
        %v2280 = vsel %vm2231, %v2265, 0.0
        %2281 = vadd.xlane.f32.xlu0 %v2280
        %v2282 = vpop.xlane.xlu0 %2281
        %v2283 = vsel %vm2231, %v2267, 0.0
        %2284 = vadd.xlane.f32.xlu0 %v2283
        %v2285 = vpop.xlane.xlu0 %2284
        %v2286 = vsel %vm2231, %v2269, 0.0
        %2287 = vadd.xlane.f32.xlu0 %v2286
        %v2288 = vpop.xlane.xlu0 %2287
        %v2289 = vsel %vm2231, %v2271, 0.0
        %2290 = vadd.xlane.f32.xlu0 %v2289
        %v2291 = vpop.xlane.xlu0 %2290
        %v2292 = vsel %vm2231, %v2273, 0.0
        %2293 = vadd.xlane.f32.xlu0 %v2292
        %v2294 = vpop.xlane.xlu0 %2293
        %v2295 = vsel %vm2231, %v2275, 0.0
        %2296 = vadd.xlane.f32.xlu0 %v2295
        %v2297 = vpop.xlane.xlu0 %2296
        %v2298 = vsel %vm2231, %v2277, 0.0
        %2299 = vadd.xlane.f32.xlu0 %v2298
        %v2300 = vpop.xlane.xlu0 %2299
        %v2301 = vsel %vm2231, %v2279, 0.0
        %2302 = vadd.xlane.f32.xlu0 %v2301
        %v2303 = vpop.xlane.xlu0 %2302
        %v2304 = vrcp.pop %v2282
        %v2305 = vrcp.pop %v2285
        %v2306 = vrcp.pop %v2288
        %v2307 = vrcp.pop %v2291
        %v2308 = vrcp.pop %v2294
        %v2309 = vrcp.pop %v2297
        %v2310 = vrcp.pop %v2300
        %v2311 = vrcp.pop %v2303
        %v2312 = vmul.f32 %v2265, %v2304
        %v2313 = vmul.f32 %v2267, %v2305
        %v2314 = vmul.f32 %v2269, %v2306
        %v2315 = vmul.f32 %v2271, %v2307
        %v2316 = vmul.f32 %v2273, %v2308
        %v2317 = vmul.f32 %v2275, %v2309
        %v2318 = vmul.f32 %v2277, %v2310
        %v2319 = vmul.f32 %v2279, %v2311
        %v2320 = vpack.c.bf16 %v2313, %v2312
        %v2321 = vpack.c.bf16 %v2315, %v2314
        %v2322 = vpack.c.bf16 %v2317, %v2316
        %v2323 = vpack.c.bf16 %v2319, %v2318
        %v2325 = vsel %vm2231, %v2320, 0
        %2327 = vmatprep.subr.bf16.mxu0 0
        %2328 = vmatpush1.bf16.msra.mxu0 0
        %2329 = vmatprep.subr.bf16.mxu0 0
        %2330 = vmatpush1.bf16.msra.mxu0 0
        %2331 = vmatprep.subr.bf16.mxu0 0
        %2332 = vmatpush1.bf16.msra.mxu0 0
        %2333 = vmatprep.subr.bf16.mxu0 0
        %2334 = vmatpush1.bf16.msra.mxu0 0
        %2335 = vmatprep.subr.bf16.mxu0 0
        %2336 = vmatpush1.bf16.msra.mxu0 0
        %2337 = vmatprep.subr.bf16.mxu0 0
        %2338 = vmatpush1.bf16.msra.mxu0 0
        %2339 = vmatprep.subr.bf16.mxu0 0
        %2340 = vmatpush1.bf16.msra.mxu0 0
        %2341 = vmatprep.subr.bf16.mxu0 0
        %2342 = vmatpush1.bf16.msra.mxu0 %v2028
        %2343 = vmatprep.subr.bf16.mxu0 0
        %2344 = vmatpush2.bf16.msra.mxu0 0
        %2345 = vmatprep.subr.bf16.mxu0 0
        %2346 = vmatpush2.bf16.msra.mxu0 0
        %2347 = vmatprep.subr.bf16.mxu0 0
        %2348 = vmatpush2.bf16.msra.mxu0 0
        %2349 = vmatprep.subr.bf16.mxu0 0
        %2350 = vmatpush2.bf16.msra.mxu0 0
        %2351 = vmatprep.subr.bf16.mxu0 0
        %2352 = vmatpush2.bf16.msra.mxu0 0
        %2353 = vmatprep.subr.bf16.mxu0 0
        %2354 = vmatpush2.bf16.msra.mxu0 0
        %2355 = vmatprep.subr.bf16.mxu0 0
        %2356 = vmatpush2.bf16.msra.mxu0 0
        %2357 = vmatprep.subr.bf16.mxu0 0
        %2358 = vmatpush2.bf16.msra.mxu0 0
        %2359 = vmatprep.mubr.bf16.mxu0 0
        %2360 = vmatmul.mubr.bf16.gmra.mxu0 %v2325
        %v2361 = vpop.f32.mrf.mxu0
        %v2362 = vadd.f32 0.0, %v2361
        %v2363 = vpop.f32.mrf.mxu0
        %v2364 = vpop.f32.mrf.mxu0
        %v2365 = vadd.f32 0.0, %v2364
        %v2366 = vpop.f32.mrf.mxu0
        %2367 = vdwg.mxu0
        %v2369 = vsel %vm2231, %v2321, 0
        %2371 = vmatprep.subr.bf16.mxu0 0
        %2372 = vmatpush1.bf16.msra.mxu0 0
        %2373 = vmatprep.subr.bf16.mxu0 0
        %2374 = vmatpush1.bf16.msra.mxu0 0
        %2375 = vmatprep.subr.bf16.mxu0 0
        %2376 = vmatpush1.bf16.msra.mxu0 0
        %2377 = vmatprep.subr.bf16.mxu0 0
        %2378 = vmatpush1.bf16.msra.mxu0 0
        %2379 = vmatprep.subr.bf16.mxu0 0
        %2380 = vmatpush1.bf16.msra.mxu0 0
        %2381 = vmatprep.subr.bf16.mxu0 0
        %2382 = vmatpush1.bf16.msra.mxu0 0
        %2383 = vmatprep.subr.bf16.mxu0 0
        %2384 = vmatpush1.bf16.msra.mxu0 0
        %2385 = vmatprep.subr.bf16.mxu0 0
        %2386 = vmatpush1.bf16.msra.mxu0 %v2032
        %2387 = vmatprep.subr.bf16.mxu0 0
        %2388 = vmatpush2.bf16.msra.mxu0 0
        %2389 = vmatprep.subr.bf16.mxu0 0
        %2390 = vmatpush2.bf16.msra.mxu0 0
        %2391 = vmatprep.subr.bf16.mxu0 0
        %2392 = vmatpush2.bf16.msra.mxu0 0
        %2393 = vmatprep.subr.bf16.mxu0 0
        %2394 = vmatpush2.bf16.msra.mxu0 0
        %2395 = vmatprep.subr.bf16.mxu0 0
        %2396 = vmatpush2.bf16.msra.mxu0 0
        %2397 = vmatprep.subr.bf16.mxu0 0
        %2398 = vmatpush2.bf16.msra.mxu0 0
        %2399 = vmatprep.subr.bf16.mxu0 0
        %2400 = vmatpush2.bf16.msra.mxu0 0
        %2401 = vmatprep.subr.bf16.mxu0 0
        %2402 = vmatpush2.bf16.msra.mxu0 0
        %2403 = vmatprep.mubr.bf16.mxu0 0
        %2404 = vmatmul.mubr.bf16.gmra.mxu0 %v2369
        %v2405 = vpop.f32.mrf.mxu0
        %v2406 = vadd.f32 0.0, %v2405
        %v2407 = vpop.f32.mrf.mxu0
        %v2408 = vpop.f32.mrf.mxu0
        %v2409 = vadd.f32 0.0, %v2408
        %v2410 = vpop.f32.mrf.mxu0
        %2411 = vdwg.mxu0
        %v2413 = vsel %vm2231, %v2322, 0
        %2415 = vmatprep.subr.bf16.mxu0 0
        %2416 = vmatpush1.bf16.msra.mxu0 0
        %2417 = vmatprep.subr.bf16.mxu0 0
        %2418 = vmatpush1.bf16.msra.mxu0 0
        %2419 = vmatprep.subr.bf16.mxu0 0
        %2420 = vmatpush1.bf16.msra.mxu0 0
        %2421 = vmatprep.subr.bf16.mxu0 0
        %2422 = vmatpush1.bf16.msra.mxu0 0
        %2423 = vmatprep.subr.bf16.mxu0 0
        %2424 = vmatpush1.bf16.msra.mxu0 0
        %2425 = vmatprep.subr.bf16.mxu0 0
        %2426 = vmatpush1.bf16.msra.mxu0 0
        %2427 = vmatprep.subr.bf16.mxu0 0
        %2428 = vmatpush1.bf16.msra.mxu0 0
        %2429 = vmatprep.subr.bf16.mxu0 0
        %2430 = vmatpush1.bf16.msra.mxu0 %v2036
        %2431 = vmatprep.subr.bf16.mxu0 0
        %2432 = vmatpush2.bf16.msra.mxu0 0
        %2433 = vmatprep.subr.bf16.mxu0 0
        %2434 = vmatpush2.bf16.msra.mxu0 0
        %2435 = vmatprep.subr.bf16.mxu0 0
        %2436 = vmatpush2.bf16.msra.mxu0 0
        %2437 = vmatprep.subr.bf16.mxu0 0
        %2438 = vmatpush2.bf16.msra.mxu0 0
        %2439 = vmatprep.subr.bf16.mxu0 0
        %2440 = vmatpush2.bf16.msra.mxu0 0
        %2441 = vmatprep.subr.bf16.mxu0 0
        %2442 = vmatpush2.bf16.msra.mxu0 0
        %2443 = vmatprep.subr.bf16.mxu0 0
        %2444 = vmatpush2.bf16.msra.mxu0 0
        %2445 = vmatprep.subr.bf16.mxu0 0
        %2446 = vmatpush2.bf16.msra.mxu0 0
        %2447 = vmatprep.mubr.bf16.mxu0 0
        %2448 = vmatmul.mubr.bf16.gmra.mxu0 %v2413
        %v2449 = vpop.f32.mrf.mxu0
        %v2450 = vadd.f32 0.0, %v2449
        %v2451 = vpop.f32.mrf.mxu0
        %v2452 = vpop.f32.mrf.mxu0
        %v2453 = vadd.f32 0.0, %v2452
        %v2454 = vpop.f32.mrf.mxu0
        %2455 = vdwg.mxu0
        %v2457 = vsel %vm2231, %v2323, 0
        %2459 = vmatprep.subr.bf16.mxu0 0
        %2460 = vmatpush1.bf16.msra.mxu0 0
        %2461 = vmatprep.subr.bf16.mxu0 0
        %2462 = vmatpush1.bf16.msra.mxu0 0
        %2463 = vmatprep.subr.bf16.mxu0 0
        %2464 = vmatpush1.bf16.msra.mxu0 0
        %2465 = vmatprep.subr.bf16.mxu0 0
        %2466 = vmatpush1.bf16.msra.mxu0 0
        %2467 = vmatprep.subr.bf16.mxu0 0
        %2468 = vmatpush1.bf16.msra.mxu0 0
        %2469 = vmatprep.subr.bf16.mxu0 0
        %2470 = vmatpush1.bf16.msra.mxu0 0
        %2471 = vmatprep.subr.bf16.mxu0 0
        %2472 = vmatpush1.bf16.msra.mxu0 0
        %2473 = vmatprep.subr.bf16.mxu0 0
        %2474 = vmatpush1.bf16.msra.mxu0 %v2040
        %2475 = vmatprep.subr.bf16.mxu0 0
        %2476 = vmatpush2.bf16.msra.mxu0 0
        %2477 = vmatprep.subr.bf16.mxu0 0
        %2478 = vmatpush2.bf16.msra.mxu0 0
        %2479 = vmatprep.subr.bf16.mxu0 0
        %2480 = vmatpush2.bf16.msra.mxu0 0
        %2481 = vmatprep.subr.bf16.mxu0 0
        %2482 = vmatpush2.bf16.msra.mxu0 0
        %2483 = vmatprep.subr.bf16.mxu0 0
        %2484 = vmatpush2.bf16.msra.mxu0 0
        %2485 = vmatprep.subr.bf16.mxu0 0
        %2486 = vmatpush2.bf16.msra.mxu0 0
        %2487 = vmatprep.subr.bf16.mxu0 0
        %2488 = vmatpush2.bf16.msra.mxu0 0
        %2489 = vmatprep.subr.bf16.mxu0 0
        %2490 = vmatpush2.bf16.msra.mxu0 0
        %2491 = vmatprep.mubr.bf16.mxu0 0
        %2492 = vmatmul.mubr.bf16.gmra.mxu0 %v2457
        %v2493 = vpop.f32.mrf.mxu0
        %v2494 = vadd.f32 0.0, %v2493
        %v2495 = vpop.f32.mrf.mxu0
        %v2496 = vpop.f32.mrf.mxu0
        %v2497 = vadd.f32 0.0, %v2496
        %v2498 = vpop.f32.mrf.mxu0
        %2499 = vdwg.mxu0
        %v2500 = vcombine.low %v2362, %v2450
        %v2501 = vcombine.high %v2362, %v2450
        %v2503 = vunpack.c.l.s4 1983009808
        %v2504 = vunpack.c.0.s8 %v2503
        %v2505 = vlaneseq
        %v2506 = vshrl.u32 %v2505, 7
        %v2507 = vsub.s32 %v2504, %v2506
        %v2508 = vrot.slane %v2500, %v2507
        %v2510 = vunpack.c.l.s4 1983009808
        %v2511 = vunpack.c.0.s8 %v2510
        %v2512 = vlaneseq
        %v2513 = vshrl.u32 %v2512, 7
        %v2514 = vsub.s32 %v2511, %v2513
        %v2515 = vrot.slane %v2501, %v2514
        %v2516 = vcombine.low %v2406, %v2494
        %v2517 = vcombine.high %v2406, %v2494
        %v2519 = vunpack.c.l.s4 1983009808
        %v2520 = vunpack.c.0.s8 %v2519
        %v2521 = vlaneseq
        %v2522 = vshrl.u32 %v2521, 7
        %v2523 = vsub.s32 %v2520, %v2522
        %v2524 = vrot.slane %v2516, %v2523
        %v2526 = vunpack.c.l.s4 1983009808
        %v2527 = vunpack.c.0.s8 %v2526
        %v2528 = vlaneseq
        %v2529 = vshrl.u32 %v2528, 7
        %v2530 = vsub.s32 %v2527, %v2529
        %v2531 = vrot.slane %v2517, %v2530
        %v2532 = vcombine.low %v2508, %v2524
        %v2533 = vcombine.high %v2508, %v2524
        %v2535 = vunpack.c.l.s4 1934713408
        %v2536 = vunpack.c.0.s8 %v2535
        %v2537 = vlaneseq
        %v2538 = vshrl.u32 %v2537, 7
        %v2539 = vsub.s32 %v2536, %v2538
        %v2540 = vrot.slane %v2532, %v2539
        %v2542 = vunpack.c.l.s4 1934713408
        %v2543 = vunpack.c.0.s8 %v2542
        %v2544 = vlaneseq
        %v2545 = vshrl.u32 %v2544, 7
        %v2546 = vsub.s32 %v2543, %v2545
        %v2547 = vrot.slane %v2533, %v2546
        %v2548 = vcombine.low %v2515, %v2531
        %v2549 = vcombine.high %v2515, %v2531
        %v2551 = vunpack.c.l.s4 1934713408
        %v2552 = vunpack.c.0.s8 %v2551
        %v2553 = vlaneseq
        %v2554 = vshrl.u32 %v2553, 7
        %v2555 = vsub.s32 %v2552, %v2554
        %v2556 = vrot.slane %v2548, %v2555
        %v2558 = vunpack.c.l.s4 1934713408
        %v2559 = vunpack.c.0.s8 %v2558
        %v2560 = vlaneseq
        %v2561 = vshrl.u32 %v2560, 7
        %v2562 = vsub.s32 %v2559, %v2561
        %v2563 = vrot.slane %v2549, %v2562
        %v2564 = vcombine.high %v2540, 0.0
        %v2565 = vcombine.high %v2547, 0.0
        %v2566 = vcombine.high %v2556, 0.0
        %v2567 = vcombine.high %v2563, 0.0
        %v2568 = vcombine.low %v2365, %v2453
        %v2569 = vcombine.high %v2365, %v2453
        %v2571 = vunpack.c.l.s4 1983009808
        %v2572 = vunpack.c.0.s8 %v2571
        %v2573 = vlaneseq
        %v2574 = vshrl.u32 %v2573, 7
        %v2575 = vsub.s32 %v2572, %v2574
        %v2576 = vrot.slane %v2568, %v2575
        %v2578 = vunpack.c.l.s4 1983009808
        %v2579 = vunpack.c.0.s8 %v2578
        %v2580 = vlaneseq
        %v2581 = vshrl.u32 %v2580, 7
        %v2582 = vsub.s32 %v2579, %v2581
        %v2583 = vrot.slane %v2569, %v2582
        %v2584 = vcombine.low %v2409, %v2497
        %v2585 = vcombine.high %v2409, %v2497
        %v2587 = vunpack.c.l.s4 1983009808
        %v2588 = vunpack.c.0.s8 %v2587
        %v2589 = vlaneseq
        %v2590 = vshrl.u32 %v2589, 7
        %v2591 = vsub.s32 %v2588, %v2590
        %v2592 = vrot.slane %v2584, %v2591
        %v2594 = vunpack.c.l.s4 1983009808
        %v2595 = vunpack.c.0.s8 %v2594
        %v2596 = vlaneseq
        %v2597 = vshrl.u32 %v2596, 7
        %v2598 = vsub.s32 %v2595, %v2597
        %v2599 = vrot.slane %v2585, %v2598
        %v2600 = vcombine.low %v2576, %v2592
        %v2601 = vcombine.high %v2576, %v2592
        %v2603 = vunpack.c.l.s4 1934713408
        %v2604 = vunpack.c.0.s8 %v2603
        %v2605 = vlaneseq
        %v2606 = vshrl.u32 %v2605, 7
        %v2607 = vsub.s32 %v2604, %v2606
        %v2608 = vrot.slane %v2600, %v2607
        %v2610 = vunpack.c.l.s4 1934713408
        %v2611 = vunpack.c.0.s8 %v2610
        %v2612 = vlaneseq
        %v2613 = vshrl.u32 %v2612, 7
        %v2614 = vsub.s32 %v2611, %v2613
        %v2615 = vrot.slane %v2601, %v2614
        %v2616 = vcombine.low %v2583, %v2599
        %v2617 = vcombine.high %v2583, %v2599
        %v2619 = vunpack.c.l.s4 1934713408
        %v2620 = vunpack.c.0.s8 %v2619
        %v2621 = vlaneseq
        %v2622 = vshrl.u32 %v2621, 7
        %v2623 = vsub.s32 %v2620, %v2622
        %v2624 = vrot.slane %v2616, %v2623
        %v2626 = vunpack.c.l.s4 1934713408
        %v2627 = vunpack.c.0.s8 %v2626
        %v2628 = vlaneseq
        %v2629 = vshrl.u32 %v2628, 7
        %v2630 = vsub.s32 %v2627, %v2629
        %v2631 = vrot.slane %v2617, %v2630
        %v2632 = vcombine.high %v2608, 0.0
        %v2633 = vcombine.high %v2615, 0.0
        %v2634 = vcombine.high %v2624, 0.0
        %v2635 = vcombine.high %v2631, 0.0
        %v2636 = vcombine.low %v2540, %v2547
        %v2638 = vunpack.c.l.s4 1983009808
        %v2639 = vunpack.c.0.s8 %v2638
        %v2640 = vlaneseq
        %v2641 = vshrl.u32 %v2640, 7
        %v2642 = vsub.s32 %v2639, %v2641
        %v2643 = vrot.slane %v2636, %v2642
        %v2644 = vcombine.low %v2564, %v2565
        %v2646 = vunpack.c.l.s4 1983009808
        %v2647 = vunpack.c.0.s8 %v2646
        %v2648 = vlaneseq
        %v2649 = vshrl.u32 %v2648, 7
        %v2650 = vsub.s32 %v2647, %v2649
        %v2651 = vrot.slane %v2644, %v2650
        %v2652 = vcombine.low %v2556, %v2563
        %v2654 = vunpack.c.l.s4 1983009808
        %v2655 = vunpack.c.0.s8 %v2654
        %v2656 = vlaneseq
        %v2657 = vshrl.u32 %v2656, 7
        %v2658 = vsub.s32 %v2655, %v2657
        %v2659 = vrot.slane %v2652, %v2658
        %v2660 = vcombine.low %v2566, %v2567
        %v2662 = vunpack.c.l.s4 1983009808
        %v2663 = vunpack.c.0.s8 %v2662
        %v2664 = vlaneseq
        %v2665 = vshrl.u32 %v2664, 7
        %v2666 = vsub.s32 %v2663, %v2665
        %v2667 = vrot.slane %v2660, %v2666
        %v2668 = vcombine.low %v2643, %v2651
        %v2669 = vcombine.high %v2643, %v2651
        %v2671 = vunpack.c.l.s4 1934713408
        %v2672 = vunpack.c.0.s8 %v2671
        %v2673 = vlaneseq
        %v2674 = vshrl.u32 %v2673, 7
        %v2675 = vsub.s32 %v2672, %v2674
        %v2676 = vrot.slane %v2668, %v2675
        %v2678 = vunpack.c.l.s4 1934713408
        %v2679 = vunpack.c.0.s8 %v2678
        %v2680 = vlaneseq
        %v2681 = vshrl.u32 %v2680, 7
        %v2682 = vsub.s32 %v2679, %v2681
        %v2683 = vrot.slane %v2669, %v2682
        %v2684 = vcombine.low %v2659, %v2667
        %v2685 = vcombine.high %v2659, %v2667
        %v2687 = vunpack.c.l.s4 1934713408
        %v2688 = vunpack.c.0.s8 %v2687
        %v2689 = vlaneseq
        %v2690 = vshrl.u32 %v2689, 7
        %v2691 = vsub.s32 %v2688, %v2690
        %v2692 = vrot.slane %v2684, %v2691
        %v2694 = vunpack.c.l.s4 1934713408
        %v2695 = vunpack.c.0.s8 %v2694
        %v2696 = vlaneseq
        %v2697 = vshrl.u32 %v2696, 7
        %v2698 = vsub.s32 %v2695, %v2697
        %v2699 = vrot.slane %v2685, %v2698
        %v2700 = vcombine.low %v2676, %v2692
        %v2701 = vcombine.high %v2676, %v2692
        %v2702 = vcombine.low %v2683, %v2699
        %v2703 = vcombine.high %v2683, %v2699
        %v2704 = vcombine.low %v2608, %v2615
        %v2706 = vunpack.c.l.s4 1983009808
        %v2707 = vunpack.c.0.s8 %v2706
        %v2708 = vlaneseq
        %v2709 = vshrl.u32 %v2708, 7
        %v2710 = vsub.s32 %v2707, %v2709
        %v2711 = vrot.slane %v2704, %v2710
        %v2712 = vcombine.low %v2632, %v2633
        %v2714 = vunpack.c.l.s4 1983009808
        %v2715 = vunpack.c.0.s8 %v2714
        %v2716 = vlaneseq
        %v2717 = vshrl.u32 %v2716, 7
        %v2718 = vsub.s32 %v2715, %v2717
        %v2719 = vrot.slane %v2712, %v2718
        %v2720 = vcombine.low %v2624, %v2631
        %v2722 = vunpack.c.l.s4 1983009808
        %v2723 = vunpack.c.0.s8 %v2722
        %v2724 = vlaneseq
        %v2725 = vshrl.u32 %v2724, 7
        %v2726 = vsub.s32 %v2723, %v2725
        %v2727 = vrot.slane %v2720, %v2726
        %v2728 = vcombine.low %v2634, %v2635
        %v2730 = vunpack.c.l.s4 1983009808
        %v2731 = vunpack.c.0.s8 %v2730
        %v2732 = vlaneseq
        %v2733 = vshrl.u32 %v2732, 7
        %v2734 = vsub.s32 %v2731, %v2733
        %v2735 = vrot.slane %v2728, %v2734
        %v2736 = vcombine.low %v2711, %v2719
        %v2737 = vcombine.high %v2711, %v2719
        %v2739 = vunpack.c.l.s4 1934713408
        %v2740 = vunpack.c.0.s8 %v2739
        %v2741 = vlaneseq
        %v2742 = vshrl.u32 %v2741, 7
        %v2743 = vsub.s32 %v2740, %v2742
        %v2744 = vrot.slane %v2736, %v2743
        %v2746 = vunpack.c.l.s4 1934713408
        %v2747 = vunpack.c.0.s8 %v2746
        %v2748 = vlaneseq
        %v2749 = vshrl.u32 %v2748, 7
        %v2750 = vsub.s32 %v2747, %v2749
        %v2751 = vrot.slane %v2737, %v2750
        %v2752 = vcombine.low %v2727, %v2735
        %v2753 = vcombine.high %v2727, %v2735
        %v2755 = vunpack.c.l.s4 1934713408
        %v2756 = vunpack.c.0.s8 %v2755
        %v2757 = vlaneseq
        %v2758 = vshrl.u32 %v2757, 7
        %v2759 = vsub.s32 %v2756, %v2758
        %v2760 = vrot.slane %v2752, %v2759
        %v2762 = vunpack.c.l.s4 1934713408
        %v2763 = vunpack.c.0.s8 %v2762
        %v2764 = vlaneseq
        %v2765 = vshrl.u32 %v2764, 7
        %v2766 = vsub.s32 %v2763, %v2765
        %v2767 = vrot.slane %v2753, %v2766
        %v2768 = vcombine.low %v2744, %v2760
        %v2769 = vcombine.high %v2744, %v2760
        %v2770 = vcombine.low %v2751, %v2767
        %v2771 = vcombine.high %v2751, %v2767
        %2774 = vrot.lane.b32.xlu0 %v2701, 32
        %v2775 = vpop.permute.xlu0 %2774
        %2776 = vrot.lane.b32.xlu0 %v2769, 32
        %v2777 = vpop.permute.xlu0 %2776
        %2782 = vrot.lane.b32.xlu0 %v2702, 64
        %v2783 = vpop.permute.xlu0 %2782
        %2784 = vrot.lane.b32.xlu0 %v2770, 64
        %v2785 = vpop.permute.xlu0 %2784
        %2790 = vrot.lane.b32.xlu0 %v2703, 96
        %v2791 = vpop.permute.xlu0 %2790
        %2792 = vrot.lane.b32.xlu0 %v2771, 96
        %v2793 = vpop.permute.xlu0 %2792
        %v2796 = vsel %vm2042, %v2700, %v2775
        %v2797 = vsel %vm2042, %v2768, %v2777
        %vm2798 = vcmask 523264
        %v2799 = vsel %vm2798, %v2796, %v2783
        %v2800 = vsel %vm2798, %v2797, %v2785
        %vm2801 = vcmask 785408
        %v2802 = vsel %vm2801, %v2799, %v2791
        %v2803 = vsel %vm2801, %v2800, %v2793
        %v2804 = vpack.c.bf16 %v2803, %v2802
        %v2805 = vld [vmem:[#allocation8] sm:$0xf]
        %v2806 = vld [vmem:[#allocation8 + $0x4] sm:$0xf]
        %v2807 = vld [vmem:[#allocation8 + $0x8] sm:$0xf]
        %v2808 = vld [vmem:[#allocation8 + $0xc] sm:$0xf]
        %v2809 = vld [vmem:[#allocation8 + $0x10] sm:$0xf]
        %v2810 = vld [vmem:[#allocation8 + $0x14] sm:$0xf]
        %v2811 = vld [vmem:[#allocation8 + $0x18] sm:$0xf]
        %v2812 = vld [vmem:[#allocation8 + $0x1c] sm:$0xf]
        %v2813 = vld [vmem:[#allocation8 + $0x20] sm:$0xf]
        %v2814 = vld [vmem:[#allocation8 + $0x24] sm:$0xf]
        %v2815 = vld [vmem:[#allocation8 + $0x28] sm:$0xf]
        %v2816 = vld [vmem:[#allocation8 + $0x2c] sm:$0xf]
        %v2817 = vld [vmem:[#allocation8 + $0x30] sm:$0xf]
        %v2818 = vld [vmem:[#allocation8 + $0x34] sm:$0xf]
        %v2819 = vld [vmem:[#allocation8 + $0x38] sm:$0xf]
        %v2820 = vld [vmem:[#allocation8 + $0x3c] sm:$0xf]
        %v2821 = vld [vmem:[%s5] sm:$0x1]
        %v2823 = vlaneseq
        %v2824 = vshrl.u32 %v2823, 7
        %v2825 = vsub.s32 0, %v2824
        %v2826 = vrot.slane %v2821, %v2825
        %v2844 = vunpack.c.l.b16 %v2805
        %v2845 = vunpack.c.l.b16 %v2806
        %v2846 = vunpack.c.l.b16 %v2807
        %v2847 = vunpack.c.l.b16 %v2808
        %v2848 = vunpack.c.l.b16 %v2809
        %v2849 = vunpack.c.l.b16 %v2810
        %v2850 = vunpack.c.l.b16 %v2811
        %v2851 = vunpack.c.l.b16 %v2812
        %v2852 = vunpack.c.l.b16 %v2813
        %v2853 = vunpack.c.l.b16 %v2814
        %v2854 = vunpack.c.l.b16 %v2815
        %v2855 = vunpack.c.l.b16 %v2816
        %v2856 = vunpack.c.l.b16 %v2817
        %v2857 = vunpack.c.l.b16 %v2818
        %v2858 = vunpack.c.l.b16 %v2819
        %v2859 = vunpack.c.l.b16 %v2820
        %v2860 = vpack.c.b16 %v2845, %v2844
        %v2861 = vpack.c.b16 %v2847, %v2846
        %v2862 = vpack.c.b16 %v2849, %v2848
        %v2863 = vpack.c.b16 %v2851, %v2850
        %v2864 = vpack.c.b16 %v2853, %v2852
        %v2865 = vpack.c.b16 %v2855, %v2854
        %v2866 = vpack.c.b16 %v2857, %v2856
        %v2867 = vpack.c.b16 %v2859, %v2858
        %2876 = vmatprep.subr.bf16.mxu0 0
        %2877 = vmatpush1.bf16.msra.mxu0 %v2867
        %2878 = vmatprep.subr.bf16.mxu0 0
        %2879 = vmatpush1.bf16.msra.mxu0 %v2866
        %2880 = vmatprep.subr.bf16.mxu0 0
        %2881 = vmatpush1.bf16.msra.mxu0 %v2865
        %2882 = vmatprep.subr.bf16.mxu0 0
        %2883 = vmatpush1.bf16.msra.mxu0 %v2864
        %2884 = vmatprep.subr.bf16.mxu0 0
        %2885 = vmatpush1.bf16.msra.mxu0 %v2863
        %2886 = vmatprep.subr.bf16.mxu0 0
        %2887 = vmatpush1.bf16.msra.mxu0 %v2862
        %2888 = vmatprep.subr.bf16.mxu0 0
        %2889 = vmatpush1.bf16.msra.mxu0 %v2861
        %2890 = vmatprep.subr.bf16.mxu0 0
        %2891 = vmatpush1.bf16.msra.mxu0 %v2860
        %2892 = vmatprep.subr.bf16.mxu0 0
        %2893 = vmatpush2.bf16.msra.mxu0 0
        %2894 = vmatprep.subr.bf16.mxu0 0
        %2895 = vmatpush2.bf16.msra.mxu0 0
        %2896 = vmatprep.subr.bf16.mxu0 0
        %2897 = vmatpush2.bf16.msra.mxu0 0
        %2898 = vmatprep.subr.bf16.mxu0 0
        %2899 = vmatpush2.bf16.msra.mxu0 0
        %2900 = vmatprep.subr.bf16.mxu0 0
        %2901 = vmatpush2.bf16.msra.mxu0 0
        %2902 = vmatprep.subr.bf16.mxu0 0
        %2903 = vmatpush2.bf16.msra.mxu0 0
        %2904 = vmatprep.subr.bf16.mxu0 0
        %2905 = vmatpush2.bf16.msra.mxu0 0
        %2906 = vmatprep.subr.bf16.mxu0 0
        %2907 = vmatpush2.bf16.msra.mxu0 0
        %2908 = vmatprep.mubr.bf16.mxu0 0
        %2909 = vmatmul.mubr.bf16.gmra.mxu0 %v2804
        %v2910 = vpop.f32.mrf.mxu0
        %v2911 = vadd.f32 %v2826, %v2910
        %v2912 = vpop.f32.mrf.mxu0
        %v2913 = vpop.f32.mrf.mxu0
        %v2914 = vadd.f32 %v2826, %v2913
        %v2915 = vpop.f32.mrf.mxu0
        %2916 = vdwg.mxu0
        %v2917 = vadd.f32 %v2911, %v957
        %v2918 = vadd.f32 %v2914, %v958
        %v2919 = vld [vmem:[%s6] sm:$0x1]
        %v2920 = vld [vmem:[%s7] sm:$0x1]
        %2921 = vadd.xlane.f32.xlu0 %v2917
        %v2922 = vpop.xlane.xlu0 %2921
        %2923 = vadd.xlane.f32.xlu0 %v2918
        %v2924 = vpop.xlane.xlu0 %2923
        %v2925 = vrcp.pop 128.0
        %v2926 = vmul.f32 %v2922, %v2925
        %v2927 = vmul.f32 %v2924, %v2925
        %v2928 = vsub.f32 %v2917, %v2926
        %v2929 = vsub.f32 %v2918, %v2927
        %v2930 = vmul.f32 %v2928, %v2928
        %v2931 = vmul.f32 %v2929, %v2929
        %2932 = vadd.xlane.f32.xlu0 %v2930
        %v2933 = vpop.xlane.xlu0 %2932
        %2934 = vadd.xlane.f32.xlu0 %v2931
        %v2935 = vpop.xlane.xlu0 %2934
        %v2936 = vmul.f32 %v2933, %v2925
        %v2937 = vmul.f32 %v2935, %v2925
        %v2938 = vadd.f32 %v2936, 1e-05
        %v2939 = vadd.f32 %v2937, 1e-05
        %v2940 = vrsqrt.pop %v2938
        %v2941 = vrsqrt.pop %v2939
        %v2942 = vmul.f32 %v2928, %v2940
        %v2943 = vmul.f32 %v2929, %v2941
        %v2945 = vlaneseq
        %v2946 = vshrl.u32 %v2945, 7
        %v2947 = vsub.s32 0, %v2946
        %v2948 = vrot.slane %v2919, %v2947
        %v2950 = vmul.f32 %v2942, %v2948
        %v2951 = vmul.f32 %v2943, %v2948
        %v2953 = vlaneseq
        %v2954 = vshrl.u32 %v2953, 7
        %v2955 = vsub.s32 0, %v2954
        %v2956 = vrot.slane %v2920, %v2955
        %v2958 = vadd.f32 %v2950, %v2956
        %v2959 = vadd.f32 %v2951, %v2956
        %v2960 = vpack.c.bf16 %v2959, %v2958
        %v2961 = vld [vmem:[#allocation10] sm:$0xf]
        %v2962 = vld [vmem:[#allocation10 + $0x4] sm:$0xf]
        %v2963 = vld [vmem:[#allocation10 + $0x8] sm:$0xf]
        %v2964 = vld [vmem:[#allocation10 + $0xc] sm:$0xf]
        %v2965 = vld [vmem:[#allocation10 + $0x10] sm:$0xf]
        %v2966 = vld [vmem:[#allocation10 + $0x14] sm:$0xf]
        %v2967 = vld [vmem:[#allocation10 + $0x18] sm:$0xf]
        %v2968 = vld [vmem:[#allocation10 + $0x1c] sm:$0xf]
        %v2969 = vld [vmem:[#allocation10 + $0x20] sm:$0xf]
        %v2970 = vld [vmem:[#allocation10 + $0x24] sm:$0xf]
        %v2971 = vld [vmem:[#allocation10 + $0x28] sm:$0xf]
        %v2972 = vld [vmem:[#allocation10 + $0x2c] sm:$0xf]
        %v2973 = vld [vmem:[#allocation10 + $0x30] sm:$0xf]
        %v2974 = vld [vmem:[#allocation10 + $0x34] sm:$0xf]
        %v2975 = vld [vmem:[#allocation10 + $0x38] sm:$0xf]
        %v2976 = vld [vmem:[#allocation10 + $0x3c] sm:$0xf]
        %v2977 = vld [vmem:[#allocation11] sm:$0x1]
        %v2979 = vlaneseq
        %v2980 = vshrl.u32 %v2979, 7
        %v2981 = vsub.s32 0, %v2980
        %v2982 = vrot.slane %v2977, %v2981
        %v3000 = vunpack.c.l.b16 %v2961
        %v3001 = vunpack.c.l.b16 %v2962
        %v3002 = vunpack.c.l.b16 %v2963
        %v3003 = vunpack.c.l.b16 %v2964
        %v3004 = vunpack.c.l.b16 %v2965
        %v3005 = vunpack.c.l.b16 %v2966
        %v3006 = vunpack.c.l.b16 %v2967
        %v3007 = vunpack.c.l.b16 %v2968
        %v3008 = vunpack.c.l.b16 %v2969
        %v3009 = vunpack.c.l.b16 %v2970
        %v3010 = vunpack.c.l.b16 %v2971
        %v3011 = vunpack.c.l.b16 %v2972
        %v3012 = vunpack.c.l.b16 %v2973
        %v3013 = vunpack.c.l.b16 %v2974
        %v3014 = vunpack.c.l.b16 %v2975
        %v3015 = vunpack.c.l.b16 %v2976
        %v3016 = vpack.c.b16 %v3001, %v3000
        %v3017 = vpack.c.b16 %v3003, %v3002
        %v3018 = vpack.c.b16 %v3005, %v3004
        %v3019 = vpack.c.b16 %v3007, %v3006
        %v3020 = vpack.c.b16 %v3009, %v3008
        %v3021 = vpack.c.b16 %v3011, %v3010
        %v3022 = vpack.c.b16 %v3013, %v3012
        %v3023 = vpack.c.b16 %v3015, %v3014
        %3032 = vmatprep.subr.bf16.mxu0 0
        %3033 = vmatpush1.bf16.msra.mxu0 %v3023
        %3034 = vmatprep.subr.bf16.mxu0 0
        %3035 = vmatpush1.bf16.msra.mxu0 %v3022
        %3036 = vmatprep.subr.bf16.mxu0 0
        %3037 = vmatpush1.bf16.msra.mxu0 %v3021
        %3038 = vmatprep.subr.bf16.mxu0 0
        %3039 = vmatpush1.bf16.msra.mxu0 %v3020
        %3040 = vmatprep.subr.bf16.mxu0 0
        %3041 = vmatpush1.bf16.msra.mxu0 %v3019
        %3042 = vmatprep.subr.bf16.mxu0 0
        %3043 = vmatpush1.bf16.msra.mxu0 %v3018
        %3044 = vmatprep.subr.bf16.mxu0 0
        %3045 = vmatpush1.bf16.msra.mxu0 %v3017
        %3046 = vmatprep.subr.bf16.mxu0 0
        %3047 = vmatpush1.bf16.msra.mxu0 %v3016
        %3048 = vmatprep.subr.bf16.mxu0 0
        %3049 = vmatpush2.bf16.msra.mxu0 0
        %3050 = vmatprep.subr.bf16.mxu0 0
        %3051 = vmatpush2.bf16.msra.mxu0 0
        %3052 = vmatprep.subr.bf16.mxu0 0
        %3053 = vmatpush2.bf16.msra.mxu0 0
        %3054 = vmatprep.subr.bf16.mxu0 0
        %3055 = vmatpush2.bf16.msra.mxu0 0
        %3056 = vmatprep.subr.bf16.mxu0 0
        %3057 = vmatpush2.bf16.msra.mxu0 0
        %3058 = vmatprep.subr.bf16.mxu0 0
        %3059 = vmatpush2.bf16.msra.mxu0 0
        %3060 = vmatprep.subr.bf16.mxu0 0
        %3061 = vmatpush2.bf16.msra.mxu0 0
        %3062 = vmatprep.subr.bf16.mxu0 0
        %3063 = vmatpush2.bf16.msra.mxu0 0
        %3064 = vmatprep.mubr.bf16.mxu0 0
        %3065 = vmatmul.mubr.bf16.gmra.mxu0 %v2960
        %v3066 = vpop.f32.mrf.mxu0
        %v3067 = vadd.f32 %v2982, %v3066
        %v3068 = vpop.f32.mrf.mxu0
        %v3069 = vpop.f32.mrf.mxu0
        %v3070 = vadd.f32 %v2982, %v3069
        %v3071 = vpop.f32.mrf.mxu0
        %3072 = vdwg.mxu0
        %v3073 = vld [vmem:[#allocation13] sm:$0xff]
        %v3074 = vld [vmem:[#allocation13 + $0x8] sm:$0xff]
        %v3075 = vld [vmem:[#allocation13 + $0x10] sm:$0xff]
        %v3076 = vld [vmem:[#allocation13 + $0x18] sm:$0xff]
        %v3077 = vld [vmem:[#allocation13 + $0x20] sm:$0xff]
        %v3078 = vld [vmem:[#allocation13 + $0x28] sm:$0xff]
        %v3079 = vld [vmem:[#allocation13 + $0x30] sm:$0xff]
        %v3080 = vld [vmem:[#allocation13 + $0x38] sm:$0xff]
        %v3081 = vld [vmem:[#allocation13 + $0x40] sm:$0xff]
        %v3082 = vld [vmem:[#allocation13 + $0x48] sm:$0xff]
        %v3083 = vld [vmem:[#allocation13 + $0x50] sm:$0xff]
        %v3084 = vld [vmem:[#allocation13 + $0x58] sm:$0xff]
        %v3085 = vld [vmem:[#allocation13 + $0x60] sm:$0xff]
        %v3086 = vld [vmem:[#allocation13 + $0x68] sm:$0xff]
        %v3087 = vld [vmem:[#allocation13 + $0x70] sm:$0xff]
        %v3088 = vld [vmem:[#allocation13 + $0x78] sm:$0xff]
        %v3089 = vld [vmem:[%s11] sm:$0x3]
        %v3091 = vlaneseq
        %v3092 = vshrl.u32 %v3091, 7
        %v3093 = vsub.s32 0, %v3092
        %v3094 = vrot.slane %v3089, %v3093
        %v3095 = vlaneseq
        %v3096 = vshrl.u32 %v3095, 7
        %v3097 = vsub.s32 1, %v3096
        %v3098 = vrot.slane %v3089, %v3097
        %v3103 = vunpack.c.l.b16 %v959
        %v3104 = vunpack.c.l.b16 %v960
        %v3105 = vpack.c.b16 %v3104, %v3103
        %v3123 = vunpack.c.l.b16 %v3073
        %v3124 = vunpack.c.h.b16 %v3073
        %v3125 = vunpack.c.l.b16 %v3074
        %v3126 = vunpack.c.h.b16 %v3074
        %v3127 = vunpack.c.l.b16 %v3075
        %v3128 = vunpack.c.h.b16 %v3075
        %v3129 = vunpack.c.l.b16 %v3076
        %v3130 = vunpack.c.h.b16 %v3076
        %v3131 = vunpack.c.l.b16 %v3077
        %v3132 = vunpack.c.h.b16 %v3077
        %v3133 = vunpack.c.l.b16 %v3078
        %v3134 = vunpack.c.h.b16 %v3078
        %v3135 = vunpack.c.l.b16 %v3079
        %v3136 = vunpack.c.h.b16 %v3079
        %v3137 = vunpack.c.l.b16 %v3080
        %v3138 = vunpack.c.h.b16 %v3080
        %v3139 = vunpack.c.l.b16 %v3081
        %v3140 = vunpack.c.h.b16 %v3081
        %v3141 = vunpack.c.l.b16 %v3082
        %v3142 = vunpack.c.h.b16 %v3082
        %v3143 = vunpack.c.l.b16 %v3083
        %v3144 = vunpack.c.h.b16 %v3083
        %v3145 = vunpack.c.l.b16 %v3084
        %v3146 = vunpack.c.h.b16 %v3084
        %v3147 = vunpack.c.l.b16 %v3085
        %v3148 = vunpack.c.h.b16 %v3085
        %v3149 = vunpack.c.l.b16 %v3086
        %v3150 = vunpack.c.h.b16 %v3086
        %v3151 = vunpack.c.l.b16 %v3087
        %v3152 = vunpack.c.h.b16 %v3087
        %v3153 = vunpack.c.l.b16 %v3088
        %v3154 = vunpack.c.h.b16 %v3088
        %v3155 = vpack.c.b16 %v3125, %v3123
        %v3156 = vpack.c.b16 %v3126, %v3124
        %v3157 = vpack.c.b16 %v3129, %v3127
        %v3158 = vpack.c.b16 %v3130, %v3128
        %v3159 = vpack.c.b16 %v3133, %v3131
        %v3160 = vpack.c.b16 %v3134, %v3132
        %v3161 = vpack.c.b16 %v3137, %v3135
        %v3162 = vpack.c.b16 %v3138, %v3136
        %v3163 = vpack.c.b16 %v3141, %v3139
        %v3164 = vpack.c.b16 %v3142, %v3140
        %v3165 = vpack.c.b16 %v3145, %v3143
        %v3166 = vpack.c.b16 %v3146, %v3144
        %v3167 = vpack.c.b16 %v3149, %v3147
        %v3168 = vpack.c.b16 %v3150, %v3148
        %v3169 = vpack.c.b16 %v3153, %v3151
        %v3170 = vpack.c.b16 %v3154, %v3152
        %3187 = vmatprep.subr.bf16.mxu0 %v3170
        %3188 = vmatpush1.bf16.msra.mxu0 %v3169
        %3189 = vmatprep.subr.bf16.mxu0 %v3168
        %3190 = vmatpush1.bf16.msra.mxu0 %v3167
        %3191 = vmatprep.subr.bf16.mxu0 %v3166
        %3192 = vmatpush1.bf16.msra.mxu0 %v3165
        %3193 = vmatprep.subr.bf16.mxu0 %v3164
        %3194 = vmatpush1.bf16.msra.mxu0 %v3163
        %3195 = vmatprep.subr.bf16.mxu0 %v3162
        %3196 = vmatpush1.bf16.msra.mxu0 %v3161
        %3197 = vmatprep.subr.bf16.mxu0 %v3160
        %3198 = vmatpush1.bf16.msra.mxu0 %v3159
        %3199 = vmatprep.subr.bf16.mxu0 %v3158
        %3200 = vmatpush1.bf16.msra.mxu0 %v3157
        %3201 = vmatprep.subr.bf16.mxu0 %v3156
        %3202 = vmatpush1.bf16.msra.mxu0 %v3155
        %3203 = vmatprep.subr.bf16.mxu0 0
        %3204 = vmatpush2.bf16.msra.mxu0 0
        %3205 = vmatprep.subr.bf16.mxu0 0
        %3206 = vmatpush2.bf16.msra.mxu0 0
        %3207 = vmatprep.subr.bf16.mxu0 0
        %3208 = vmatpush2.bf16.msra.mxu0 0
        %3209 = vmatprep.subr.bf16.mxu0 0
        %3210 = vmatpush2.bf16.msra.mxu0 0
        %3211 = vmatprep.subr.bf16.mxu0 0
        %3212 = vmatpush2.bf16.msra.mxu0 0
        %3213 = vmatprep.subr.bf16.mxu0 0
        %3214 = vmatpush2.bf16.msra.mxu0 0
        %3215 = vmatprep.subr.bf16.mxu0 0
        %3216 = vmatpush2.bf16.msra.mxu0 0
        %3217 = vmatprep.subr.bf16.mxu0 0
        %3218 = vmatpush2.bf16.msra.mxu0 0
        %3219 = vmatprep.mubr.bf16.mxu0 0
        %3220 = vmatmul.mubr.bf16.gmra.mxu0 %v3105
        %v3221 = vpop.f32.mrf.mxu0
        %v3222 = vadd.f32 %v3094, %v3221
        %v3223 = vpop.f32.mrf.mxu0
        %v3224 = vadd.f32 %v3098, %v3223
        %v3225 = vpop.f32.mrf.mxu0
        %v3226 = vadd.f32 %v3094, %v3225
        %v3227 = vpop.f32.mrf.mxu0
        %v3228 = vadd.f32 %v3098, %v3227
        %3229 = vdwg.mxu0
        %v3230 = vpack.c.bf16 %v3070, %v3067
        %3232 = vrot.lane.b32.xlu0 %v3230, 96
        %v3233 = vpop.permute.xlu0 %3232
        %3234 = vrot.lane.b32.xlu0 %v3230, 64
        %v3235 = vpop.permute.xlu0 %3234
        %3236 = vrot.lane.b32.xlu0 %v3230, 32
        %v3237 = vpop.permute.xlu0 %3236
        %v3240 = vpack.i.b16 %v3233, %v3230
        %v3242 = vshrl.u32 %v3230, 16
        %v3243 = vshrl.u32 %v3233, 16
        %v3244 = vpack.i.b16 %v3243, %v3242
        %v3248 = vpack.i.b16 %v3237, %v3235
        %v3250 = vshrl.u32 %v3235, 16
        %v3251 = vshrl.u32 %v3237, 16
        %v3252 = vpack.i.b16 %v3251, %v3250
        %v3254 = vcombine.high %v3240, %v1253
        %v3256 = vunpack.c.l.s4 1983009808
        %v3257 = vunpack.c.0.s8 %v3256
        %v3258 = vlaneseq
        %v3259 = vshrl.u32 %v3258, 7
        %v3260 = vsub.s32 %v3257, %v3259
        %v3261 = vrot.slane %v3240, %v3260
        %v3263 = vunpack.c.l.s4 1983009808
        %v3264 = vunpack.c.0.s8 %v3263
        %v3265 = vlaneseq
        %v3266 = vshrl.u32 %v3265, 7
        %v3267 = vsub.s32 %v3264, %v3266
        %v3268 = vrot.slane %v3254, %v3267
        %v3269 = vcombine.high %v3248, %v1253
        %v3271 = vunpack.c.l.s4 1983009808
        %v3272 = vunpack.c.0.s8 %v3271
        %v3273 = vlaneseq
        %v3274 = vshrl.u32 %v3273, 7
        %v3275 = vsub.s32 %v3272, %v3274
        %v3276 = vrot.slane %v3248, %v3275
        %v3278 = vunpack.c.l.s4 1983009808
        %v3279 = vunpack.c.0.s8 %v3278
        %v3280 = vlaneseq
        %v3281 = vshrl.u32 %v3280, 7
        %v3282 = vsub.s32 %v3279, %v3281
        %v3283 = vrot.slane %v3269, %v3282
        %v3284 = vcombine.low %v3261, %v3276
        %v3285 = vcombine.high %v3261, %v3276
        %v3287 = vunpack.c.l.s4 1934713408
        %v3288 = vunpack.c.0.s8 %v3287
        %v3289 = vlaneseq
        %v3290 = vshrl.u32 %v3289, 7
        %v3291 = vsub.s32 %v3288, %v3290
        %v3292 = vrot.slane %v3284, %v3291
        %v3294 = vunpack.c.l.s4 1934713408
        %v3295 = vunpack.c.0.s8 %v3294
        %v3296 = vlaneseq
        %v3297 = vshrl.u32 %v3296, 7
        %v3298 = vsub.s32 %v3295, %v3297
        %v3299 = vrot.slane %v3285, %v3298
        %v3300 = vcombine.low %v3268, %v3283
        %v3301 = vcombine.high %v3268, %v3283
        %v3303 = vunpack.c.l.s4 1934713408
        %v3304 = vunpack.c.0.s8 %v3303
        %v3305 = vlaneseq
        %v3306 = vshrl.u32 %v3305, 7
        %v3307 = vsub.s32 %v3304, %v3306
        %v3308 = vrot.slane %v3300, %v3307
        %v3310 = vunpack.c.l.s4 1934713408
        %v3311 = vunpack.c.0.s8 %v3310
        %v3312 = vlaneseq
        %v3313 = vshrl.u32 %v3312, 7
        %v3314 = vsub.s32 %v3311, %v3313
        %v3315 = vrot.slane %v3301, %v3314
        %v3316 = vcombine.high %v3292, 0
        %v3317 = vcombine.high %v3299, 0
        %v3318 = vcombine.high %v3308, 0
        %v3319 = vcombine.high %v3315, 0
        %v3320 = vcombine.high %v3244, %v1256
        %v3322 = vunpack.c.l.s4 1983009808
        %v3323 = vunpack.c.0.s8 %v3322
        %v3324 = vlaneseq
        %v3325 = vshrl.u32 %v3324, 7
        %v3326 = vsub.s32 %v3323, %v3325
        %v3327 = vrot.slane %v3244, %v3326
        %v3329 = vunpack.c.l.s4 1983009808
        %v3330 = vunpack.c.0.s8 %v3329
        %v3331 = vlaneseq
        %v3332 = vshrl.u32 %v3331, 7
        %v3333 = vsub.s32 %v3330, %v3332
        %v3334 = vrot.slane %v3320, %v3333
        %v3335 = vcombine.high %v3252, %v1256
        %v3337 = vunpack.c.l.s4 1983009808
        %v3338 = vunpack.c.0.s8 %v3337
        %v3339 = vlaneseq
        %v3340 = vshrl.u32 %v3339, 7
        %v3341 = vsub.s32 %v3338, %v3340
        %v3342 = vrot.slane %v3252, %v3341
        %v3344 = vunpack.c.l.s4 1983009808
        %v3345 = vunpack.c.0.s8 %v3344
        %v3346 = vlaneseq
        %v3347 = vshrl.u32 %v3346, 7
        %v3348 = vsub.s32 %v3345, %v3347
        %v3349 = vrot.slane %v3335, %v3348
        %v3350 = vcombine.low %v3327, %v3342
        %v3351 = vcombine.high %v3327, %v3342
        %v3353 = vunpack.c.l.s4 1934713408
        %v3354 = vunpack.c.0.s8 %v3353
        %v3355 = vlaneseq
        %v3356 = vshrl.u32 %v3355, 7
        %v3357 = vsub.s32 %v3354, %v3356
        %v3358 = vrot.slane %v3350, %v3357
        %v3360 = vunpack.c.l.s4 1934713408
        %v3361 = vunpack.c.0.s8 %v3360
        %v3362 = vlaneseq
        %v3363 = vshrl.u32 %v3362, 7
        %v3364 = vsub.s32 %v3361, %v3363
        %v3365 = vrot.slane %v3351, %v3364
        %v3366 = vcombine.low %v3334, %v3349
        %v3367 = vcombine.high %v3334, %v3349
        %v3369 = vunpack.c.l.s4 1934713408
        %v3370 = vunpack.c.0.s8 %v3369
        %v3371 = vlaneseq
        %v3372 = vshrl.u32 %v3371, 7
        %v3373 = vsub.s32 %v3370, %v3372
        %v3374 = vrot.slane %v3366, %v3373
        %v3376 = vunpack.c.l.s4 1934713408
        %v3377 = vunpack.c.0.s8 %v3376
        %v3378 = vlaneseq
        %v3379 = vshrl.u32 %v3378, 7
        %v3380 = vsub.s32 %v3377, %v3379
        %v3381 = vrot.slane %v3367, %v3380
        %v3382 = vcombine.high %v3358, 0
        %v3383 = vcombine.high %v3365, 0
        %v3384 = vcombine.high %v3374, 0
        %v3385 = vcombine.high %v3381, 0
        %v3386 = vcombine.low %v3292, %v3299
        %v3388 = vunpack.c.l.s4 1983009808
        %v3389 = vunpack.c.0.s8 %v3388
        %v3390 = vlaneseq
        %v3391 = vshrl.u32 %v3390, 7
        %v3392 = vsub.s32 %v3389, %v3391
        %v3393 = vrot.slane %v3386, %v3392
        %v3394 = vcombine.low %v3316, %v3317
        %v3396 = vunpack.c.l.s4 1983009808
        %v3397 = vunpack.c.0.s8 %v3396
        %v3398 = vlaneseq
        %v3399 = vshrl.u32 %v3398, 7
        %v3400 = vsub.s32 %v3397, %v3399
        %v3401 = vrot.slane %v3394, %v3400
        %v3402 = vcombine.low %v3308, %v3315
        %v3404 = vunpack.c.l.s4 1983009808
        %v3405 = vunpack.c.0.s8 %v3404
        %v3406 = vlaneseq
        %v3407 = vshrl.u32 %v3406, 7
        %v3408 = vsub.s32 %v3405, %v3407
        %v3409 = vrot.slane %v3402, %v3408
        %v3410 = vcombine.low %v3318, %v3319
        %v3412 = vunpack.c.l.s4 1983009808
        %v3413 = vunpack.c.0.s8 %v3412
        %v3414 = vlaneseq
        %v3415 = vshrl.u32 %v3414, 7
        %v3416 = vsub.s32 %v3413, %v3415
        %v3417 = vrot.slane %v3410, %v3416
        %v3418 = vcombine.low %v3393, %v3401
        %v3420 = vunpack.c.l.s4 1934713408
        %v3421 = vunpack.c.0.s8 %v3420
        %v3422 = vlaneseq
        %v3423 = vshrl.u32 %v3422, 7
        %v3424 = vsub.s32 %v3421, %v3423
        %v3425 = vrot.slane %v3418, %v3424
        %v3426 = vcombine.low %v3409, %v3417
        %v3428 = vunpack.c.l.s4 1934713408
        %v3429 = vunpack.c.0.s8 %v3428
        %v3430 = vlaneseq
        %v3431 = vshrl.u32 %v3430, 7
        %v3432 = vsub.s32 %v3429, %v3431
        %v3433 = vrot.slane %v3426, %v3432
        %v3434 = vcombine.low %v3425, %v3433
        %v3435 = vcombine.high %v3425, %v3433
        %v3436 = vcombine.low %v3358, %v3365
        %v3438 = vunpack.c.l.s4 1983009808
        %v3439 = vunpack.c.0.s8 %v3438
        %v3440 = vlaneseq
        %v3441 = vshrl.u32 %v3440, 7
        %v3442 = vsub.s32 %v3439, %v3441
        %v3443 = vrot.slane %v3436, %v3442
        %v3444 = vcombine.low %v3382, %v3383
        %v3446 = vunpack.c.l.s4 1983009808
        %v3447 = vunpack.c.0.s8 %v3446
        %v3448 = vlaneseq
        %v3449 = vshrl.u32 %v3448, 7
        %v3450 = vsub.s32 %v3447, %v3449
        %v3451 = vrot.slane %v3444, %v3450
        %v3452 = vcombine.low %v3374, %v3381
        %v3454 = vunpack.c.l.s4 1983009808
        %v3455 = vunpack.c.0.s8 %v3454
        %v3456 = vlaneseq
        %v3457 = vshrl.u32 %v3456, 7
        %v3458 = vsub.s32 %v3455, %v3457
        %v3459 = vrot.slane %v3452, %v3458
        %v3460 = vcombine.low %v3384, %v3385
        %v3462 = vunpack.c.l.s4 1983009808
        %v3463 = vunpack.c.0.s8 %v3462
        %v3464 = vlaneseq
        %v3465 = vshrl.u32 %v3464, 7
        %v3466 = vsub.s32 %v3463, %v3465
        %v3467 = vrot.slane %v3460, %v3466
        %v3468 = vcombine.low %v3443, %v3451
        %v3470 = vunpack.c.l.s4 1934713408
        %v3471 = vunpack.c.0.s8 %v3470
        %v3472 = vlaneseq
        %v3473 = vshrl.u32 %v3472, 7
        %v3474 = vsub.s32 %v3471, %v3473
        %v3475 = vrot.slane %v3468, %v3474
        %v3476 = vcombine.low %v3459, %v3467
        %v3478 = vunpack.c.l.s4 1934713408
        %v3479 = vunpack.c.0.s8 %v3478
        %v3480 = vlaneseq
        %v3481 = vshrl.u32 %v3480, 7
        %v3482 = vsub.s32 %v3479, %v3481
        %v3483 = vrot.slane %v3476, %v3482
        %v3484 = vcombine.low %v3475, %v3483
        %v3485 = vcombine.high %v3475, %v3483
        %v3488 = vpack.i.b16 %v3484, %v3434
        %v3489 = vshrl.u32 %v3434, 16
        %v3490 = vshrl.u32 %v3484, 16
        %v3491 = vpack.i.b16 %v3490, %v3489
        %v3494 = vpack.i.b16 %v3485, %v3435
        %v3495 = vshrl.u32 %v3435, 16
        %v3496 = vshrl.u32 %v3485, 16
        %v3497 = vpack.i.b16 %v3496, %v3495
        %v3498 = vpack.c.bf16 %v3226, %v3222
        %3500 = vrot.lane.b32.xlu0 %v3498, 96
        %v3501 = vpop.permute.xlu0 %3500
        %3502 = vrot.lane.b32.xlu0 %v3498, 64
        %v3503 = vpop.permute.xlu0 %3502
        %3504 = vrot.lane.b32.xlu0 %v3498, 32
        %v3505 = vpop.permute.xlu0 %3504
        %v3508 = vpack.i.b16 %v3501, %v3498
        %v3510 = vshrl.u32 %v3498, 16
        %v3511 = vshrl.u32 %v3501, 16
        %v3512 = vpack.i.b16 %v3511, %v3510
        %v3516 = vpack.i.b16 %v3505, %v3503
        %v3518 = vshrl.u32 %v3503, 16
        %v3519 = vshrl.u32 %v3505, 16
        %v3520 = vpack.i.b16 %v3519, %v3518
        %v3522 = vcombine.high %v3508, %v1253
        %v3524 = vunpack.c.l.s4 1983009808
        %v3525 = vunpack.c.0.s8 %v3524
        %v3526 = vlaneseq
        %v3527 = vshrl.u32 %v3526, 7
        %v3528 = vsub.s32 %v3525, %v3527
        %v3529 = vrot.slane %v3508, %v3528
        %v3531 = vunpack.c.l.s4 1983009808
        %v3532 = vunpack.c.0.s8 %v3531
        %v3533 = vlaneseq
        %v3534 = vshrl.u32 %v3533, 7
        %v3535 = vsub.s32 %v3532, %v3534
        %v3536 = vrot.slane %v3522, %v3535
        %v3537 = vcombine.high %v3516, %v1253
        %v3539 = vunpack.c.l.s4 1983009808
        %v3540 = vunpack.c.0.s8 %v3539
        %v3541 = vlaneseq
        %v3542 = vshrl.u32 %v3541, 7
        %v3543 = vsub.s32 %v3540, %v3542
        %v3544 = vrot.slane %v3516, %v3543
        %v3546 = vunpack.c.l.s4 1983009808
        %v3547 = vunpack.c.0.s8 %v3546
        %v3548 = vlaneseq
        %v3549 = vshrl.u32 %v3548, 7
        %v3550 = vsub.s32 %v3547, %v3549
        %v3551 = vrot.slane %v3537, %v3550
        %v3552 = vcombine.low %v3529, %v3544
        %v3553 = vcombine.high %v3529, %v3544
        %v3555 = vunpack.c.l.s4 1934713408
        %v3556 = vunpack.c.0.s8 %v3555
        %v3557 = vlaneseq
        %v3558 = vshrl.u32 %v3557, 7
        %v3559 = vsub.s32 %v3556, %v3558
        %v3560 = vrot.slane %v3552, %v3559
        %v3562 = vunpack.c.l.s4 1934713408
        %v3563 = vunpack.c.0.s8 %v3562
        %v3564 = vlaneseq
        %v3565 = vshrl.u32 %v3564, 7
        %v3566 = vsub.s32 %v3563, %v3565
        %v3567 = vrot.slane %v3553, %v3566
        %v3568 = vcombine.low %v3536, %v3551
        %v3569 = vcombine.high %v3536, %v3551
        %v3571 = vunpack.c.l.s4 1934713408
        %v3572 = vunpack.c.0.s8 %v3571
        %v3573 = vlaneseq
        %v3574 = vshrl.u32 %v3573, 7
        %v3575 = vsub.s32 %v3572, %v3574
        %v3576 = vrot.slane %v3568, %v3575
        %v3578 = vunpack.c.l.s4 1934713408
        %v3579 = vunpack.c.0.s8 %v3578
        %v3580 = vlaneseq
        %v3581 = vshrl.u32 %v3580, 7
        %v3582 = vsub.s32 %v3579, %v3581
        %v3583 = vrot.slane %v3569, %v3582
        %v3584 = vcombine.high %v3560, 0
        %v3585 = vcombine.high %v3567, 0
        %v3586 = vcombine.high %v3576, 0
        %v3587 = vcombine.high %v3583, 0
        %v3588 = vcombine.high %v3512, %v1256
        %v3590 = vunpack.c.l.s4 1983009808
        %v3591 = vunpack.c.0.s8 %v3590
        %v3592 = vlaneseq
        %v3593 = vshrl.u32 %v3592, 7
        %v3594 = vsub.s32 %v3591, %v3593
        %v3595 = vrot.slane %v3512, %v3594
        %v3597 = vunpack.c.l.s4 1983009808
        %v3598 = vunpack.c.0.s8 %v3597
        %v3599 = vlaneseq
        %v3600 = vshrl.u32 %v3599, 7
        %v3601 = vsub.s32 %v3598, %v3600
        %v3602 = vrot.slane %v3588, %v3601
        %v3603 = vcombine.high %v3520, %v1256
        %v3605 = vunpack.c.l.s4 1983009808
        %v3606 = vunpack.c.0.s8 %v3605
        %v3607 = vlaneseq
        %v3608 = vshrl.u32 %v3607, 7
        %v3609 = vsub.s32 %v3606, %v3608
        %v3610 = vrot.slane %v3520, %v3609
        %v3612 = vunpack.c.l.s4 1983009808
        %v3613 = vunpack.c.0.s8 %v3612
        %v3614 = vlaneseq
        %v3615 = vshrl.u32 %v3614, 7
        %v3616 = vsub.s32 %v3613, %v3615
        %v3617 = vrot.slane %v3603, %v3616
        %v3618 = vcombine.low %v3595, %v3610
        %v3619 = vcombine.high %v3595, %v3610
        %v3621 = vunpack.c.l.s4 1934713408
        %v3622 = vunpack.c.0.s8 %v3621
        %v3623 = vlaneseq
        %v3624 = vshrl.u32 %v3623, 7
        %v3625 = vsub.s32 %v3622, %v3624
        %v3626 = vrot.slane %v3618, %v3625
        %v3628 = vunpack.c.l.s4 1934713408
        %v3629 = vunpack.c.0.s8 %v3628
        %v3630 = vlaneseq
        %v3631 = vshrl.u32 %v3630, 7
        %v3632 = vsub.s32 %v3629, %v3631
        %v3633 = vrot.slane %v3619, %v3632
        %v3634 = vcombine.low %v3602, %v3617
        %v3635 = vcombine.high %v3602, %v3617
        %v3637 = vunpack.c.l.s4 1934713408
        %v3638 = vunpack.c.0.s8 %v3637
        %v3639 = vlaneseq
        %v3640 = vshrl.u32 %v3639, 7
        %v3641 = vsub.s32 %v3638, %v3640
        %v3642 = vrot.slane %v3634, %v3641
        %v3644 = vunpack.c.l.s4 1934713408
        %v3645 = vunpack.c.0.s8 %v3644
        %v3646 = vlaneseq
        %v3647 = vshrl.u32 %v3646, 7
        %v3648 = vsub.s32 %v3645, %v3647
        %v3649 = vrot.slane %v3635, %v3648
        %v3650 = vcombine.high %v3626, 0
        %v3651 = vcombine.high %v3633, 0
        %v3652 = vcombine.high %v3642, 0
        %v3653 = vcombine.high %v3649, 0
        %v3654 = vcombine.low %v3560, %v3567
        %v3656 = vunpack.c.l.s4 1983009808
        %v3657 = vunpack.c.0.s8 %v3656
        %v3658 = vlaneseq
        %v3659 = vshrl.u32 %v3658, 7
        %v3660 = vsub.s32 %v3657, %v3659
        %v3661 = vrot.slane %v3654, %v3660
        %v3662 = vcombine.low %v3584, %v3585
        %v3664 = vunpack.c.l.s4 1983009808
        %v3665 = vunpack.c.0.s8 %v3664
        %v3666 = vlaneseq
        %v3667 = vshrl.u32 %v3666, 7
        %v3668 = vsub.s32 %v3665, %v3667
        %v3669 = vrot.slane %v3662, %v3668
        %v3670 = vcombine.low %v3576, %v3583
        %v3672 = vunpack.c.l.s4 1983009808
        %v3673 = vunpack.c.0.s8 %v3672
        %v3674 = vlaneseq
        %v3675 = vshrl.u32 %v3674, 7
        %v3676 = vsub.s32 %v3673, %v3675
        %v3677 = vrot.slane %v3670, %v3676
        %v3678 = vcombine.low %v3586, %v3587
        %v3680 = vunpack.c.l.s4 1983009808
        %v3681 = vunpack.c.0.s8 %v3680
        %v3682 = vlaneseq
        %v3683 = vshrl.u32 %v3682, 7
        %v3684 = vsub.s32 %v3681, %v3683
        %v3685 = vrot.slane %v3678, %v3684
        %v3686 = vcombine.low %v3661, %v3669
        %v3688 = vunpack.c.l.s4 1934713408
        %v3689 = vunpack.c.0.s8 %v3688
        %v3690 = vlaneseq
        %v3691 = vshrl.u32 %v3690, 7
        %v3692 = vsub.s32 %v3689, %v3691
        %v3693 = vrot.slane %v3686, %v3692
        %v3694 = vcombine.low %v3677, %v3685
        %v3696 = vunpack.c.l.s4 1934713408
        %v3697 = vunpack.c.0.s8 %v3696
        %v3698 = vlaneseq
        %v3699 = vshrl.u32 %v3698, 7
        %v3700 = vsub.s32 %v3697, %v3699
        %v3701 = vrot.slane %v3694, %v3700
        %v3702 = vcombine.low %v3693, %v3701
        %v3703 = vcombine.high %v3693, %v3701
        %v3704 = vcombine.low %v3626, %v3633
        %v3706 = vunpack.c.l.s4 1983009808
        %v3707 = vunpack.c.0.s8 %v3706
        %v3708 = vlaneseq
        %v3709 = vshrl.u32 %v3708, 7
        %v3710 = vsub.s32 %v3707, %v3709
        %v3711 = vrot.slane %v3704, %v3710
        %v3712 = vcombine.low %v3650, %v3651
        %v3714 = vunpack.c.l.s4 1983009808
        %v3715 = vunpack.c.0.s8 %v3714
        %v3716 = vlaneseq
        %v3717 = vshrl.u32 %v3716, 7
        %v3718 = vsub.s32 %v3715, %v3717
        %v3719 = vrot.slane %v3712, %v3718
        %v3720 = vcombine.low %v3642, %v3649
        %v3722 = vunpack.c.l.s4 1983009808
        %v3723 = vunpack.c.0.s8 %v3722
        %v3724 = vlaneseq
        %v3725 = vshrl.u32 %v3724, 7
        %v3726 = vsub.s32 %v3723, %v3725
        %v3727 = vrot.slane %v3720, %v3726
        %v3728 = vcombine.low %v3652, %v3653
        %v3730 = vunpack.c.l.s4 1983009808
        %v3731 = vunpack.c.0.s8 %v3730
        %v3732 = vlaneseq
        %v3733 = vshrl.u32 %v3732, 7
        %v3734 = vsub.s32 %v3731, %v3733
        %v3735 = vrot.slane %v3728, %v3734
        %v3736 = vcombine.low %v3711, %v3719
        %v3738 = vunpack.c.l.s4 1934713408
        %v3739 = vunpack.c.0.s8 %v3738
        %v3740 = vlaneseq
        %v3741 = vshrl.u32 %v3740, 7
        %v3742 = vsub.s32 %v3739, %v3741
        %v3743 = vrot.slane %v3736, %v3742
        %v3744 = vcombine.low %v3727, %v3735
        %v3746 = vunpack.c.l.s4 1934713408
        %v3747 = vunpack.c.0.s8 %v3746
        %v3748 = vlaneseq
        %v3749 = vshrl.u32 %v3748, 7
        %v3750 = vsub.s32 %v3747, %v3749
        %v3751 = vrot.slane %v3744, %v3750
        %v3752 = vcombine.low %v3743, %v3751
        %v3753 = vcombine.high %v3743, %v3751
        %v3756 = vpack.i.b16 %v3752, %v3702
        %v3757 = vshrl.u32 %v3702, 16
        %v3758 = vshrl.u32 %v3752, 16
        %v3759 = vpack.i.b16 %v3758, %v3757
        %v3762 = vpack.i.b16 %v3753, %v3703
        %v3763 = vshrl.u32 %v3703, 16
        %v3764 = vshrl.u32 %v3753, 16
        %v3765 = vpack.i.b16 %v3764, %v3763
        %v3766 = vpack.c.bf16 %v3228, %v3224
        %3768 = vrot.lane.b32.xlu0 %v3766, 96
        %v3769 = vpop.permute.xlu0 %3768
        %3770 = vrot.lane.b32.xlu0 %v3766, 64
        %v3771 = vpop.permute.xlu0 %3770
        %3772 = vrot.lane.b32.xlu0 %v3766, 32
        %v3773 = vpop.permute.xlu0 %3772
        %v3776 = vpack.i.b16 %v3769, %v3766
        %v3778 = vshrl.u32 %v3766, 16
        %v3779 = vshrl.u32 %v3769, 16
        %v3780 = vpack.i.b16 %v3779, %v3778
        %v3784 = vpack.i.b16 %v3773, %v3771
        %v3786 = vshrl.u32 %v3771, 16
        %v3787 = vshrl.u32 %v3773, 16
        %v3788 = vpack.i.b16 %v3787, %v3786
        %v3790 = vcombine.high %v3776, %v1253
        %v3792 = vunpack.c.l.s4 1983009808
        %v3793 = vunpack.c.0.s8 %v3792
        %v3794 = vlaneseq
        %v3795 = vshrl.u32 %v3794, 7
        %v3796 = vsub.s32 %v3793, %v3795
        %v3797 = vrot.slane %v3776, %v3796
        %v3799 = vunpack.c.l.s4 1983009808
        %v3800 = vunpack.c.0.s8 %v3799
        %v3801 = vlaneseq
        %v3802 = vshrl.u32 %v3801, 7
        %v3803 = vsub.s32 %v3800, %v3802
        %v3804 = vrot.slane %v3790, %v3803
        %v3805 = vcombine.high %v3784, %v1253
        %v3807 = vunpack.c.l.s4 1983009808
        %v3808 = vunpack.c.0.s8 %v3807
        %v3809 = vlaneseq
        %v3810 = vshrl.u32 %v3809, 7
        %v3811 = vsub.s32 %v3808, %v3810
        %v3812 = vrot.slane %v3784, %v3811
        %v3814 = vunpack.c.l.s4 1983009808
        %v3815 = vunpack.c.0.s8 %v3814
        %v3816 = vlaneseq
        %v3817 = vshrl.u32 %v3816, 7
        %v3818 = vsub.s32 %v3815, %v3817
        %v3819 = vrot.slane %v3805, %v3818
        %v3820 = vcombine.low %v3797, %v3812
        %v3821 = vcombine.high %v3797, %v3812
        %v3823 = vunpack.c.l.s4 1934713408
        %v3824 = vunpack.c.0.s8 %v3823
        %v3825 = vlaneseq
        %v3826 = vshrl.u32 %v3825, 7
        %v3827 = vsub.s32 %v3824, %v3826
        %v3828 = vrot.slane %v3820, %v3827
        %v3830 = vunpack.c.l.s4 1934713408
        %v3831 = vunpack.c.0.s8 %v3830
        %v3832 = vlaneseq
        %v3833 = vshrl.u32 %v3832, 7
        %v3834 = vsub.s32 %v3831, %v3833
        %v3835 = vrot.slane %v3821, %v3834
        %v3836 = vcombine.low %v3804, %v3819
        %v3837 = vcombine.high %v3804, %v3819
        %v3839 = vunpack.c.l.s4 1934713408
        %v3840 = vunpack.c.0.s8 %v3839
        %v3841 = vlaneseq
        %v3842 = vshrl.u32 %v3841, 7
        %v3843 = vsub.s32 %v3840, %v3842
        %v3844 = vrot.slane %v3836, %v3843
        %v3846 = vunpack.c.l.s4 1934713408
        %v3847 = vunpack.c.0.s8 %v3846
        %v3848 = vlaneseq
        %v3849 = vshrl.u32 %v3848, 7
        %v3850 = vsub.s32 %v3847, %v3849
        %v3851 = vrot.slane %v3837, %v3850
        %v3852 = vcombine.high %v3828, 0
        %v3853 = vcombine.high %v3835, 0
        %v3854 = vcombine.high %v3844, 0
        %v3855 = vcombine.high %v3851, 0
        %v3856 = vcombine.high %v3780, %v1256
        %v3858 = vunpack.c.l.s4 1983009808
        %v3859 = vunpack.c.0.s8 %v3858
        %v3860 = vlaneseq
        %v3861 = vshrl.u32 %v3860, 7
        %v3862 = vsub.s32 %v3859, %v3861
        %v3863 = vrot.slane %v3780, %v3862
        %v3865 = vunpack.c.l.s4 1983009808
        %v3866 = vunpack.c.0.s8 %v3865
        %v3867 = vlaneseq
        %v3868 = vshrl.u32 %v3867, 7
        %v3869 = vsub.s32 %v3866, %v3868
        %v3870 = vrot.slane %v3856, %v3869
        %v3871 = vcombine.high %v3788, %v1256
        %v3873 = vunpack.c.l.s4 1983009808
        %v3874 = vunpack.c.0.s8 %v3873
        %v3875 = vlaneseq
        %v3876 = vshrl.u32 %v3875, 7
        %v3877 = vsub.s32 %v3874, %v3876
        %v3878 = vrot.slane %v3788, %v3877
        %v3880 = vunpack.c.l.s4 1983009808
        %v3881 = vunpack.c.0.s8 %v3880
        %v3882 = vlaneseq
        %v3883 = vshrl.u32 %v3882, 7
        %v3884 = vsub.s32 %v3881, %v3883
        %v3885 = vrot.slane %v3871, %v3884
        %v3886 = vcombine.low %v3863, %v3878
        %v3887 = vcombine.high %v3863, %v3878
        %v3889 = vunpack.c.l.s4 1934713408
        %v3890 = vunpack.c.0.s8 %v3889
        %v3891 = vlaneseq
        %v3892 = vshrl.u32 %v3891, 7
        %v3893 = vsub.s32 %v3890, %v3892
        %v3894 = vrot.slane %v3886, %v3893
        %v3896 = vunpack.c.l.s4 1934713408
        %v3897 = vunpack.c.0.s8 %v3896
        %v3898 = vlaneseq
        %v3899 = vshrl.u32 %v3898, 7
        %v3900 = vsub.s32 %v3897, %v3899
        %v3901 = vrot.slane %v3887, %v3900
        %v3902 = vcombine.low %v3870, %v3885
        %v3903 = vcombine.high %v3870, %v3885
        %v3905 = vunpack.c.l.s4 1934713408
        %v3906 = vunpack.c.0.s8 %v3905
        %v3907 = vlaneseq
        %v3908 = vshrl.u32 %v3907, 7
        %v3909 = vsub.s32 %v3906, %v3908
        %v3910 = vrot.slane %v3902, %v3909
        %v3912 = vunpack.c.l.s4 1934713408
        %v3913 = vunpack.c.0.s8 %v3912
        %v3914 = vlaneseq
        %v3915 = vshrl.u32 %v3914, 7
        %v3916 = vsub.s32 %v3913, %v3915
        %v3917 = vrot.slane %v3903, %v3916
        %v3918 = vcombine.high %v3894, 0
        %v3919 = vcombine.high %v3901, 0
        %v3920 = vcombine.high %v3910, 0
        %v3921 = vcombine.high %v3917, 0
        %v3922 = vcombine.low %v3828, %v3835
        %v3924 = vunpack.c.l.s4 1983009808
        %v3925 = vunpack.c.0.s8 %v3924
        %v3926 = vlaneseq
        %v3927 = vshrl.u32 %v3926, 7
        %v3928 = vsub.s32 %v3925, %v3927
        %v3929 = vrot.slane %v3922, %v3928
        %v3930 = vcombine.low %v3852, %v3853
        %v3932 = vunpack.c.l.s4 1983009808
        %v3933 = vunpack.c.0.s8 %v3932
        %v3934 = vlaneseq
        %v3935 = vshrl.u32 %v3934, 7
        %v3936 = vsub.s32 %v3933, %v3935
        %v3937 = vrot.slane %v3930, %v3936
        %v3938 = vcombine.low %v3844, %v3851
        %v3940 = vunpack.c.l.s4 1983009808
        %v3941 = vunpack.c.0.s8 %v3940
        %v3942 = vlaneseq
        %v3943 = vshrl.u32 %v3942, 7
        %v3944 = vsub.s32 %v3941, %v3943
        %v3945 = vrot.slane %v3938, %v3944
        %v3946 = vcombine.low %v3854, %v3855
        %v3948 = vunpack.c.l.s4 1983009808
        %v3949 = vunpack.c.0.s8 %v3948
        %v3950 = vlaneseq
        %v3951 = vshrl.u32 %v3950, 7
        %v3952 = vsub.s32 %v3949, %v3951
        %v3953 = vrot.slane %v3946, %v3952
        %v3954 = vcombine.low %v3929, %v3937
        %v3956 = vunpack.c.l.s4 1934713408
        %v3957 = vunpack.c.0.s8 %v3956
        %v3958 = vlaneseq
        %v3959 = vshrl.u32 %v3958, 7
        %v3960 = vsub.s32 %v3957, %v3959
        %v3961 = vrot.slane %v3954, %v3960
        %v3962 = vcombine.low %v3945, %v3953
        %v3964 = vunpack.c.l.s4 1934713408
        %v3965 = vunpack.c.0.s8 %v3964
        %v3966 = vlaneseq
        %v3967 = vshrl.u32 %v3966, 7
        %v3968 = vsub.s32 %v3965, %v3967
        %v3969 = vrot.slane %v3962, %v3968
        %v3970 = vcombine.low %v3961, %v3969
        %v3971 = vcombine.high %v3961, %v3969
        %v3972 = vcombine.low %v3894, %v3901
        %v3974 = vunpack.c.l.s4 1983009808
        %v3975 = vunpack.c.0.s8 %v3974
        %v3976 = vlaneseq
        %v3977 = vshrl.u32 %v3976, 7
        %v3978 = vsub.s32 %v3975, %v3977
        %v3979 = vrot.slane %v3972, %v3978
        %v3980 = vcombine.low %v3918, %v3919
        %v3982 = vunpack.c.l.s4 1983009808
        %v3983 = vunpack.c.0.s8 %v3982
        %v3984 = vlaneseq
        %v3985 = vshrl.u32 %v3984, 7
        %v3986 = vsub.s32 %v3983, %v3985
        %v3987 = vrot.slane %v3980, %v3986
        %v3988 = vcombine.low %v3910, %v3917
        %v3990 = vunpack.c.l.s4 1983009808
        %v3991 = vunpack.c.0.s8 %v3990
        %v3992 = vlaneseq
        %v3993 = vshrl.u32 %v3992, 7
        %v3994 = vsub.s32 %v3991, %v3993
        %v3995 = vrot.slane %v3988, %v3994
        %v3996 = vcombine.low %v3920, %v3921
        %v3998 = vunpack.c.l.s4 1983009808
        %v3999 = vunpack.c.0.s8 %v3998
        %v4000 = vlaneseq
        %v4001 = vshrl.u32 %v4000, 7
        %v4002 = vsub.s32 %v3999, %v4001
        %v4003 = vrot.slane %v3996, %v4002
        %v4004 = vcombine.low %v3979, %v3987
        %v4006 = vunpack.c.l.s4 1934713408
        %v4007 = vunpack.c.0.s8 %v4006
        %v4008 = vlaneseq
        %v4009 = vshrl.u32 %v4008, 7
        %v4010 = vsub.s32 %v4007, %v4009
        %v4011 = vrot.slane %v4004, %v4010
        %v4012 = vcombine.low %v3995, %v4003
        %v4014 = vunpack.c.l.s4 1934713408
        %v4015 = vunpack.c.0.s8 %v4014
        %v4016 = vlaneseq
        %v4017 = vshrl.u32 %v4016, 7
        %v4018 = vsub.s32 %v4015, %v4017
        %v4019 = vrot.slane %v4012, %v4018
        %v4020 = vcombine.low %v4011, %v4019
        %v4021 = vcombine.high %v4011, %v4019
        %v4024 = vpack.i.b16 %v4020, %v3970
        %v4026 = vshrl.u32 %v3970, 16
        %v4027 = vshrl.u32 %v4020, 16
        %v4028 = vpack.i.b16 %v4027, %v4026
        %v4032 = vpack.i.b16 %v4021, %v3971
        %v4034 = vshrl.u32 %v3971, 16
        %v4035 = vshrl.u32 %v4021, 16
        %v4036 = vpack.i.b16 %v4035, %v4034
        %v4039 = vsel %vm2042, %v3488, 0
        %v4042 = vsel %vm2042, %v3756, 0
        %4044 = vmatprep.subr.bf16.mxu0 0
        %4045 = vmatpush1.bf16.xpose.msra.mxu0 0
        %4046 = vmatprep.subr.bf16.mxu0 0
        %4047 = vmatpush1.bf16.xpose.msra.mxu0 0
        %4048 = vmatprep.subr.bf16.mxu0 0
        %4049 = vmatpush1.bf16.xpose.msra.mxu0 0
        %4050 = vmatprep.subr.bf16.mxu0 0
        %4051 = vmatpush1.bf16.xpose.msra.mxu0 0
        %4052 = vmatprep.subr.bf16.mxu0 0
        %4053 = vmatpush1.bf16.xpose.msra.mxu0 0
        %4054 = vmatprep.subr.bf16.mxu0 0
        %4055 = vmatpush1.bf16.xpose.msra.mxu0 0
        %4056 = vmatprep.subr.bf16.mxu0 0
        %4057 = vmatpush1.bf16.xpose.msra.mxu0 0
        %4058 = vmatprep.subr.bf16.mxu0 0
        %4059 = vmatpush1.bf16.xpose.msra.mxu0 %v4042
        %4060 = vmatprep.subr.bf16.mxu0 0
        %4061 = vmatpush2.bf16.xpose.msra.mxu0 0
        %4062 = vmatprep.subr.bf16.mxu0 0
        %4063 = vmatpush2.bf16.xpose.msra.mxu0 0
        %4064 = vmatprep.subr.bf16.mxu0 0
        %4065 = vmatpush2.bf16.xpose.msra.mxu0 0
        %4066 = vmatprep.subr.bf16.mxu0 0
        %4067 = vmatpush2.bf16.xpose.msra.mxu0 0
        %4068 = vmatprep.subr.bf16.mxu0 0
        %4069 = vmatpush2.bf16.xpose.msra.mxu0 0
        %4070 = vmatprep.subr.bf16.mxu0 0
        %4071 = vmatpush2.bf16.xpose.msra.mxu0 0
        %4072 = vmatprep.subr.bf16.mxu0 0
        %4073 = vmatpush2.bf16.xpose.msra.mxu0 0
        %4074 = vmatprep.subr.bf16.mxu0 0
        %4075 = vmatpush2.bf16.xpose.msra.mxu0 0
        %4076 = vmatprep.mubr.bf16.mxu0 0
        %4077 = vmatmul.mubr.bf16.gmra.mxu0 %v4039
        %v4078 = vpop.f32.mrf.mxu0
        %v4079 = vadd.f32 0.0, %v4078
        %v4080 = vpop.f32.mrf.mxu0
        %v4081 = vpop.f32.mrf.mxu0
        %v4082 = vadd.f32 0.0, %v4081
        %v4083 = vpop.f32.mrf.mxu0
        %4084 = vdwg.mxu0
        %v4086 = vsel %vm2042, %v3491, 0
        %v4089 = vsel %vm2042, %v3759, 0
        %4091 = vmatprep.subr.bf16.mxu0 0
        %4092 = vmatpush1.bf16.xpose.msra.mxu0 0
        %4093 = vmatprep.subr.bf16.mxu0 0
        %4094 = vmatpush1.bf16.xpose.msra.mxu0 0
        %4095 = vmatprep.subr.bf16.mxu0 0
        %4096 = vmatpush1.bf16.xpose.msra.mxu0 0
        %4097 = vmatprep.subr.bf16.mxu0 0
        %4098 = vmatpush1.bf16.xpose.msra.mxu0 0
        %4099 = vmatprep.subr.bf16.mxu0 0
        %4100 = vmatpush1.bf16.xpose.msra.mxu0 0
        %4101 = vmatprep.subr.bf16.mxu0 0
        %4102 = vmatpush1.bf16.xpose.msra.mxu0 0
        %4103 = vmatprep.subr.bf16.mxu0 0
        %4104 = vmatpush1.bf16.xpose.msra.mxu0 0
        %4105 = vmatprep.subr.bf16.mxu0 0
        %4106 = vmatpush1.bf16.xpose.msra.mxu0 %v4089
        %4107 = vmatprep.subr.bf16.mxu0 0
        %4108 = vmatpush2.bf16.xpose.msra.mxu0 0
        %4109 = vmatprep.subr.bf16.mxu0 0
        %4110 = vmatpush2.bf16.xpose.msra.mxu0 0
        %4111 = vmatprep.subr.bf16.mxu0 0
        %4112 = vmatpush2.bf16.xpose.msra.mxu0 0
        %4113 = vmatprep.subr.bf16.mxu0 0
        %4114 = vmatpush2.bf16.xpose.msra.mxu0 0
        %4115 = vmatprep.subr.bf16.mxu0 0
        %4116 = vmatpush2.bf16.xpose.msra.mxu0 0
        %4117 = vmatprep.subr.bf16.mxu0 0
        %4118 = vmatpush2.bf16.xpose.msra.mxu0 0
        %4119 = vmatprep.subr.bf16.mxu0 0
        %4120 = vmatpush2.bf16.xpose.msra.mxu0 0
        %4121 = vmatprep.subr.bf16.mxu0 0
        %4122 = vmatpush2.bf16.xpose.msra.mxu0 0
        %4123 = vmatprep.mubr.bf16.mxu0 0
        %4124 = vmatmul.mubr.bf16.gmra.mxu0 %v4086
        %v4125 = vpop.f32.mrf.mxu0
        %v4126 = vadd.f32 0.0, %v4125
        %v4127 = vpop.f32.mrf.mxu0
        %v4128 = vpop.f32.mrf.mxu0
        %v4129 = vadd.f32 0.0, %v4128
        %v4130 = vpop.f32.mrf.mxu0
        %4131 = vdwg.mxu0
        %v4133 = vsel %vm2042, %v3494, 0
        %v4136 = vsel %vm2042, %v3762, 0
        %4138 = vmatprep.subr.bf16.mxu0 0
        %4139 = vmatpush1.bf16.xpose.msra.mxu0 0
        %4140 = vmatprep.subr.bf16.mxu0 0
        %4141 = vmatpush1.bf16.xpose.msra.mxu0 0
        %4142 = vmatprep.subr.bf16.mxu0 0
        %4143 = vmatpush1.bf16.xpose.msra.mxu0 0
        %4144 = vmatprep.subr.bf16.mxu0 0
        %4145 = vmatpush1.bf16.xpose.msra.mxu0 0
        %4146 = vmatprep.subr.bf16.mxu0 0
        %4147 = vmatpush1.bf16.xpose.msra.mxu0 0
        %4148 = vmatprep.subr.bf16.mxu0 0
        %4149 = vmatpush1.bf16.xpose.msra.mxu0 0
        %4150 = vmatprep.subr.bf16.mxu0 0
        %4151 = vmatpush1.bf16.xpose.msra.mxu0 0
        %4152 = vmatprep.subr.bf16.mxu0 0
        %4153 = vmatpush1.bf16.xpose.msra.mxu0 %v4136
        %4154 = vmatprep.subr.bf16.mxu0 0
        %4155 = vmatpush2.bf16.xpose.msra.mxu0 0
        %4156 = vmatprep.subr.bf16.mxu0 0
        %4157 = vmatpush2.bf16.xpose.msra.mxu0 0
        %4158 = vmatprep.subr.bf16.mxu0 0
        %4159 = vmatpush2.bf16.xpose.msra.mxu0 0
        %4160 = vmatprep.subr.bf16.mxu0 0
        %4161 = vmatpush2.bf16.xpose.msra.mxu0 0
        %4162 = vmatprep.subr.bf16.mxu0 0
        %4163 = vmatpush2.bf16.xpose.msra.mxu0 0
        %4164 = vmatprep.subr.bf16.mxu0 0
        %4165 = vmatpush2.bf16.xpose.msra.mxu0 0
        %4166 = vmatprep.subr.bf16.mxu0 0
        %4167 = vmatpush2.bf16.xpose.msra.mxu0 0
        %4168 = vmatprep.subr.bf16.mxu0 0
        %4169 = vmatpush2.bf16.xpose.msra.mxu0 0
        %4170 = vmatprep.mubr.bf16.mxu0 0
        %4171 = vmatmul.mubr.bf16.gmra.mxu0 %v4133
        %v4172 = vpop.f32.mrf.mxu0
        %v4173 = vadd.f32 0.0, %v4172
        %v4174 = vpop.f32.mrf.mxu0
        %v4175 = vpop.f32.mrf.mxu0
        %v4176 = vadd.f32 0.0, %v4175
        %v4177 = vpop.f32.mrf.mxu0
        %4178 = vdwg.mxu0
        %v4180 = vsel %vm2042, %v3497, 0
        %v4183 = vsel %vm2042, %v3765, 0
        %4185 = vmatprep.subr.bf16.mxu0 0
        %4186 = vmatpush1.bf16.xpose.msra.mxu0 0
        %4187 = vmatprep.subr.bf16.mxu0 0
        %4188 = vmatpush1.bf16.xpose.msra.mxu0 0
        %4189 = vmatprep.subr.bf16.mxu0 0
        %4190 = vmatpush1.bf16.xpose.msra.mxu0 0
        %4191 = vmatprep.subr.bf16.mxu0 0
        %4192 = vmatpush1.bf16.xpose.msra.mxu0 0
        %4193 = vmatprep.subr.bf16.mxu0 0
        %4194 = vmatpush1.bf16.xpose.msra.mxu0 0
        %4195 = vmatprep.subr.bf16.mxu0 0
        %4196 = vmatpush1.bf16.xpose.msra.mxu0 0
        %4197 = vmatprep.subr.bf16.mxu0 0
        %4198 = vmatpush1.bf16.xpose.msra.mxu0 0
        %4199 = vmatprep.subr.bf16.mxu0 0
        %4200 = vmatpush1.bf16.xpose.msra.mxu0 %v4183
        %4201 = vmatprep.subr.bf16.mxu0 0
        %4202 = vmatpush2.bf16.xpose.msra.mxu0 0
        %4203 = vmatprep.subr.bf16.mxu0 0
        %4204 = vmatpush2.bf16.xpose.msra.mxu0 0
        %4205 = vmatprep.subr.bf16.mxu0 0
        %4206 = vmatpush2.bf16.xpose.msra.mxu0 0
        %4207 = vmatprep.subr.bf16.mxu0 0
        %4208 = vmatpush2.bf16.xpose.msra.mxu0 0
        %4209 = vmatprep.subr.bf16.mxu0 0
        %4210 = vmatpush2.bf16.xpose.msra.mxu0 0
        %4211 = vmatprep.subr.bf16.mxu0 0
        %4212 = vmatpush2.bf16.xpose.msra.mxu0 0
        %4213 = vmatprep.subr.bf16.mxu0 0
        %4214 = vmatpush2.bf16.xpose.msra.mxu0 0
        %4215 = vmatprep.subr.bf16.mxu0 0
        %4216 = vmatpush2.bf16.xpose.msra.mxu0 0
        %4217 = vmatprep.mubr.bf16.mxu0 0
        %4218 = vmatmul.mubr.bf16.gmra.mxu0 %v4180
        %v4219 = vpop.f32.mrf.mxu0
        %v4220 = vadd.f32 0.0, %v4219
        %v4221 = vpop.f32.mrf.mxu0
        %v4222 = vpop.f32.mrf.mxu0
        %v4223 = vadd.f32 0.0, %v4222
        %v4224 = vpop.f32.mrf.mxu0
        %4225 = vdwg.mxu0
        %v4226 = vsel %vm2231, %v4079, -inf
        %4227 = vmax.xlane.f32.xlu0 %v4226
        %v4228 = vpop.xlane.xlu0 %4227
        %v4229 = vsel %vm2231, %v4082, -inf
        %4230 = vmax.xlane.f32.xlu0 %v4229
        %v4231 = vpop.xlane.xlu0 %4230
        %v4232 = vsel %vm2231, %v4126, -inf
        %4233 = vmax.xlane.f32.xlu0 %v4232
        %v4234 = vpop.xlane.xlu0 %4233
        %v4235 = vsel %vm2231, %v4129, -inf
        %4236 = vmax.xlane.f32.xlu0 %v4235
        %v4237 = vpop.xlane.xlu0 %4236
        %v4238 = vsel %vm2231, %v4173, -inf
        %4239 = vmax.xlane.f32.xlu0 %v4238
        %v4240 = vpop.xlane.xlu0 %4239
        %v4241 = vsel %vm2231, %v4176, -inf
        %4242 = vmax.xlane.f32.xlu0 %v4241
        %v4243 = vpop.xlane.xlu0 %4242
        %v4244 = vsel %vm2231, %v4220, -inf
        %4245 = vmax.xlane.f32.xlu0 %v4244
        %v4246 = vpop.xlane.xlu0 %4245
        %v4247 = vsel %vm2231, %v4223, -inf
        %4248 = vmax.xlane.f32.xlu0 %v4247
        %v4249 = vpop.xlane.xlu0 %4248
        %v4250 = vsub.f32 %v4079, %v4228
        %v4251 = vsub.f32 %v4082, %v4231
        %v4252 = vsub.f32 %v4126, %v4234
        %v4253 = vsub.f32 %v4129, %v4237
        %v4254 = vsub.f32 %v4173, %v4240
        %v4255 = vsub.f32 %v4176, %v4243
        %v4256 = vsub.f32 %v4220, %v4246
        %v4257 = vsub.f32 %v4223, %v4249
        %v4258 = vmul.f32 %v4250, 1.442695
        %v4259 = vpow.pop %v4258
        %v4260 = vmul.f32 %v4251, 1.442695
        %v4261 = vpow.pop %v4260
        %v4262 = vmul.f32 %v4252, 1.442695
        %v4263 = vpow.pop %v4262
        %v4264 = vmul.f32 %v4253, 1.442695
        %v4265 = vpow.pop %v4264
        %v4266 = vmul.f32 %v4254, 1.442695
        %v4267 = vpow.pop %v4266
        %v4268 = vmul.f32 %v4255, 1.442695
        %v4269 = vpow.pop %v4268
        %v4270 = vmul.f32 %v4256, 1.442695
        %v4271 = vpow.pop %v4270
        %v4272 = vmul.f32 %v4257, 1.442695
        %v4273 = vpow.pop %v4272
        %v4274 = vsel %vm2231, %v4259, 0.0
        %4275 = vadd.xlane.f32.xlu0 %v4274
        %v4276 = vpop.xlane.xlu0 %4275
        %v4277 = vsel %vm2231, %v4261, 0.0
        %4278 = vadd.xlane.f32.xlu0 %v4277
        %v4279 = vpop.xlane.xlu0 %4278
        %v4280 = vsel %vm2231, %v4263, 0.0
        %4281 = vadd.xlane.f32.xlu0 %v4280
        %v4282 = vpop.xlane.xlu0 %4281
        %v4283 = vsel %vm2231, %v4265, 0.0
        %4284 = vadd.xlane.f32.xlu0 %v4283
        %v4285 = vpop.xlane.xlu0 %4284
        %v4286 = vsel %vm2231, %v4267, 0.0
        %4287 = vadd.xlane.f32.xlu0 %v4286
        %v4288 = vpop.xlane.xlu0 %4287
        %v4289 = vsel %vm2231, %v4269, 0.0
        %4290 = vadd.xlane.f32.xlu0 %v4289
        %v4291 = vpop.xlane.xlu0 %4290
        %v4292 = vsel %vm2231, %v4271, 0.0
        %4293 = vadd.xlane.f32.xlu0 %v4292
        %v4294 = vpop.xlane.xlu0 %4293
        %v4295 = vsel %vm2231, %v4273, 0.0
        %4296 = vadd.xlane.f32.xlu0 %v4295
        %v4297 = vpop.xlane.xlu0 %4296
        %v4298 = vrcp.pop %v4276
        %v4299 = vrcp.pop %v4279
        %v4300 = vrcp.pop %v4282
        %v4301 = vrcp.pop %v4285
        %v4302 = vrcp.pop %v4288
        %v4303 = vrcp.pop %v4291
        %v4304 = vrcp.pop %v4294
        %v4305 = vrcp.pop %v4297
        %v4306 = vmul.f32 %v4259, %v4298
        %v4307 = vmul.f32 %v4261, %v4299
        %v4308 = vmul.f32 %v4263, %v4300
        %v4309 = vmul.f32 %v4265, %v4301
        %v4310 = vmul.f32 %v4267, %v4302
        %v4311 = vmul.f32 %v4269, %v4303
        %v4312 = vmul.f32 %v4271, %v4304
        %v4313 = vmul.f32 %v4273, %v4305
        %v4314 = vpack.c.bf16 %v4307, %v4306
        %v4315 = vpack.c.bf16 %v4309, %v4308
        %v4316 = vpack.c.bf16 %v4311, %v4310
        %v4317 = vpack.c.bf16 %v4313, %v4312
        %v4319 = vsel %vm2231, %v4314, 0
        %4321 = vmatprep.subr.bf16.mxu0 0
        %4322 = vmatpush1.bf16.msra.mxu0 0
        %4323 = vmatprep.subr.bf16.mxu0 0
        %4324 = vmatpush1.bf16.msra.mxu0 0
        %4325 = vmatprep.subr.bf16.mxu0 0
        %4326 = vmatpush1.bf16.msra.mxu0 0
        %4327 = vmatprep.subr.bf16.mxu0 0
        %4328 = vmatpush1.bf16.msra.mxu0 0
        %4329 = vmatprep.subr.bf16.mxu0 0
        %4330 = vmatpush1.bf16.msra.mxu0 0
        %4331 = vmatprep.subr.bf16.mxu0 0
        %4332 = vmatpush1.bf16.msra.mxu0 0
        %4333 = vmatprep.subr.bf16.mxu0 0
        %4334 = vmatpush1.bf16.msra.mxu0 0
        %4335 = vmatprep.subr.bf16.mxu0 0
        %4336 = vmatpush1.bf16.msra.mxu0 %v4024
        %4337 = vmatprep.subr.bf16.mxu0 0
        %4338 = vmatpush2.bf16.msra.mxu0 0
        %4339 = vmatprep.subr.bf16.mxu0 0
        %4340 = vmatpush2.bf16.msra.mxu0 0
        %4341 = vmatprep.subr.bf16.mxu0 0
        %4342 = vmatpush2.bf16.msra.mxu0 0
        %4343 = vmatprep.subr.bf16.mxu0 0
        %4344 = vmatpush2.bf16.msra.mxu0 0
        %4345 = vmatprep.subr.bf16.mxu0 0
        %4346 = vmatpush2.bf16.msra.mxu0 0
        %4347 = vmatprep.subr.bf16.mxu0 0
        %4348 = vmatpush2.bf16.msra.mxu0 0
        %4349 = vmatprep.subr.bf16.mxu0 0
        %4350 = vmatpush2.bf16.msra.mxu0 0
        %4351 = vmatprep.subr.bf16.mxu0 0
        %4352 = vmatpush2.bf16.msra.mxu0 0
        %4353 = vmatprep.mubr.bf16.mxu0 0
        %4354 = vmatmul.mubr.bf16.gmra.mxu0 %v4319
        %v4355 = vpop.f32.mrf.mxu0
        %v4356 = vadd.f32 0.0, %v4355
        %v4357 = vpop.f32.mrf.mxu0
        %v4358 = vpop.f32.mrf.mxu0
        %v4359 = vadd.f32 0.0, %v4358
        %v4360 = vpop.f32.mrf.mxu0
        %4361 = vdwg.mxu0
        %v4363 = vsel %vm2231, %v4315, 0
        %4365 = vmatprep.subr.bf16.mxu0 0
        %4366 = vmatpush1.bf16.msra.mxu0 0
        %4367 = vmatprep.subr.bf16.mxu0 0
        %4368 = vmatpush1.bf16.msra.mxu0 0
        %4369 = vmatprep.subr.bf16.mxu0 0
        %4370 = vmatpush1.bf16.msra.mxu0 0
        %4371 = vmatprep.subr.bf16.mxu0 0
        %4372 = vmatpush1.bf16.msra.mxu0 0
        %4373 = vmatprep.subr.bf16.mxu0 0
        %4374 = vmatpush1.bf16.msra.mxu0 0
        %4375 = vmatprep.subr.bf16.mxu0 0
        %4376 = vmatpush1.bf16.msra.mxu0 0
        %4377 = vmatprep.subr.bf16.mxu0 0
        %4378 = vmatpush1.bf16.msra.mxu0 0
        %4379 = vmatprep.subr.bf16.mxu0 0
        %4380 = vmatpush1.bf16.msra.mxu0 %v4028
        %4381 = vmatprep.subr.bf16.mxu0 0
        %4382 = vmatpush2.bf16.msra.mxu0 0
        %4383 = vmatprep.subr.bf16.mxu0 0
        %4384 = vmatpush2.bf16.msra.mxu0 0
        %4385 = vmatprep.subr.bf16.mxu0 0
        %4386 = vmatpush2.bf16.msra.mxu0 0
        %4387 = vmatprep.subr.bf16.mxu0 0
        %4388 = vmatpush2.bf16.msra.mxu0 0
        %4389 = vmatprep.subr.bf16.mxu0 0
        %4390 = vmatpush2.bf16.msra.mxu0 0
        %4391 = vmatprep.subr.bf16.mxu0 0
        %4392 = vmatpush2.bf16.msra.mxu0 0
        %4393 = vmatprep.subr.bf16.mxu0 0
        %4394 = vmatpush2.bf16.msra.mxu0 0
        %4395 = vmatprep.subr.bf16.mxu0 0
        %4396 = vmatpush2.bf16.msra.mxu0 0
        %4397 = vmatprep.mubr.bf16.mxu0 0
        %4398 = vmatmul.mubr.bf16.gmra.mxu0 %v4363
        %v4399 = vpop.f32.mrf.mxu0
        %v4400 = vadd.f32 0.0, %v4399
        %v4401 = vpop.f32.mrf.mxu0
        %v4402 = vpop.f32.mrf.mxu0
        %v4403 = vadd.f32 0.0, %v4402
        %v4404 = vpop.f32.mrf.mxu0
        %4405 = vdwg.mxu0
        %v4407 = vsel %vm2231, %v4316, 0
        %4409 = vmatprep.subr.bf16.mxu0 0
        %4410 = vmatpush1.bf16.msra.mxu0 0
        %4411 = vmatprep.subr.bf16.mxu0 0
        %4412 = vmatpush1.bf16.msra.mxu0 0
        %4413 = vmatprep.subr.bf16.mxu0 0
        %4414 = vmatpush1.bf16.msra.mxu0 0
        %4415 = vmatprep.subr.bf16.mxu0 0
        %4416 = vmatpush1.bf16.msra.mxu0 0
        %4417 = vmatprep.subr.bf16.mxu0 0
        %4418 = vmatpush1.bf16.msra.mxu0 0
        %4419 = vmatprep.subr.bf16.mxu0 0
        %4420 = vmatpush1.bf16.msra.mxu0 0
        %4421 = vmatprep.subr.bf16.mxu0 0
        %4422 = vmatpush1.bf16.msra.mxu0 0
        %4423 = vmatprep.subr.bf16.mxu0 0
        %4424 = vmatpush1.bf16.msra.mxu0 %v4032
        %4425 = vmatprep.subr.bf16.mxu0 0
        %4426 = vmatpush2.bf16.msra.mxu0 0
        %4427 = vmatprep.subr.bf16.mxu0 0
        %4428 = vmatpush2.bf16.msra.mxu0 0
        %4429 = vmatprep.subr.bf16.mxu0 0
        %4430 = vmatpush2.bf16.msra.mxu0 0
        %4431 = vmatprep.subr.bf16.mxu0 0
        %4432 = vmatpush2.bf16.msra.mxu0 0
        %4433 = vmatprep.subr.bf16.mxu0 0
        %4434 = vmatpush2.bf16.msra.mxu0 0
        %4435 = vmatprep.subr.bf16.mxu0 0
        %4436 = vmatpush2.bf16.msra.mxu0 0
        %4437 = vmatprep.subr.bf16.mxu0 0
        %4438 = vmatpush2.bf16.msra.mxu0 0
        %4439 = vmatprep.subr.bf16.mxu0 0
        %4440 = vmatpush2.bf16.msra.mxu0 0
        %4441 = vmatprep.mubr.bf16.mxu0 0
        %4442 = vmatmul.mubr.bf16.gmra.mxu0 %v4407
        %v4443 = vpop.f32.mrf.mxu0
        %v4444 = vadd.f32 0.0, %v4443
        %v4445 = vpop.f32.mrf.mxu0
        %v4446 = vpop.f32.mrf.mxu0
        %v4447 = vadd.f32 0.0, %v4446
        %v4448 = vpop.f32.mrf.mxu0
        %4449 = vdwg.mxu0
        %v4451 = vsel %vm2231, %v4317, 0
        %4453 = vmatprep.subr.bf16.mxu0 0
        %4454 = vmatpush1.bf16.msra.mxu0 0
        %4455 = vmatprep.subr.bf16.mxu0 0
        %4456 = vmatpush1.bf16.msra.mxu0 0
        %4457 = vmatprep.subr.bf16.mxu0 0
        %4458 = vmatpush1.bf16.msra.mxu0 0
        %4459 = vmatprep.subr.bf16.mxu0 0
        %4460 = vmatpush1.bf16.msra.mxu0 0
        %4461 = vmatprep.subr.bf16.mxu0 0
        %4462 = vmatpush1.bf16.msra.mxu0 0
        %4463 = vmatprep.subr.bf16.mxu0 0
        %4464 = vmatpush1.bf16.msra.mxu0 0
        %4465 = vmatprep.subr.bf16.mxu0 0
        %4466 = vmatpush1.bf16.msra.mxu0 0
        %4467 = vmatprep.subr.bf16.mxu0 0
        %4468 = vmatpush1.bf16.msra.mxu0 %v4036
        %4469 = vmatprep.subr.bf16.mxu0 0
        %4470 = vmatpush2.bf16.msra.mxu0 0
        %4471 = vmatprep.subr.bf16.mxu0 0
        %4472 = vmatpush2.bf16.msra.mxu0 0
        %4473 = vmatprep.subr.bf16.mxu0 0
        %4474 = vmatpush2.bf16.msra.mxu0 0
        %4475 = vmatprep.subr.bf16.mxu0 0
        %4476 = vmatpush2.bf16.msra.mxu0 0
        %4477 = vmatprep.subr.bf16.mxu0 0
        %4478 = vmatpush2.bf16.msra.mxu0 0
        %4479 = vmatprep.subr.bf16.mxu0 0
        %4480 = vmatpush2.bf16.msra.mxu0 0
        %4481 = vmatprep.subr.bf16.mxu0 0
        %4482 = vmatpush2.bf16.msra.mxu0 0
        %4483 = vmatprep.subr.bf16.mxu0 0
        %4484 = vmatpush2.bf16.msra.mxu0 0
        %4485 = vmatprep.mubr.bf16.mxu0 0
        %4486 = vmatmul.mubr.bf16.gmra.mxu0 %v4451
        %v4487 = vpop.f32.mrf.mxu0
        %v4488 = vadd.f32 0.0, %v4487
        %v4489 = vpop.f32.mrf.mxu0
        %v4490 = vpop.f32.mrf.mxu0
        %v4491 = vadd.f32 0.0, %v4490
        %v4492 = vpop.f32.mrf.mxu0
        %4493 = vdwg.mxu0
        %v4494 = vcombine.low %v4356, %v4444
        %v4495 = vcombine.high %v4356, %v4444
        %v4497 = vunpack.c.l.s4 1983009808
        %v4498 = vunpack.c.0.s8 %v4497
        %v4499 = vlaneseq
        %v4500 = vshrl.u32 %v4499, 7
        %v4501 = vsub.s32 %v4498, %v4500
        %v4502 = vrot.slane %v4494, %v4501
        %v4504 = vunpack.c.l.s4 1983009808
        %v4505 = vunpack.c.0.s8 %v4504
        %v4506 = vlaneseq
        %v4507 = vshrl.u32 %v4506, 7
        %v4508 = vsub.s32 %v4505, %v4507
        %v4509 = vrot.slane %v4495, %v4508
        %v4510 = vcombine.low %v4400, %v4488
        %v4511 = vcombine.high %v4400, %v4488
        %v4513 = vunpack.c.l.s4 1983009808
        %v4514 = vunpack.c.0.s8 %v4513
        %v4515 = vlaneseq
        %v4516 = vshrl.u32 %v4515, 7
        %v4517 = vsub.s32 %v4514, %v4516
        %v4518 = vrot.slane %v4510, %v4517
        %v4520 = vunpack.c.l.s4 1983009808
        %v4521 = vunpack.c.0.s8 %v4520
        %v4522 = vlaneseq
        %v4523 = vshrl.u32 %v4522, 7
        %v4524 = vsub.s32 %v4521, %v4523
        %v4525 = vrot.slane %v4511, %v4524
        %v4526 = vcombine.low %v4502, %v4518
        %v4527 = vcombine.high %v4502, %v4518
        %v4529 = vunpack.c.l.s4 1934713408
        %v4530 = vunpack.c.0.s8 %v4529
        %v4531 = vlaneseq
        %v4532 = vshrl.u32 %v4531, 7
        %v4533 = vsub.s32 %v4530, %v4532
        %v4534 = vrot.slane %v4526, %v4533
        %v4536 = vunpack.c.l.s4 1934713408
        %v4537 = vunpack.c.0.s8 %v4536
        %v4538 = vlaneseq
        %v4539 = vshrl.u32 %v4538, 7
        %v4540 = vsub.s32 %v4537, %v4539
        %v4541 = vrot.slane %v4527, %v4540
        %v4542 = vcombine.low %v4509, %v4525
        %v4543 = vcombine.high %v4509, %v4525
        %v4545 = vunpack.c.l.s4 1934713408
        %v4546 = vunpack.c.0.s8 %v4545
        %v4547 = vlaneseq
        %v4548 = vshrl.u32 %v4547, 7
        %v4549 = vsub.s32 %v4546, %v4548
        %v4550 = vrot.slane %v4542, %v4549
        %v4552 = vunpack.c.l.s4 1934713408
        %v4553 = vunpack.c.0.s8 %v4552
        %v4554 = vlaneseq
        %v4555 = vshrl.u32 %v4554, 7
        %v4556 = vsub.s32 %v4553, %v4555
        %v4557 = vrot.slane %v4543, %v4556
        %v4558 = vcombine.high %v4534, 0.0
        %v4559 = vcombine.high %v4541, 0.0
        %v4560 = vcombine.high %v4550, 0.0
        %v4561 = vcombine.high %v4557, 0.0
        %v4562 = vcombine.low %v4359, %v4447
        %v4563 = vcombine.high %v4359, %v4447
        %v4565 = vunpack.c.l.s4 1983009808
        %v4566 = vunpack.c.0.s8 %v4565
        %v4567 = vlaneseq
        %v4568 = vshrl.u32 %v4567, 7
        %v4569 = vsub.s32 %v4566, %v4568
        %v4570 = vrot.slane %v4562, %v4569
        %v4572 = vunpack.c.l.s4 1983009808
        %v4573 = vunpack.c.0.s8 %v4572
        %v4574 = vlaneseq
        %v4575 = vshrl.u32 %v4574, 7
        %v4576 = vsub.s32 %v4573, %v4575
        %v4577 = vrot.slane %v4563, %v4576
        %v4578 = vcombine.low %v4403, %v4491
        %v4579 = vcombine.high %v4403, %v4491
        %v4581 = vunpack.c.l.s4 1983009808
        %v4582 = vunpack.c.0.s8 %v4581
        %v4583 = vlaneseq
        %v4584 = vshrl.u32 %v4583, 7
        %v4585 = vsub.s32 %v4582, %v4584
        %v4586 = vrot.slane %v4578, %v4585
        %v4588 = vunpack.c.l.s4 1983009808
        %v4589 = vunpack.c.0.s8 %v4588
        %v4590 = vlaneseq
        %v4591 = vshrl.u32 %v4590, 7
        %v4592 = vsub.s32 %v4589, %v4591
        %v4593 = vrot.slane %v4579, %v4592
        %v4594 = vcombine.low %v4570, %v4586
        %v4595 = vcombine.high %v4570, %v4586
        %v4597 = vunpack.c.l.s4 1934713408
        %v4598 = vunpack.c.0.s8 %v4597
        %v4599 = vlaneseq
        %v4600 = vshrl.u32 %v4599, 7
        %v4601 = vsub.s32 %v4598, %v4600
        %v4602 = vrot.slane %v4594, %v4601
        %v4604 = vunpack.c.l.s4 1934713408
        %v4605 = vunpack.c.0.s8 %v4604
        %v4606 = vlaneseq
        %v4607 = vshrl.u32 %v4606, 7
        %v4608 = vsub.s32 %v4605, %v4607
        %v4609 = vrot.slane %v4595, %v4608
        %v4610 = vcombine.low %v4577, %v4593
        %v4611 = vcombine.high %v4577, %v4593
        %v4613 = vunpack.c.l.s4 1934713408
        %v4614 = vunpack.c.0.s8 %v4613
        %v4615 = vlaneseq
        %v4616 = vshrl.u32 %v4615, 7
        %v4617 = vsub.s32 %v4614, %v4616
        %v4618 = vrot.slane %v4610, %v4617
        %v4620 = vunpack.c.l.s4 1934713408
        %v4621 = vunpack.c.0.s8 %v4620
        %v4622 = vlaneseq
        %v4623 = vshrl.u32 %v4622, 7
        %v4624 = vsub.s32 %v4621, %v4623
        %v4625 = vrot.slane %v4611, %v4624
        %v4626 = vcombine.high %v4602, 0.0
        %v4627 = vcombine.high %v4609, 0.0
        %v4628 = vcombine.high %v4618, 0.0
        %v4629 = vcombine.high %v4625, 0.0
        %v4630 = vcombine.low %v4534, %v4541
        %v4632 = vunpack.c.l.s4 1983009808
        %v4633 = vunpack.c.0.s8 %v4632
        %v4634 = vlaneseq
        %v4635 = vshrl.u32 %v4634, 7
        %v4636 = vsub.s32 %v4633, %v4635
        %v4637 = vrot.slane %v4630, %v4636
        %v4638 = vcombine.low %v4558, %v4559
        %v4640 = vunpack.c.l.s4 1983009808
        %v4641 = vunpack.c.0.s8 %v4640
        %v4642 = vlaneseq
        %v4643 = vshrl.u32 %v4642, 7
        %v4644 = vsub.s32 %v4641, %v4643
        %v4645 = vrot.slane %v4638, %v4644
        %v4646 = vcombine.low %v4550, %v4557
        %v4648 = vunpack.c.l.s4 1983009808
        %v4649 = vunpack.c.0.s8 %v4648
        %v4650 = vlaneseq
        %v4651 = vshrl.u32 %v4650, 7
        %v4652 = vsub.s32 %v4649, %v4651
        %v4653 = vrot.slane %v4646, %v4652
        %v4654 = vcombine.low %v4560, %v4561
        %v4656 = vunpack.c.l.s4 1983009808
        %v4657 = vunpack.c.0.s8 %v4656
        %v4658 = vlaneseq
        %v4659 = vshrl.u32 %v4658, 7
        %v4660 = vsub.s32 %v4657, %v4659
        %v4661 = vrot.slane %v4654, %v4660
        %v4662 = vcombine.low %v4637, %v4645
        %v4663 = vcombine.high %v4637, %v4645
        %v4665 = vunpack.c.l.s4 1934713408
        %v4666 = vunpack.c.0.s8 %v4665
        %v4667 = vlaneseq
        %v4668 = vshrl.u32 %v4667, 7
        %v4669 = vsub.s32 %v4666, %v4668
        %v4670 = vrot.slane %v4662, %v4669
        %v4672 = vunpack.c.l.s4 1934713408
        %v4673 = vunpack.c.0.s8 %v4672
        %v4674 = vlaneseq
        %v4675 = vshrl.u32 %v4674, 7
        %v4676 = vsub.s32 %v4673, %v4675
        %v4677 = vrot.slane %v4663, %v4676
        %v4678 = vcombine.low %v4653, %v4661
        %v4679 = vcombine.high %v4653, %v4661
        %v4681 = vunpack.c.l.s4 1934713408
        %v4682 = vunpack.c.0.s8 %v4681
        %v4683 = vlaneseq
        %v4684 = vshrl.u32 %v4683, 7
        %v4685 = vsub.s32 %v4682, %v4684
        %v4686 = vrot.slane %v4678, %v4685
        %v4688 = vunpack.c.l.s4 1934713408
        %v4689 = vunpack.c.0.s8 %v4688
        %v4690 = vlaneseq
        %v4691 = vshrl.u32 %v4690, 7
        %v4692 = vsub.s32 %v4689, %v4691
        %v4693 = vrot.slane %v4679, %v4692
        %v4694 = vcombine.low %v4670, %v4686
        %v4695 = vcombine.high %v4670, %v4686
        %v4696 = vcombine.low %v4677, %v4693
        %v4697 = vcombine.high %v4677, %v4693
        %v4698 = vcombine.low %v4602, %v4609
        %v4700 = vunpack.c.l.s4 1983009808
        %v4701 = vunpack.c.0.s8 %v4700
        %v4702 = vlaneseq
        %v4703 = vshrl.u32 %v4702, 7
        %v4704 = vsub.s32 %v4701, %v4703
        %v4705 = vrot.slane %v4698, %v4704
        %v4706 = vcombine.low %v4626, %v4627
        %v4708 = vunpack.c.l.s4 1983009808
        %v4709 = vunpack.c.0.s8 %v4708
        %v4710 = vlaneseq
        %v4711 = vshrl.u32 %v4710, 7
        %v4712 = vsub.s32 %v4709, %v4711
        %v4713 = vrot.slane %v4706, %v4712
        %v4714 = vcombine.low %v4618, %v4625
        %v4716 = vunpack.c.l.s4 1983009808
        %v4717 = vunpack.c.0.s8 %v4716
        %v4718 = vlaneseq
        %v4719 = vshrl.u32 %v4718, 7
        %v4720 = vsub.s32 %v4717, %v4719
        %v4721 = vrot.slane %v4714, %v4720
        %v4722 = vcombine.low %v4628, %v4629
        %v4724 = vunpack.c.l.s4 1983009808
        %v4725 = vunpack.c.0.s8 %v4724
        %v4726 = vlaneseq
        %v4727 = vshrl.u32 %v4726, 7
        %v4728 = vsub.s32 %v4725, %v4727
        %v4729 = vrot.slane %v4722, %v4728
        %v4730 = vcombine.low %v4705, %v4713
        %v4731 = vcombine.high %v4705, %v4713
        %v4733 = vunpack.c.l.s4 1934713408
        %v4734 = vunpack.c.0.s8 %v4733
        %v4735 = vlaneseq
        %v4736 = vshrl.u32 %v4735, 7
        %v4737 = vsub.s32 %v4734, %v4736
        %v4738 = vrot.slane %v4730, %v4737
        %v4740 = vunpack.c.l.s4 1934713408
        %v4741 = vunpack.c.0.s8 %v4740
        %v4742 = vlaneseq
        %v4743 = vshrl.u32 %v4742, 7
        %v4744 = vsub.s32 %v4741, %v4743
        %v4745 = vrot.slane %v4731, %v4744
        %v4746 = vcombine.low %v4721, %v4729
        %v4747 = vcombine.high %v4721, %v4729
        %v4749 = vunpack.c.l.s4 1934713408
        %v4750 = vunpack.c.0.s8 %v4749
        %v4751 = vlaneseq
        %v4752 = vshrl.u32 %v4751, 7
        %v4753 = vsub.s32 %v4750, %v4752
        %v4754 = vrot.slane %v4746, %v4753
        %v4756 = vunpack.c.l.s4 1934713408
        %v4757 = vunpack.c.0.s8 %v4756
        %v4758 = vlaneseq
        %v4759 = vshrl.u32 %v4758, 7
        %v4760 = vsub.s32 %v4757, %v4759
        %v4761 = vrot.slane %v4747, %v4760
        %v4762 = vcombine.low %v4738, %v4754
        %v4763 = vcombine.high %v4738, %v4754
        %v4764 = vcombine.low %v4745, %v4761
        %v4765 = vcombine.high %v4745, %v4761
        %4768 = vrot.lane.b32.xlu0 %v4695, 32
        %v4769 = vpop.permute.xlu0 %4768
        %4770 = vrot.lane.b32.xlu0 %v4763, 32
        %v4771 = vpop.permute.xlu0 %4770
        %4776 = vrot.lane.b32.xlu0 %v4696, 64
        %v4777 = vpop.permute.xlu0 %4776
        %4778 = vrot.lane.b32.xlu0 %v4764, 64
        %v4779 = vpop.permute.xlu0 %4778
        %4784 = vrot.lane.b32.xlu0 %v4697, 96
        %v4785 = vpop.permute.xlu0 %4784
        %4786 = vrot.lane.b32.xlu0 %v4765, 96
        %v4787 = vpop.permute.xlu0 %4786
        %v4790 = vsel %vm2042, %v4694, %v4769
        %v4791 = vsel %vm2042, %v4762, %v4771
        %v4792 = vsel %vm2798, %v4790, %v4777
        %v4793 = vsel %vm2798, %v4791, %v4779
        %v4794 = vsel %vm2801, %v4792, %v4785
        %v4795 = vsel %vm2801, %v4793, %v4787
        %v4796 = vpack.c.bf16 %v4795, %v4794
        %v4797 = vld [vmem:[#allocation14] sm:$0xf]
        %v4798 = vld [vmem:[#allocation14 + $0x4] sm:$0xf]
        %v4799 = vld [vmem:[#allocation14 + $0x8] sm:$0xf]
        %v4800 = vld [vmem:[#allocation14 + $0xc] sm:$0xf]
        %v4801 = vld [vmem:[#allocation14 + $0x10] sm:$0xf]
        %v4802 = vld [vmem:[#allocation14 + $0x14] sm:$0xf]
        %v4803 = vld [vmem:[#allocation14 + $0x18] sm:$0xf]
        %v4804 = vld [vmem:[#allocation14 + $0x1c] sm:$0xf]
        %v4805 = vld [vmem:[#allocation14 + $0x20] sm:$0xf]
        %v4806 = vld [vmem:[#allocation14 + $0x24] sm:$0xf]
        %v4807 = vld [vmem:[#allocation14 + $0x28] sm:$0xf]
        %v4808 = vld [vmem:[#allocation14 + $0x2c] sm:$0xf]
        %v4809 = vld [vmem:[#allocation14 + $0x30] sm:$0xf]
        %v4810 = vld [vmem:[#allocation14 + $0x34] sm:$0xf]
        %v4811 = vld [vmem:[#allocation14 + $0x38] sm:$0xf]
        %v4812 = vld [vmem:[#allocation14 + $0x3c] sm:$0xf]
        %v4813 = vld [vmem:[#allocation16] sm:$0x1]
        %v4815 = vlaneseq
        %v4816 = vshrl.u32 %v4815, 7
        %v4817 = vsub.s32 0, %v4816
        %v4818 = vrot.slane %v4813, %v4817
        %v4836 = vunpack.c.l.b16 %v4797
        %v4837 = vunpack.c.l.b16 %v4798
        %v4838 = vunpack.c.l.b16 %v4799
        %v4839 = vunpack.c.l.b16 %v4800
        %v4840 = vunpack.c.l.b16 %v4801
        %v4841 = vunpack.c.l.b16 %v4802
        %v4842 = vunpack.c.l.b16 %v4803
        %v4843 = vunpack.c.l.b16 %v4804
        %v4844 = vunpack.c.l.b16 %v4805
        %v4845 = vunpack.c.l.b16 %v4806
        %v4846 = vunpack.c.l.b16 %v4807
        %v4847 = vunpack.c.l.b16 %v4808
        %v4848 = vunpack.c.l.b16 %v4809
        %v4849 = vunpack.c.l.b16 %v4810
        %v4850 = vunpack.c.l.b16 %v4811
        %v4851 = vunpack.c.l.b16 %v4812
        %v4852 = vpack.c.b16 %v4837, %v4836
        %v4853 = vpack.c.b16 %v4839, %v4838
        %v4854 = vpack.c.b16 %v4841, %v4840
        %v4855 = vpack.c.b16 %v4843, %v4842
        %v4856 = vpack.c.b16 %v4845, %v4844
        %v4857 = vpack.c.b16 %v4847, %v4846
        %v4858 = vpack.c.b16 %v4849, %v4848
        %v4859 = vpack.c.b16 %v4851, %v4850
        %4868 = vmatprep.subr.bf16.mxu0 0
        %4869 = vmatpush1.bf16.msra.mxu0 %v4859
        %4870 = vmatprep.subr.bf16.mxu0 0
        %4871 = vmatpush1.bf16.msra.mxu0 %v4858
        %4872 = vmatprep.subr.bf16.mxu0 0
        %4873 = vmatpush1.bf16.msra.mxu0 %v4857
        %4874 = vmatprep.subr.bf16.mxu0 0
        %4875 = vmatpush1.bf16.msra.mxu0 %v4856
        %4876 = vmatprep.subr.bf16.mxu0 0
        %4877 = vmatpush1.bf16.msra.mxu0 %v4855
        %4878 = vmatprep.subr.bf16.mxu0 0
        %4879 = vmatpush1.bf16.msra.mxu0 %v4854
        %4880 = vmatprep.subr.bf16.mxu0 0
        %4881 = vmatpush1.bf16.msra.mxu0 %v4853
        %4882 = vmatprep.subr.bf16.mxu0 0
        %4883 = vmatpush1.bf16.msra.mxu0 %v4852
        %4884 = vmatprep.subr.bf16.mxu0 0
        %4885 = vmatpush2.bf16.msra.mxu0 0
        %4886 = vmatprep.subr.bf16.mxu0 0
        %4887 = vmatpush2.bf16.msra.mxu0 0
        %4888 = vmatprep.subr.bf16.mxu0 0
        %4889 = vmatpush2.bf16.msra.mxu0 0
        %4890 = vmatprep.subr.bf16.mxu0 0
        %4891 = vmatpush2.bf16.msra.mxu0 0
        %4892 = vmatprep.subr.bf16.mxu0 0
        %4893 = vmatpush2.bf16.msra.mxu0 0
        %4894 = vmatprep.subr.bf16.mxu0 0
        %4895 = vmatpush2.bf16.msra.mxu0 0
        %4896 = vmatprep.subr.bf16.mxu0 0
        %4897 = vmatpush2.bf16.msra.mxu0 0
        %4898 = vmatprep.subr.bf16.mxu0 0
        %4899 = vmatpush2.bf16.msra.mxu0 0
        %4900 = vmatprep.mubr.bf16.mxu0 0
        %4901 = vmatmul.mubr.bf16.gmra.mxu0 %v4796
        %v4902 = vpop.f32.mrf.mxu0
        %v4903 = vadd.f32 %v4818, %v4902
        %v4904 = vpop.f32.mrf.mxu0
        %v4905 = vpop.f32.mrf.mxu0
        %v4906 = vadd.f32 %v4818, %v4905
        %v4907 = vpop.f32.mrf.mxu0
        %4908 = vdwg.mxu0
        %v4909 = vadd.f32 %v4903, %v2958
        %v4910 = vadd.f32 %v4906, %v2959
        %v4911 = vld [vmem:[#allocation17] sm:$0x1]
        %v4912 = vld [vmem:[#allocation19] sm:$0x1]
        %4913 = vadd.xlane.f32.xlu0 %v4909
        %v4914 = vpop.xlane.xlu0 %4913
        %4915 = vadd.xlane.f32.xlu0 %v4910
        %v4916 = vpop.xlane.xlu0 %4915
        %v4917 = vmul.f32 %v4914, %v2925
        %v4918 = vmul.f32 %v4916, %v2925
        %v4919 = vsub.f32 %v4909, %v4917
        %v4920 = vsub.f32 %v4910, %v4918
        %v4921 = vmul.f32 %v4919, %v4919
        %v4922 = vmul.f32 %v4920, %v4920
        %4923 = vadd.xlane.f32.xlu0 %v4921
        %v4924 = vpop.xlane.xlu0 %4923
        %4925 = vadd.xlane.f32.xlu0 %v4922
        %v4926 = vpop.xlane.xlu0 %4925
        %v4927 = vmul.f32 %v4924, %v2925
        %v4928 = vmul.f32 %v4926, %v2925
        %v4929 = vadd.f32 %v4927, 1e-05
        %v4930 = vadd.f32 %v4928, 1e-05
        %v4931 = vrsqrt.pop %v4929
        %v4932 = vrsqrt.pop %v4930
        %v4933 = vmul.f32 %v4919, %v4931
        %v4934 = vmul.f32 %v4920, %v4932
        %v4936 = vlaneseq
        %v4937 = vshrl.u32 %v4936, 7
        %v4938 = vsub.s32 0, %v4937
        %v4939 = vrot.slane %v4911, %v4938
        %v4941 = vmul.f32 %v4933, %v4939
        %v4942 = vmul.f32 %v4934, %v4939
        %v4944 = vlaneseq
        %v4945 = vshrl.u32 %v4944, 7
        %v4946 = vsub.s32 0, %v4945
        %v4947 = vrot.slane %v4912, %v4946
        %v4949 = vadd.f32 %v4941, %v4947
        %v4950 = vadd.f32 %v4942, %v4947
        %v4951 = vsel %vm2231, %v4306, 0.0
        %v4952 = vsel %vm2231, %v4308, 0.0
        %v4953 = vadd.f32 %v4951, %v4952
        %v4954 = vsel %vm2231, %v4310, 0.0
        %v4955 = vadd.f32 %v4953, %v4954
        %v4956 = vsel %vm2231, %v4312, 0.0
        %v4957 = vadd.f32 %v4955, %v4956
        %v4958 = vsel %vm2231, %v4307, 0.0
        %v4959 = vsel %vm2231, %v4309, 0.0
        %v4960 = vadd.f32 %v4958, %v4959
        %v4961 = vsel %vm2231, %v4311, 0.0
        %v4962 = vadd.f32 %v4960, %v4961
        %v4963 = vsel %vm2231, %v4313, 0.0
        %v4964 = vadd.f32 %v4962, %v4963
        %v4965 = vrcp.pop 4.0
        %v4966 = vmul.f32 %v4957, %v4965
        %v4967 = vmul.f32 %v4964, %v4965
        %4968 = vst.msk [vmem:[%s950] sm:$0xff] %vm2231, %v4966
        %4969 = vst.msk [vmem:[%s950 + $0x8] sm:$0xff] %vm2231, %v4967
        %v4970 = vpack.c.bf16 %v4950, %v4949
        %v4971 = vld [vmem:[#allocation20] sm:$0xff]
        %v4972 = vld [vmem:[#allocation20 + $0x8] sm:$0xff]
        %v4973 = vld [vmem:[#allocation20 + $0x10] sm:$0xff]
        %v4974 = vld [vmem:[#allocation20 + $0x18] sm:$0xff]
        %v4975 = vld [vmem:[#allocation20 + $0x20] sm:$0xff]
        %v4976 = vld [vmem:[#allocation20 + $0x28] sm:$0xff]
        %v4977 = vld [vmem:[#allocation20 + $0x30] sm:$0xff]
        %v4978 = vld [vmem:[#allocation20 + $0x38] sm:$0xff]
        %v4979 = vld [vmem:[#allocation20 + $0x40] sm:$0xff]
        %v4980 = vld [vmem:[#allocation20 + $0x48] sm:$0xff]
        %v4981 = vld [vmem:[#allocation20 + $0x50] sm:$0xff]
        %v4982 = vld [vmem:[#allocation20 + $0x58] sm:$0xff]
        %v4983 = vld [vmem:[#allocation20 + $0x60] sm:$0xff]
        %v4984 = vld [vmem:[#allocation20 + $0x68] sm:$0xff]
        %v4985 = vld [vmem:[#allocation20 + $0x70] sm:$0xff]
        %v4986 = vld [vmem:[#allocation20 + $0x78] sm:$0xff]
        %v4987 = vld [vmem:[%s17] sm:$0x3]
        %v4989 = vlaneseq
        %v4990 = vshrl.u32 %v4989, 7
        %v4991 = vsub.s32 0, %v4990
        %v4992 = vrot.slane %v4987, %v4991
        %v4993 = vlaneseq
        %v4994 = vshrl.u32 %v4993, 7
        %v4995 = vsub.s32 1, %v4994
        %v4996 = vrot.slane %v4987, %v4995
        %v5015 = vunpack.c.l.b16 %v4971
        %v5016 = vunpack.c.h.b16 %v4971
        %v5017 = vunpack.c.l.b16 %v4972
        %v5018 = vunpack.c.h.b16 %v4972
        %v5019 = vunpack.c.l.b16 %v4973
        %v5020 = vunpack.c.h.b16 %v4973
        %v5021 = vunpack.c.l.b16 %v4974
        %v5022 = vunpack.c.h.b16 %v4974
        %v5023 = vunpack.c.l.b16 %v4975
        %v5024 = vunpack.c.h.b16 %v4975
        %v5025 = vunpack.c.l.b16 %v4976
        %v5026 = vunpack.c.h.b16 %v4976
        %v5027 = vunpack.c.l.b16 %v4977
        %v5028 = vunpack.c.h.b16 %v4977
        %v5029 = vunpack.c.l.b16 %v4978
        %v5030 = vunpack.c.h.b16 %v4978
        %v5031 = vunpack.c.l.b16 %v4979
        %v5032 = vunpack.c.h.b16 %v4979
        %v5033 = vunpack.c.l.b16 %v4980
        %v5034 = vunpack.c.h.b16 %v4980
        %v5035 = vunpack.c.l.b16 %v4981
        %v5036 = vunpack.c.h.b16 %v4981
        %v5037 = vunpack.c.l.b16 %v4982
        %v5038 = vunpack.c.h.b16 %v4982
        %v5039 = vunpack.c.l.b16 %v4983
        %v5040 = vunpack.c.h.b16 %v4983
        %v5041 = vunpack.c.l.b16 %v4984
        %v5042 = vunpack.c.h.b16 %v4984
        %v5043 = vunpack.c.l.b16 %v4985
        %v5044 = vunpack.c.h.b16 %v4985
        %v5045 = vunpack.c.l.b16 %v4986
        %v5046 = vunpack.c.h.b16 %v4986
        %v5047 = vpack.c.b16 %v5017, %v5015
        %v5048 = vpack.c.b16 %v5018, %v5016
        %v5049 = vpack.c.b16 %v5021, %v5019
        %v5050 = vpack.c.b16 %v5022, %v5020
        %v5051 = vpack.c.b16 %v5025, %v5023
        %v5052 = vpack.c.b16 %v5026, %v5024
        %v5053 = vpack.c.b16 %v5029, %v5027
        %v5054 = vpack.c.b16 %v5030, %v5028
        %v5055 = vpack.c.b16 %v5033, %v5031
        %v5056 = vpack.c.b16 %v5034, %v5032
        %v5057 = vpack.c.b16 %v5037, %v5035
        %v5058 = vpack.c.b16 %v5038, %v5036
        %v5059 = vpack.c.b16 %v5041, %v5039
        %v5060 = vpack.c.b16 %v5042, %v5040
        %v5061 = vpack.c.b16 %v5045, %v5043
        %v5062 = vpack.c.b16 %v5046, %v5044
        %5079 = vmatprep.subr.bf16.mxu0 %v5062
        %5080 = vmatpush1.bf16.msra.mxu0 %v5061
        %5081 = vmatprep.subr.bf16.mxu0 %v5060
        %5082 = vmatpush1.bf16.msra.mxu0 %v5059
        %5083 = vmatprep.subr.bf16.mxu0 %v5058
        %5084 = vmatpush1.bf16.msra.mxu0 %v5057
        %5085 = vmatprep.subr.bf16.mxu0 %v5056
        %5086 = vmatpush1.bf16.msra.mxu0 %v5055
        %5087 = vmatprep.subr.bf16.mxu0 %v5054
        %5088 = vmatpush1.bf16.msra.mxu0 %v5053
        %5089 = vmatprep.subr.bf16.mxu0 %v5052
        %5090 = vmatpush1.bf16.msra.mxu0 %v5051
        %5091 = vmatprep.subr.bf16.mxu0 %v5050
        %5092 = vmatpush1.bf16.msra.mxu0 %v5049
        %5093 = vmatprep.subr.bf16.mxu0 %v5048
        %5094 = vmatpush1.bf16.msra.mxu0 %v5047
        %5095 = vmatprep.subr.bf16.mxu0 0
        %5096 = vmatpush2.bf16.msra.mxu0 0
        %5097 = vmatprep.subr.bf16.mxu0 0
        %5098 = vmatpush2.bf16.msra.mxu0 0
        %5099 = vmatprep.subr.bf16.mxu0 0
        %5100 = vmatpush2.bf16.msra.mxu0 0
        %5101 = vmatprep.subr.bf16.mxu0 0
        %5102 = vmatpush2.bf16.msra.mxu0 0
        %5103 = vmatprep.subr.bf16.mxu0 0
        %5104 = vmatpush2.bf16.msra.mxu0 0
        %5105 = vmatprep.subr.bf16.mxu0 0
        %5106 = vmatpush2.bf16.msra.mxu0 0
        %5107 = vmatprep.subr.bf16.mxu0 0
        %5108 = vmatpush2.bf16.msra.mxu0 0
        %5109 = vmatprep.subr.bf16.mxu0 0
        %5110 = vmatpush2.bf16.msra.mxu0 0
        %5111 = vmatprep.mubr.bf16.mxu0 0
        %5112 = vmatmul.mubr.bf16.gmra.mxu0 %v4970
        %v5113 = vpop.f32.mrf.mxu0
        %v5114 = vadd.f32 %v4992, %v5113
        %v5115 = vpop.f32.mrf.mxu0
        %v5116 = vadd.f32 %v4996, %v5115
        %v5117 = vpop.f32.mrf.mxu0
        %v5118 = vadd.f32 %v4992, %v5117
        %v5119 = vpop.f32.mrf.mxu0
        %v5120 = vadd.f32 %v4996, %v5119
        %5121 = vdwg.mxu0
        %v5122 = vmax.f32 %v5114, 0.0
        %v5123 = vmax.f32 %v5116, 0.0
        %v5124 = vmax.f32 %v5118, 0.0
        %v5125 = vmax.f32 %v5120, 0.0
        %v5126 = vpack.c.bf16 %v5124, %v5122
        %v5127 = vpack.c.bf16 %v5125, %v5123
        %v5128 = vld [vmem:[#allocation22] sm:$0xf]
        %v5129 = vld [vmem:[#allocation22 + $0x4] sm:$0xf]
        %v5130 = vld [vmem:[#allocation22 + $0x8] sm:$0xf]
        %v5131 = vld [vmem:[#allocation22 + $0xc] sm:$0xf]
        %v5132 = vld [vmem:[#allocation22 + $0x10] sm:$0xf]
        %v5133 = vld [vmem:[#allocation22 + $0x14] sm:$0xf]
        %v5134 = vld [vmem:[#allocation22 + $0x18] sm:$0xf]
        %v5135 = vld [vmem:[#allocation22 + $0x1c] sm:$0xf]
        %v5136 = vld [vmem:[#allocation22 + $0x20] sm:$0xf]
        %v5137 = vld [vmem:[#allocation22 + $0x24] sm:$0xf]
        %v5138 = vld [vmem:[#allocation22 + $0x28] sm:$0xf]
        %v5139 = vld [vmem:[#allocation22 + $0x2c] sm:$0xf]
        %v5140 = vld [vmem:[#allocation22 + $0x30] sm:$0xf]
        %v5141 = vld [vmem:[#allocation22 + $0x34] sm:$0xf]
        %v5142 = vld [vmem:[#allocation22 + $0x38] sm:$0xf]
        %v5143 = vld [vmem:[#allocation22 + $0x3c] sm:$0xf]
        %v5144 = vld [vmem:[#allocation22 + $0x40] sm:$0xf]
        %v5145 = vld [vmem:[#allocation22 + $0x44] sm:$0xf]
        %v5146 = vld [vmem:[#allocation22 + $0x48] sm:$0xf]
        %v5147 = vld [vmem:[#allocation22 + $0x4c] sm:$0xf]
        %v5148 = vld [vmem:[#allocation22 + $0x50] sm:$0xf]
        %v5149 = vld [vmem:[#allocation22 + $0x54] sm:$0xf]
        %v5150 = vld [vmem:[#allocation22 + $0x58] sm:$0xf]
        %v5151 = vld [vmem:[#allocation22 + $0x5c] sm:$0xf]
        %v5152 = vld [vmem:[#allocation22 + $0x60] sm:$0xf]
        %v5153 = vld [vmem:[#allocation22 + $0x64] sm:$0xf]
        %v5154 = vld [vmem:[#allocation22 + $0x68] sm:$0xf]
        %v5155 = vld [vmem:[#allocation22 + $0x6c] sm:$0xf]
        %v5156 = vld [vmem:[#allocation22 + $0x70] sm:$0xf]
        %v5157 = vld [vmem:[#allocation22 + $0x74] sm:$0xf]
        %v5158 = vld [vmem:[#allocation22 + $0x78] sm:$0xf]
        %v5159 = vld [vmem:[#allocation22 + $0x7c] sm:$0xf]
        %v5160 = vld [vmem:[%s19] sm:$0x1]
        %v5162 = vlaneseq
        %v5163 = vshrl.u32 %v5162, 7
        %v5164 = vsub.s32 0, %v5163
        %v5165 = vrot.slane %v5160, %v5164
        %v5199 = vunpack.c.l.b16 %v5128
        %v5200 = vunpack.c.l.b16 %v5129
        %v5201 = vunpack.c.l.b16 %v5130
        %v5202 = vunpack.c.l.b16 %v5131
        %v5203 = vunpack.c.l.b16 %v5132
        %v5204 = vunpack.c.l.b16 %v5133
        %v5205 = vunpack.c.l.b16 %v5134
        %v5206 = vunpack.c.l.b16 %v5135
        %v5207 = vunpack.c.l.b16 %v5136
        %v5208 = vunpack.c.l.b16 %v5137
        %v5209 = vunpack.c.l.b16 %v5138
        %v5210 = vunpack.c.l.b16 %v5139
        %v5211 = vunpack.c.l.b16 %v5140
        %v5212 = vunpack.c.l.b16 %v5141
        %v5213 = vunpack.c.l.b16 %v5142
        %v5214 = vunpack.c.l.b16 %v5143
        %v5215 = vunpack.c.l.b16 %v5144
        %v5216 = vunpack.c.l.b16 %v5145
        %v5217 = vunpack.c.l.b16 %v5146
        %v5218 = vunpack.c.l.b16 %v5147
        %v5219 = vunpack.c.l.b16 %v5148
        %v5220 = vunpack.c.l.b16 %v5149
        %v5221 = vunpack.c.l.b16 %v5150
        %v5222 = vunpack.c.l.b16 %v5151
        %v5223 = vunpack.c.l.b16 %v5152
        %v5224 = vunpack.c.l.b16 %v5153
        %v5225 = vunpack.c.l.b16 %v5154
        %v5226 = vunpack.c.l.b16 %v5155
        %v5227 = vunpack.c.l.b16 %v5156
        %v5228 = vunpack.c.l.b16 %v5157
        %v5229 = vunpack.c.l.b16 %v5158
        %v5230 = vunpack.c.l.b16 %v5159
        %v5231 = vpack.c.b16 %v5200, %v5199
        %v5232 = vpack.c.b16 %v5202, %v5201
        %v5233 = vpack.c.b16 %v5204, %v5203
        %v5234 = vpack.c.b16 %v5206, %v5205
        %v5235 = vpack.c.b16 %v5208, %v5207
        %v5236 = vpack.c.b16 %v5210, %v5209
        %v5237 = vpack.c.b16 %v5212, %v5211
        %v5238 = vpack.c.b16 %v5214, %v5213
        %v5239 = vpack.c.b16 %v5216, %v5215
        %v5240 = vpack.c.b16 %v5218, %v5217
        %v5241 = vpack.c.b16 %v5220, %v5219
        %v5242 = vpack.c.b16 %v5222, %v5221
        %v5243 = vpack.c.b16 %v5224, %v5223
        %v5244 = vpack.c.b16 %v5226, %v5225
        %v5245 = vpack.c.b16 %v5228, %v5227
        %v5246 = vpack.c.b16 %v5230, %v5229
        %5263 = vmatprep.subr.bf16.mxu0 0
        %5264 = vmatpush1.bf16.msra.mxu0 %v5238
        %5265 = vmatprep.subr.bf16.mxu0 0
        %5266 = vmatpush1.bf16.msra.mxu0 %v5237
        %5267 = vmatprep.subr.bf16.mxu0 0
        %5268 = vmatpush1.bf16.msra.mxu0 %v5236
        %5269 = vmatprep.subr.bf16.mxu0 0
        %5270 = vmatpush1.bf16.msra.mxu0 %v5235
        %5271 = vmatprep.subr.bf16.mxu0 0
        %5272 = vmatpush1.bf16.msra.mxu0 %v5234
        %5273 = vmatprep.subr.bf16.mxu0 0
        %5274 = vmatpush1.bf16.msra.mxu0 %v5233
        %5275 = vmatprep.subr.bf16.mxu0 0
        %5276 = vmatpush1.bf16.msra.mxu0 %v5232
        %5277 = vmatprep.subr.bf16.mxu0 0
        %5278 = vmatpush1.bf16.msra.mxu0 %v5231
        %5279 = vmatprep.subr.bf16.mxu0 0
        %5280 = vmatpush2.bf16.msra.mxu0 %v5246
        %5281 = vmatprep.subr.bf16.mxu0 0
        %5282 = vmatpush2.bf16.msra.mxu0 %v5245
        %5283 = vmatprep.subr.bf16.mxu0 0
        %5284 = vmatpush2.bf16.msra.mxu0 %v5244
        %5285 = vmatprep.subr.bf16.mxu0 0
        %5286 = vmatpush2.bf16.msra.mxu0 %v5243
        %5287 = vmatprep.subr.bf16.mxu0 0
        %5288 = vmatpush2.bf16.msra.mxu0 %v5242
        %5289 = vmatprep.subr.bf16.mxu0 0
        %5290 = vmatpush2.bf16.msra.mxu0 %v5241
        %5291 = vmatprep.subr.bf16.mxu0 0
        %5292 = vmatpush2.bf16.msra.mxu0 %v5240
        %5293 = vmatprep.subr.bf16.mxu0 0
        %5294 = vmatpush2.bf16.msra.mxu0 %v5239
        %5295 = vmatprep.mubr.bf16.mxu0 %v5127
        %5296 = vmatmul.mubr.bf16.gmra.mxu0 %v5126
        %v5297 = vpop.f32.mrf.mxu0
        %v5298 = vadd.f32 %v5165, %v5297
        %v5299 = vpop.f32.mrf.mxu0
        %v5300 = vpop.f32.mrf.mxu0
        %v5301 = vadd.f32 %v5165, %v5300
        %v5302 = vpop.f32.mrf.mxu0
        %5303 = vdwg.mxu0
        %v5304 = vadd.f32 %v5298, %v4949
        %v5305 = vadd.f32 %v5301, %v4950
        %v5306 = vld [vmem:[%s20] sm:$0x1]
        %v5307 = vld [vmem:[%s21] sm:$0x1]
        %5308 = vadd.xlane.f32.xlu0 %v5304
        %v5309 = vpop.xlane.xlu0 %5308
        %5310 = vadd.xlane.f32.xlu0 %v5305
        %v5311 = vpop.xlane.xlu0 %5310
        %v5312 = vmul.f32 %v5309, %v2925
        %v5313 = vmul.f32 %v5311, %v2925
        %v5314 = vsub.f32 %v5304, %v5312
        %v5315 = vsub.f32 %v5305, %v5313
        %v5316 = vmul.f32 %v5314, %v5314
        %v5317 = vmul.f32 %v5315, %v5315
        %5318 = vadd.xlane.f32.xlu0 %v5316
        %v5319 = vpop.xlane.xlu0 %5318
        %5320 = vadd.xlane.f32.xlu0 %v5317
        %v5321 = vpop.xlane.xlu0 %5320
        %v5322 = vmul.f32 %v5319, %v2925
        %v5323 = vmul.f32 %v5321, %v2925
        %v5324 = vadd.f32 %v5322, 1e-05
        %v5325 = vadd.f32 %v5323, 1e-05
        %v5326 = vrsqrt.pop %v5324
        %v5327 = vrsqrt.pop %v5325
        %v5328 = vmul.f32 %v5314, %v5326
        %v5329 = vmul.f32 %v5315, %v5327
        %v5331 = vlaneseq
        %v5332 = vshrl.u32 %v5331, 7
        %v5333 = vsub.s32 0, %v5332
        %v5334 = vrot.slane %v5306, %v5333
        %v5336 = vmul.f32 %v5328, %v5334
        %v5337 = vmul.f32 %v5329, %v5334
        %v5339 = vlaneseq
        %v5340 = vshrl.u32 %v5339, 7
        %v5341 = vsub.s32 0, %v5340
        %v5342 = vrot.slane %v5307, %v5341
        %v5344 = vadd.f32 %v5336, %v5342
        %v5345 = vadd.f32 %v5337, %v5342
        %v5346 = vpack.c.bf16 %v5345, %v5344
        %v5348 = vunpack.c.l.b16 %v5346
        %v5349 = vunpack.c.h.b16 %v5346
        %v5350 = vpack.c.b16 %v5348, %v5348
        %v5351 = vpack.c.b16 %v5349, %v5349
        %5354 = vst [vmem:[%s943] sm:$0xf] %v5350
        %5355 = vst [vmem:[%s943 + $0x4] sm:$0xf] %v5351
        %s5356 = sand.u32 %s548, 1
        %s5357 = scalar_lea.sflag [#allocation4], %s5356
        %s5358 = sand.u32 %s548, 1
        %s5359 = smul.addr %s5358, 8
        %s5360 = scalar_lea.vmem [#allocation23], %s5359
        %s5361 = sand.u32 %s576, 1
        %s5362 = scalar_lea.sflag [#allocation25], %s5361
        %s5363 = sand.u32 %s576, 1
        %s5364 = smul.addr %s5363, 16
        %s5365 = scalar_lea.vmem [#allocation24], %s5364
        // Predicated region
        $region161: #{adv_transformer_decoder_layer_forward.1} parent=107 // pred_check
          %p5366 = pneg %p558
        $region162: #{adv_transformer_decoder_layer_forward.1} parent=107 // pred_check_branch
          %5368 = sbr.rel (%p5366) target = $region164
        $region163: #{adv_transformer_decoder_layer_forward.1} parent=107 // pred_region
          %s5369 = smul.u32 2, %s57
          %s5371 = ssub.s32 128, 128
          %5372 = vsyncadd %s5357, %s5371
          %s5373 = smul.addr %s56, 2
          %s5374 = sadd.s32 %s5369, %s5373
          %s5375 = smul.addr %s5374, 64
          %s5376 = scalar_lea.hbm %s22, %s5375
          %s5377 = sshll.u32 %s5360, 4
          %s5378 = int_to_ptr.vmem [resolvable:$true] %s5377
          %5383 = dma.vmem_to_hbm [thread:$0]  %s5378, 128, %s5376, %s5357, 64, 64, 4
        $region164: #{adv_transformer_decoder_layer_forward.1} parent=107 // pred_fallthru
          _
        // Predicated region
        $region165: #{adv_transformer_decoder_layer_forward.1} parent=107 // pred_check
          %p5384 = pneg %p586
        $region166: #{adv_transformer_decoder_layer_forward.1} parent=107 // pred_check_branch
          %5386 = sbr.rel (%p5384) target = $region168
        $region167: #{adv_transformer_decoder_layer_forward.1} parent=107 // pred_region
          %s5387 = smul.u32 2, %s57
          %s5389 = ssub.s32 256, 256
          %5390 = vsyncadd %s5362, %s5389
          %s5391 = smul.addr %s56, 2
          %s5392 = sadd.s32 %s5387, %s5391
          %s5393 = smul.addr %s5392, 128
          %s5394 = scalar_lea.hbm %s23, %s5393
          %s5395 = sshll.u32 %s5365, 4
          %s5396 = int_to_ptr.vmem [resolvable:$true] %s5395
          %5401 = dma.vmem_to_hbm [thread:$0]  %s5396, 256, %s5394, %s5362, 128, 128, 8
        $region168: #{adv_transformer_decoder_layer_forward.1} parent=107 // pred_fallthru
          _
      $region108: #{adv_transformer_decoder_layer_forward.1} parent=5 // pred_fallthru
        _
      %p5402 = scmp.le.s32.totalorder 2, %s47
      // Predicated region
      $region169: #{adv_transformer_decoder_layer_forward.1} parent=5 // pred_check
        %p5403 = pneg %p5402
      $region170: #{adv_transformer_decoder_layer_forward.1} parent=5 // pred_check_branch
        %5405 = sbr.rel (%p5403) target = $region172
      $region171: #{adv_transformer_decoder_layer_forward.1} parent=5 // pred_region
        %s5406 = ssub.s32 %s47, 2
        // Predicated region
        $region173: #{adv_transformer_decoder_layer_forward.1} parent=171 // pred_check
          %p5407 = pneg %p564
        $region174: #{adv_transformer_decoder_layer_forward.1} parent=171 // pred_check_branch
          %5409 = sbr.rel (%p5407) target = $region176
        $region175: #{adv_transformer_decoder_layer_forward.1} parent=171 // pred_region
          %s5410 = sand.u32 %s549, 1
          %s5411 = scalar_lea.sflag [#allocation4], %s5410
          %s5412 = sand.u32 %s549, 1
          %s5413 = smul.addr %s5412, 8
          %s5414 = scalar_lea.vmem [#allocation23], %s5413
          %5415 = dma.done %s5411, 128
        $region176: #{adv_transformer_decoder_layer_forward.1} parent=171 // pred_fallthru
          _
        // Predicated region
        $region177: #{adv_transformer_decoder_layer_forward.1} parent=171 // pred_check
          %p5416 = pneg %p592
        $region178: #{adv_transformer_decoder_layer_forward.1} parent=171 // pred_check_branch
          %5418 = sbr.rel (%p5416) target = $region180
        $region179: #{adv_transformer_decoder_layer_forward.1} parent=171 // pred_region
          %s5419 = sand.u32 %s577, 1
          %s5420 = scalar_lea.sflag [#allocation25], %s5419
          %s5421 = sand.u32 %s577, 1
          %s5422 = smul.addr %s5421, 16
          %s5423 = scalar_lea.vmem [#allocation24], %s5422
          %5424 = dma.done %s5420, 256
        $region180: #{adv_transformer_decoder_layer_forward.1} parent=171 // pred_fallthru
          _
      $region172: #{adv_transformer_decoder_layer_forward.1} parent=5 // pred_fallthru
        _
    $region6: #{adv_transformer_decoder_layer_forward.1} parent=1 // loop_footer
      %s51 = sadd.s32 1, %s47
    $region7: #{adv_transformer_decoder_layer_forward.1} parent=1 // loop_footer_branch
      %46 = sbr.rel target = $region3
    $region8: #{adv_transformer_decoder_layer_forward.1} parent=1 // loop_exit
      _
    %5425 = vsyncpa [#allocation3], 1
    %s5426 = scalar_lea.sflag [#allocation3], 1
    %5427 = vsyncpa %s5426, 1
    %5428 = vsyncpa [#allocation6], 1
    %s5429 = scalar_lea.sflag [#allocation6], 1
    %5430 = vsyncpa %s5429, 1
    %5431 = vsyncpa [#allocation9], 1
    %5432 = vsyncpa [#allocation12], 1
    %5433 = vsyncpa [#allocation15], 1
    %5434 = vsyncpa [#allocation18], 1
    %5435 = vsyncpa [#allocation21], 1
    %5436 = vsyncpa [#allocation4], 1
    %s5437 = scalar_lea.sflag [#allocation4], 1
    %5438 = vsyncpa %s5437, 1
    %5439 = vsyncpa [#allocation25], 1
    %s5440 = scalar_lea.sflag [#allocation25], 1
    %5441 = vsyncpa %s5440, 1

</llo_original>
